<compile_context>
chip_gen: v7x
topology: tpu7x:2x2x1
jax: 0.10.0
libtpu: 0.0.40
codegen_flags: <defaults>
</compile_context>

<pallas_src>
import functools

import jax
import jax.numpy as jnp
from jax.experimental import pallas as pl
from jax.experimental.pallas import tpu as pltpu

TK = 128          # matmul K tile
TN = 128          # matmul N tile (output channels padded to 128 lanes)
_BN_EPS = 1e-5


def _pad_to(n, m):
    return ((n + m - 1) // m) * m


# ----------------------------------------------------------------------------
# Pallas kernels
# ----------------------------------------------------------------------------
def _mm_kernel(a_ref, b_ref, s_ref, t_ref, n_ref, o_ref, acc_ref):
    """out = prelu((A @ B) * scale + shift); scale/shift/neg-slope per output column."""
    @pl.when(pl.program_id(2) == 0)
    def _():
        acc_ref[...] = jnp.zeros_like(acc_ref)

    acc_ref[...] += jnp.dot(a_ref[...], b_ref[...],
                            preferred_element_type=jnp.float32)

    @pl.when(pl.program_id(2) == pl.num_programs(2) - 1)
    def _():
        y = acc_ref[...] * s_ref[...] + t_ref[...]
        o_ref[...] = jnp.where(y >= 0.0, y, y * n_ref[...])


def _mm_res_kernel(a_ref, b_ref, s_ref, t_ref, n_ref, r_ref, o_ref, acc_ref):
    """Same as _mm_kernel but adds a residual tile in the epilogue."""
    @pl.when(pl.program_id(2) == 0)
    def _():
        acc_ref[...] = jnp.zeros_like(acc_ref)

    acc_ref[...] += jnp.dot(a_ref[...], b_ref[...],
                            preferred_element_type=jnp.float32)

    @pl.when(pl.program_id(2) == pl.num_programs(2) - 1)
    def _():
        y = acc_ref[...] * s_ref[...] + t_ref[...]
        y = jnp.where(y >= 0.0, y, y * n_ref[...])
        o_ref[...] = y + r_ref[...]


@functools.lru_cache(maxsize=None)
def _get_fused_matmul(TM, Mp, Kp, Np, has_res):
    vec_spec = pl.BlockSpec((1, TN), lambda i, j, k: (0, j))
    in_specs = [
        pl.BlockSpec((TM, TK), lambda i, j, k: (i, k)),   # A (bf16)
        pl.BlockSpec((TK, TN), lambda i, j, k: (k, j)),   # B (bf16)
        vec_spec,                                         # scale
        vec_spec,                                         # shift
        vec_spec,                                         # PReLU negative slope
    ]
    if has_res:
        in_specs.append(pl.BlockSpec((TM, TN), lambda i, j, k: (i, j)))
    return pl.pallas_call(
        _mm_res_kernel if has_res else _mm_kernel,
        out_shape=jax.ShapeDtypeStruct((Mp, Np), jnp.float32),
        grid_spec=pltpu.PrefetchScalarGridSpec(
            num_scalar_prefetch=0,
            grid=(Mp // TM, Np // TN, Kp // TK),
            in_specs=in_specs,
            out_specs=pl.BlockSpec((TM, TN), lambda i, j, k: (i, j)),
            scratch_shapes=[pltpu.VMEM((TM, TN), jnp.float32)]),
        compiler_params=pltpu.CompilerParams(
            dimension_semantics=("parallel", "parallel", "arbitrary")),
    )


def _add_kernel(x_ref, y_ref, o_ref):
    o_ref[...] = x_ref[...] + y_ref[...]


@functools.lru_cache(maxsize=None)
def _get_add(Mp, Cp):
    return pl.pallas_call(
        _add_kernel,
        out_shape=jax.ShapeDtypeStruct((Mp, Cp), jnp.float32),
        grid_spec=pltpu.PrefetchScalarGridSpec(
            num_scalar_prefetch=0,
            grid=(1,),
            in_specs=[pl.BlockSpec((Mp, Cp), lambda i: (0, 0)),
                      pl.BlockSpec((Mp, Cp), lambda i: (0, 0))],
            out_specs=pl.BlockSpec((Mp, Cp), lambda i: (0, 0))),
    )


def pallas_add(x, y):
    """Elementwise residual add, NHWC."""
    shape = x.shape
    C = shape[-1]
    M = x.size // C
    Mp, Cp = _pad_to(M, 8), _pad_to(C, 128)
    x2 = jnp.pad(x.reshape(M, C).astype(jnp.float32), ((0, Mp - M), (0, Cp - C)))
    y2 = jnp.pad(y.reshape(M, C).astype(jnp.float32), ((0, Mp - M), (0, Cp - C)))
    return _get_add(Mp, Cp)(x2, y2)[:M, :C].reshape(shape)


# ----------------------------------------------------------------------------
# Fused conv + BN + PReLU (+ residual) wrapper (im2col glue in JAX)
# ----------------------------------------------------------------------------
def conv_bn_prelu(x, w, scale, shift, neg_slope, stride=1, padding=0, residual=None):
    """x: (N,H,W,Cin) NHWC; w: (O,I,kh,kw) PyTorch layout.
    Returns prelu(conv(x,w)*scale + shift) [+ residual].  neg_slope=1.0 => no activation."""
    N, H, W, C = x.shape
    O, I, kh, kw = w.shape
    Ho = (H + 2 * padding - kh) // stride + 1
    Wo = (W + 2 * padding - kw) // stride + 1
    xp = jnp.pad(x, ((0, 0), (padding, padding), (padding, padding), (0, 0)))
    cols = []
    for dy in range(kh):
        for dx in range(kw):
            cols.append(xp[:, dy:dy + stride * (Ho - 1) + 1:stride,
                           dx:dx + stride * (Wo - 1) + 1:stride, :])
    A = jnp.concatenate(cols, axis=-1).reshape(N * Ho * Wo, kh * kw * C)
    B = jnp.transpose(w, (2, 3, 1, 0)).reshape(kh * kw * I, O)   # (dy,dx,cin) order

    M, K = A.shape
    Kp = _pad_to(K, TK)
    Np = _pad_to(O, TN)
    Mp = _pad_to(M, 16)                 # 16: bf16 sublane packing
    TM = Mp if Mp <= 512 else 256
    if TM != Mp:
        Mp = _pad_to(M, TM)

    Ap = jnp.pad(A, ((0, Mp - M), (0, Kp - K))).astype(jnp.bfloat16)
    Bp = jnp.pad(B, ((0, Kp - K), (0, Np - O))).astype(jnp.bfloat16)
    s = jnp.pad(scale.astype(jnp.float32), (0, Np - O)).reshape(1, Np)
    t = jnp.pad(shift.astype(jnp.float32), (0, Np - O)).reshape(1, Np)
    nv = jnp.full((1, Np), neg_slope, jnp.float32)

    args = [Ap, Bp, s, t, nv]
    has_res = residual is not None
    if has_res:
        r = residual.reshape(M, O).astype(jnp.float32)
        args.append(jnp.pad(r, ((0, Mp - M), (0, Np - O))))

    out = _get_fused_matmul(TM, Mp, Kp, Np, has_res)(*args)
    return out[:M, :O].reshape(N, Ho, Wo, O)


def avg_pool_2x2(v):
    # TODO(synk): 2x2 avg-pool of the 1-channel aux inputs stays in JAX (C=1 is too
    # narrow for a lane-dense Pallas kernel and the tensor is tiny).
    N, H, W, C = v.shape
    return v.reshape(N, H // 2, 2, W // 2, 2, C).mean(axis=(2, 4))


# ----------------------------------------------------------------------------
# Deterministic synthetic parameters
# ----------------------------------------------------------------------------
class PGen:
    def __init__(self, seed=0):
        self.key = jax.random.PRNGKey(seed)
        self.count = 0

    def _next(self):
        self.count += 1
        return jax.random.fold_in(self.key, self.count)

    def conv_w(self, o, i, kh, kw):
        fan_in = i * kh * kw
        return jax.random.normal(self._next(), (o, i, kh, kw), jnp.float32) * (2.0 / fan_in) ** 0.5

    def bn(self, c):
        # Inference-mode BatchNorm2d (running_mean=0, running_var=1) with synthetic affine.
        gamma = 1.0 + 0.1 * jax.random.normal(self._next(), (c,), jnp.float32)
        beta = 0.1 * jax.random.normal(self._next(), (c,), jnp.float32)
        return gamma / jnp.sqrt(1.0 + _BN_EPS), beta


# ----------------------------------------------------------------------------
# EnCoder forward (NCHW in / NCHW out), mirroring the PyTorch module
# ----------------------------------------------------------------------------
@functools.partial(jax.jit, static_argnames=("k",))
def encoder_forward(x_nchw, a_nchw, t_nchw, k=64):
    pg = PGen(0)
    # parameters (ResBlock / D_ResBlock are single shared modules -> single weight set)
    w1 = pg.conv_w(64, 5, 5, 5)
    w2 = pg.conv_w(128, 66, 5, 5)
    w3 = pg.conv_w(k + 1, 130, 5, 5)
    wr = pg.conv_w(128, 128, 3, 3)          # ResBlock.conv (shared, used twice per block)
    s64, b64 = pg.bn(64)
    s128, b128 = pg.bn(128)
    s65, b65 = pg.bn(k + 1)                 # bn65 (module implies k == 64)
    sr, br = pg.bn(128)                     # ResBlock.bn (shared)
    alpha_enc = 0.25                        # EnCoder.relu  (PReLU default init)
    alpha_res = 0.25                        # ResBlock.relu (PReLU default init)

    x = jnp.transpose(x_nchw, (0, 2, 3, 1)).astype(jnp.float32)   # NHWC
    a = jnp.transpose(a_nchw, (0, 2, 3, 1)).astype(jnp.float32)
    t = jnp.transpose(t_nchw, (0, 2, 3, 1)).astype(jnp.float32)

    # x = relu(bn64(conv1(cat[x,a,t])))
    h = jnp.concatenate([x, a, t], axis=-1)                        # 5 ch
    h = conv_bn_prelu(h, w1, s64, b64, alpha_enc, stride=2, padding=2)

    t1, a1 = avg_pool_2x2(t), avg_pool_2x2(a)
    h = jnp.concatenate([h, a1, t1], axis=-1)                      # 66 ch
    h = conv_bn_prelu(h, w2, s128, b128, alpha_enc, stride=2, padding=2)

    def res_block(v):
        u = conv_bn_prelu(v, wr, sr, br, alpha_res, stride=1, padding=1)
        # second conv + bn + residual add fused into the matmul epilogue (no activation)
        return conv_bn_prelu(u, wr, sr, br, 1.0, stride=1, padding=1, residual=v)

    def d_res_block(v):
        u = res_block(res_block(res_block(v)))
        return pallas_add(u, v)

    x1 = jax.lax.fori_loop(0, 5, lambda i, v: d_res_block(v), h)
    x1 = pallas_add(x1, h)

    t2, a2 = avg_pool_2x2(t1), avg_pool_2x2(a1)
    x1 = jnp.concatenate([x1, a2, t2], axis=-1)                    # 130 ch
    x2 = conv_bn_prelu(x1, w3, s65, b65, 1.0, stride=2, padding=2)  # bn65, no activation

    # index_select: feature channels [0..k).  NOTE: the PyTorch code calls
    # x2.mul(attention_map) OUT-OF-PLACE and discards the result, so the module
    # returns the un-multiplied feature channels; we preserve that exactly.
    feat = x2[..., :k]
    return jnp.transpose(feat, (0, 3, 1, 2))                       # NCHW


if __name__ == "__main__":
    # Spatial size must be divisible by 8 (three stride-2 convs + two 2x2 avg-pools).
    # k must be 64 for the module to be self-consistent (bn65 expects k+1 == 65 channels).
    N, H, W, K_FEAT = 2, 16, 16, 64
    key = jax.random.PRNGKey(0)
    kx, ka, kt = jax.random.split(key, 3)
    x = jax.random.normal(kx, (N, 3, H, W), jnp.float32)
    a = jax.random.normal(ka, (N, 1, H, W), jnp.float32)
    t = jax.random.normal(kt, (N, 1, H, W), jnp.float32)

    out = encoder_forward(x, a, t, k=K_FEAT)
    jax.block_until_ready(out)

    assert out.shape == (N, K_FEAT, H // 8, W // 8), out.shape
    assert bool(jnp.all(jnp.isfinite(out)))
    print("KERNEL_OK")
</pallas_src>

<mosaic_0001>
module attributes {stable_mosaic.version = 11 : i64} {
  func.func @_mm_kernel(%arg0: i32, %arg1: i32, %arg2: i32, %arg3: memref<128x128xbf16, #tpu.memory_space<vmem>>, %arg4: memref<128x128xbf16, #tpu.memory_space<vmem>>, %arg5: memref<1x128xf32, #tpu.memory_space<vmem>>, %arg6: memref<1x128xf32, #tpu.memory_space<vmem>>, %arg7: memref<1x128xf32, #tpu.memory_space<vmem>>, %arg8: memref<128x128xf32, #tpu.memory_space<vmem>>, %arg9: memref<128x128xf32, #tpu.memory_space<vmem>>) attributes {dimension_semantics = [#tpu.dimension_semantics<parallel>, #tpu.dimension_semantics<parallel>, #tpu.dimension_semantics<arbitrary>], iteration_bounds = array<i64: 1, 1, 1>, scalar_prefetch = 0 : i64, scratch_operands = 1 : i64, tpu.core_type = #tpu.core_type<tc>, window_params = [{transform_indices = @transform_0, window_bounds = array<i64: 128, 128>}, {transform_indices = @transform_1, window_bounds = array<i64: 128, 128>}, {transform_indices = @transform_2, window_bounds = array<i64: 1, 128>}, {transform_indices = @transform_3, window_bounds = array<i64: 1, 128>}, {transform_indices = @transform_4, window_bounds = array<i64: 1, 128>}, {transform_indices = @transform_5, window_bounds = array<i64: 128, 128>}]} {
    %c0_i32 = arith.constant 0 : i32
    %0 = arith.cmpi eq, %arg2, %c0_i32 : i32
    %1 = arith.extui %0 : i1 to i32
    %c0_i32_0 = arith.constant 0 : i32
    %2 = arith.cmpi ne, %1, %c0_i32_0 : i32
    scf.if %2 {
      %cst_10 = arith.constant 0.000000e+00 : f32
      %12 = vector.broadcast %cst_10 : f32 to vector<128x128xf32>
      %c0_11 = arith.constant 0 : index
      %c0_12 = arith.constant 0 : index
      %13 = vector.load %arg9[%c0_11, %c0_12] : memref<128x128xf32, #tpu.memory_space<vmem>>, vector<128x128xf32>
      tpu.vector_store %arg9[%c0_11, %c0_12], %12 {strides = array<i32>} : memref<128x128xf32, #tpu.memory_space<vmem>>, vector<128x128xf32>,
    } else {
    }
    %c0 = arith.constant 0 : index
    %c0_1 = arith.constant 0 : index
    %3 = vector.load %arg9[%c0, %c0_1] : memref<128x128xf32, #tpu.memory_space<vmem>>, vector<128x128xf32>
    %c0_2 = arith.constant 0 : index
    %c0_3 = arith.constant 0 : index
    %4 = vector.load %arg3[%c0_2, %c0_3] : memref<128x128xbf16, #tpu.memory_space<vmem>>, vector<128x128xbf16>
    %c0_4 = arith.constant 0 : index
    %c0_5 = arith.constant 0 : index
    %5 = vector.load %arg4[%c0_4, %c0_5] : memref<128x128xbf16, #tpu.memory_space<vmem>>, vector<128x128xbf16>
    %cst = arith.constant dense<0.000000e+00> : vector<128x128xf32>
    %6 = tpu.matmul %4, %5, %cst {dimension_numbers = #tpu.dot_dimension_numbers<[1], [0], [0], [1], [0, 0, 1, 1], [], []>} : vector<128x128xbf16>, vector<128x128xbf16>, vector<128x128xf32> -> vector<128x128xf32>
    %7 = arith.addf %3, %6 : vector<128x128xf32>
    %c0_6 = arith.constant 0 : index
    %c0_7 = arith.constant 0 : index
    %8 = vector.load %arg9[%c0_6, %c0_7] : memref<128x128xf32, #tpu.memory_space<vmem>>, vector<128x128xf32>
    tpu.vector_store %arg9[%c0_6, %c0_7], %7 {strides = array<i32>} : memref<128x128xf32, #tpu.memory_space<vmem>>, vector<128x128xf32>,
    %c0_i32_8 = arith.constant 0 : i32
    %9 = arith.cmpi eq, %arg2, %c0_i32_8 : i32
    %10 = arith.extui %9 : i1 to i32
    %c0_i32_9 = arith.constant 0 : i32
    %11 = arith.cmpi ne, %10, %c0_i32_9 : i32
    scf.if %11 {
      %c0_10 = arith.constant 0 : index
      %c0_11 = arith.constant 0 : index
      %12 = vector.load %arg9[%c0_10, %c0_11] : memref<128x128xf32, #tpu.memory_space<vmem>>, vector<128x128xf32>
      %c0_12 = arith.constant 0 : index
      %c0_13 = arith.constant 0 : index
      %13 = vector.load %arg5[%c0_12, %c0_13] : memref<1x128xf32, #tpu.memory_space<vmem>>, vector<1x128xf32>
      %14 = vector.broadcast %13 : vector<1x128xf32> to vector<128x128xf32>
      %15 = arith.mulf %12, %14 : vector<128x128xf32>
      %c0_14 = arith.constant 0 : index
      %c0_15 = arith.constant 0 : index
      %16 = vector.load %arg6[%c0_14, %c0_15] : memref<1x128xf32, #tpu.memory_space<vmem>>, vector<1x128xf32>
      %17 = vector.broadcast %16 : vector<1x128xf32> to vector<128x128xf32>
      %18 = arith.addf %15, %17 : vector<128x128xf32>
      %cst_16 = arith.constant 0.000000e+00 : f32
      %19 = vector.broadcast %cst_16 : f32 to vector<128x128xf32>
      %20 = arith.cmpf oge, %18, %19 : vector<128x128xf32>
      %c0_17 = arith.constant 0 : index
      %c0_18 = arith.constant 0 : index
      %21 = vector.load %arg7[%c0_17, %c0_18] : memref<1x128xf32, #tpu.memory_space<vmem>>, vector<1x128xf32>
      %22 = vector.broadcast %21 : vector<1x128xf32> to vector<128x128xf32>
      %23 = arith.mulf %18, %22 : vector<128x128xf32>
      %24 = arith.select %20, %18, %23 : vector<128x128xi1>, vector<128x128xf32>
      %c0_19 = arith.constant 0 : index
      %c0_20 = arith.constant 0 : index
      %25 = vector.load %arg8[%c0_19, %c0_20] : memref<128x128xf32, #tpu.memory_space<vmem>>, vector<128x128xf32>
      tpu.vector_store %arg8[%c0_19, %c0_20], %24 {strides = array<i32>} : memref<128x128xf32, #tpu.memory_space<vmem>>, vector<128x128xf32>,
    } else {
    }
    return
  }
  func.func @transform_0(%arg0: i32, %arg1: i32, %arg2: i32) -> (i32, i32) {
    %c0_i32 = arith.constant 0 : i32
    return %arg0, %arg2 : i32, i32
  }
  func.func @transform_1(%arg0: i32, %arg1: i32, %arg2: i32) -> (i32, i32) {
    %c0_i32 = arith.constant 0 : i32
    return %arg2, %arg1 : i32, i32
  }
  func.func @transform_2(%arg0: i32, %arg1: i32, %arg2: i32) -> (i32, i32) {
    %c0_i32 = arith.constant 0 : i32
    %c0_i32_0 = arith.constant 0 : i32
    return %c0_i32, %arg1 : i32, i32
  }
  func.func @transform_3(%arg0: i32, %arg1: i32, %arg2: i32) -> (i32, i32) {
    %c0_i32 = arith.constant 0 : i32
    %c0_i32_0 = arith.constant 0 : i32
    return %c0_i32, %arg1 : i32, i32
  }
  func.func @transform_4(%arg0: i32, %arg1: i32, %arg2: i32) -> (i32, i32) {
    %c0_i32 = arith.constant 0 : i32
    %c0_i32_0 = arith.constant 0 : i32
    return %c0_i32, %arg1 : i32, i32
  }
  func.func @transform_5(%arg0: i32, %arg1: i32, %arg2: i32) -> (i32, i32) {
    %c0_i32 = arith.constant 0 : i32
    return %arg0, %arg1 : i32, i32
  }
}

module attributes {stable_mosaic.version = 11 : i64} {
  func.func @_mm_kernel(%arg0: i32, %arg1: i32, %arg2: i32, %arg3: memref<32x128xbf16, #tpu.memory_space<vmem>>, %arg4: memref<128x128xbf16, #tpu.memory_space<vmem>>, %arg5: memref<1x128xf32, #tpu.memory_space<vmem>>, %arg6: memref<1x128xf32, #tpu.memory_space<vmem>>, %arg7: memref<1x128xf32, #tpu.memory_space<vmem>>, %arg8: memref<32x128xf32, #tpu.memory_space<vmem>>, %arg9: memref<32x128xf32, #tpu.memory_space<vmem>>) attributes {dimension_semantics = [#tpu.dimension_semantics<parallel>, #tpu.dimension_semantics<parallel>, #tpu.dimension_semantics<arbitrary>], iteration_bounds = array<i64: 1, 1, 13>, scalar_prefetch = 0 : i64, scratch_operands = 1 : i64, tpu.core_type = #tpu.core_type<tc>, window_params = [{transform_indices = @transform_0, window_bounds = array<i64: 32, 128>}, {transform_indices = @transform_1, window_bounds = array<i64: 128, 128>}, {transform_indices = @transform_2, window_bounds = array<i64: 1, 128>}, {transform_indices = @transform_3, window_bounds = array<i64: 1, 128>}, {transform_indices = @transform_4, window_bounds = array<i64: 1, 128>}, {transform_indices = @transform_5, window_bounds = array<i64: 32, 128>}]} {
    %c0_i32 = arith.constant 0 : i32
    %0 = arith.cmpi eq, %arg2, %c0_i32 : i32
    %1 = arith.extui %0 : i1 to i32
    %c0_i32_0 = arith.constant 0 : i32
    %2 = arith.cmpi ne, %1, %c0_i32_0 : i32
    scf.if %2 {
      %cst_9 = arith.constant 0.000000e+00 : f32
      %12 = vector.broadcast %cst_9 : f32 to vector<32x128xf32>
      %c0_10 = arith.constant 0 : index
      %c0_11 = arith.constant 0 : index
      %13 = vector.load %arg9[%c0_10, %c0_11] : memref<32x128xf32, #tpu.memory_space<vmem>>, vector<32x128xf32>
      tpu.vector_store %arg9[%c0_10, %c0_11], %12 {strides = array<i32>} : memref<32x128xf32, #tpu.memory_space<vmem>>, vector<32x128xf32>,
    } else {
    }
    %c0 = arith.constant 0 : index
    %c0_1 = arith.constant 0 : index
    %3 = vector.load %arg9[%c0, %c0_1] : memref<32x128xf32, #tpu.memory_space<vmem>>, vector<32x128xf32>
    %c0_2 = arith.constant 0 : index
    %c0_3 = arith.constant 0 : index
    %4 = vector.load %arg3[%c0_2, %c0_3] : memref<32x128xbf16, #tpu.memory_space<vmem>>, vector<32x128xbf16>
    %c0_4 = arith.constant 0 : index
    %c0_5 = arith.constant 0 : index
    %5 = vector.load %arg4[%c0_4, %c0_5] : memref<128x128xbf16, #tpu.memory_space<vmem>>, vector<128x128xbf16>
    %cst = arith.constant dense<0.000000e+00> : vector<32x128xf32>
    %6 = tpu.matmul %4, %5, %cst {dimension_numbers = #tpu.dot_dimension_numbers<[1], [0], [0], [1], [0, 0, 1, 1], [], []>} : vector<32x128xbf16>, vector<128x128xbf16>, vector<32x128xf32> -> vector<32x128xf32>
    %7 = arith.addf %3, %6 : vector<32x128xf32>
    %c0_6 = arith.constant 0 : index
    %c0_7 = arith.constant 0 : index
    %8 = vector.load %arg9[%c0_6, %c0_7] : memref<32x128xf32, #tpu.memory_space<vmem>>, vector<32x128xf32>
    tpu.vector_store %arg9[%c0_6, %c0_7], %7 {strides = array<i32>} : memref<32x128xf32, #tpu.memory_space<vmem>>, vector<32x128xf32>,
    %c12_i32 = arith.constant 12 : i32
    %9 = arith.cmpi eq, %arg2, %c12_i32 : i32
    %10 = arith.extui %9 : i1 to i32
    %c0_i32_8 = arith.constant 0 : i32
    %11 = arith.cmpi ne, %10, %c0_i32_8 : i32
    scf.if %11 {
      %c0_9 = arith.constant 0 : index
      %c0_10 = arith.constant 0 : index
      %12 = vector.load %arg9[%c0_9, %c0_10] : memref<32x128xf32, #tpu.memory_space<vmem>>, vector<32x128xf32>
      %c0_11 = arith.constant 0 : index
      %c0_12 = arith.constant 0 : index
      %13 = vector.load %arg5[%c0_11, %c0_12] : memref<1x128xf32, #tpu.memory_space<vmem>>, vector<1x128xf32>
      %14 = vector.broadcast %13 : vector<1x128xf32> to vector<32x128xf32>
      %15 = arith.mulf %12, %14 : vector<32x128xf32>
      %c0_13 = arith.constant 0 : index
      %c0_14 = arith.constant 0 : index
      %16 = vector.load %arg6[%c0_13, %c0_14] : memref<1x128xf32, #tpu.memory_space<vmem>>, vector<1x128xf32>
      %17 = vector.broadcast %16 : vector<1x128xf32> to vector<32x128xf32>
      %18 = arith.addf %15, %17 : vector<32x128xf32>
      %cst_15 = arith.constant 0.000000e+00 : f32
      %19 = vector.broadcast %cst_15 : f32 to vector<32x128xf32>
      %20 = arith.cmpf oge, %18, %19 : vector<32x128xf32>
      %c0_16 = arith.constant 0 : index
      %c0_17 = arith.constant 0 : index
      %21 = vector.load %arg7[%c0_16, %c0_17] : memref<1x128xf32, #tpu.memory_space<vmem>>, vector<1x128xf32>
      %22 = vector.broadcast %21 : vector<1x128xf32> to vector<32x128xf32>
      %23 = arith.mulf %18, %22 : vector<32x128xf32>
      %24 = arith.select %20, %18, %23 : vector<32x128xi1>, vector<32x128xf32>
      %c0_18 = arith.constant 0 : index
      %c0_19 = arith.constant 0 : index
      %25 = vector.load %arg8[%c0_18, %c0_19] : memref<32x128xf32, #tpu.memory_space<vmem>>, vector<32x128xf32>
      tpu.vector_store %arg8[%c0_18, %c0_19], %24 {strides = array<i32>} : memref<32x128xf32, #tpu.memory_space<vmem>>, vector<32x128xf32>,
    } else {
    }
    return
  }
  func.func @transform_0(%arg0: i32, %arg1: i32, %arg2: i32) -> (i32, i32) {
    %c0_i32 = arith.constant 0 : i32
    return %arg0, %arg2 : i32, i32
  }
  func.func @transform_1(%arg0: i32, %arg1: i32, %arg2: i32) -> (i32, i32) {
    %c0_i32 = arith.constant 0 : i32
    return %arg2, %arg1 : i32, i32
  }
  func.func @transform_2(%arg0: i32, %arg1: i32, %arg2: i32) -> (i32, i32) {
    %c0_i32 = arith.constant 0 : i32
    %c0_i32_0 = arith.constant 0 : i32
    return %c0_i32, %arg1 : i32, i32
  }
  func.func @transform_3(%arg0: i32, %arg1: i32, %arg2: i32) -> (i32, i32) {
    %c0_i32 = arith.constant 0 : i32
    %c0_i32_0 = arith.constant 0 : i32
    return %c0_i32, %arg1 : i32, i32
  }
  func.func @transform_4(%arg0: i32, %arg1: i32, %arg2: i32) -> (i32, i32) {
    %c0_i32 = arith.constant 0 : i32
    %c0_i32_0 = arith.constant 0 : i32
    return %c0_i32, %arg1 : i32, i32
  }
  func.func @transform_5(%arg0: i32, %arg1: i32, %arg2: i32) -> (i32, i32) {
    %c0_i32 = arith.constant 0 : i32
    return %arg0, %arg1 : i32, i32
  }
}

module attributes {stable_mosaic.version = 11 : i64} {
  func.func @_mm_kernel(%arg0: i32, %arg1: i32, %arg2: i32, %arg3: memref<32x128xbf16, #tpu.memory_space<vmem>>, %arg4: memref<128x128xbf16, #tpu.memory_space<vmem>>, %arg5: memref<1x128xf32, #tpu.memory_space<vmem>>, %arg6: memref<1x128xf32, #tpu.memory_space<vmem>>, %arg7: memref<1x128xf32, #tpu.memory_space<vmem>>, %arg8: memref<32x128xf32, #tpu.memory_space<vmem>>, %arg9: memref<32x128xf32, #tpu.memory_space<vmem>>) attributes {dimension_semantics = [#tpu.dimension_semantics<parallel>, #tpu.dimension_semantics<parallel>, #tpu.dimension_semantics<arbitrary>], iteration_bounds = array<i64: 1, 1, 9>, scalar_prefetch = 0 : i64, scratch_operands = 1 : i64, tpu.core_type = #tpu.core_type<tc>, window_params = [{transform_indices = @transform_0, window_bounds = array<i64: 32, 128>}, {transform_indices = @transform_1, window_bounds = array<i64: 128, 128>}, {transform_indices = @transform_2, window_bounds = array<i64: 1, 128>}, {transform_indices = @transform_3, window_bounds = array<i64: 1, 128>}, {transform_indices = @transform_4, window_bounds = array<i64: 1, 128>}, {transform_indices = @transform_5, window_bounds = array<i64: 32, 128>}]} {
    %c0_i32 = arith.constant 0 : i32
    %0 = arith.cmpi eq, %arg2, %c0_i32 : i32
    %1 = arith.extui %0 : i1 to i32
    %c0_i32_0 = arith.constant 0 : i32
    %2 = arith.cmpi ne, %1, %c0_i32_0 : i32
    scf.if %2 {
      %cst_9 = arith.constant 0.000000e+00 : f32
      %12 = vector.broadcast %cst_9 : f32 to vector<32x128xf32>
      %c0_10 = arith.constant 0 : index
      %c0_11 = arith.constant 0 : index
      %13 = vector.load %arg9[%c0_10, %c0_11] : memref<32x128xf32, #tpu.memory_space<vmem>>, vector<32x128xf32>
      tpu.vector_store %arg9[%c0_10, %c0_11], %12 {strides = array<i32>} : memref<32x128xf32, #tpu.memory_space<vmem>>, vector<32x128xf32>,
    } else {
    }
    %c0 = arith.constant 0 : index
    %c0_1 = arith.constant 0 : index
    %3 = vector.load %arg9[%c0, %c0_1] : memref<32x128xf32, #tpu.memory_space<vmem>>, vector<32x128xf32>
    %c0_2 = arith.constant 0 : index
    %c0_3 = arith.constant 0 : index
    %4 = vector.load %arg3[%c0_2, %c0_3] : memref<32x128xbf16, #tpu.memory_space<vmem>>, vector<32x128xbf16>
    %c0_4 = arith.constant 0 : index
    %c0_5 = arith.constant 0 : index
    %5 = vector.load %arg4[%c0_4, %c0_5] : memref<128x128xbf16, #tpu.memory_space<vmem>>, vector<128x128xbf16>
    %cst = arith.constant dense<0.000000e+00> : vector<32x128xf32>
    %6 = tpu.matmul %4, %5, %cst {dimension_numbers = #tpu.dot_dimension_numbers<[1], [0], [0], [1], [0, 0, 1, 1], [], []>} : vector<32x128xbf16>, vector<128x128xbf16>, vector<32x128xf32> -> vector<32x128xf32>
    %7 = arith.addf %3, %6 : vector<32x128xf32>
    %c0_6 = arith.constant 0 : index
    %c0_7 = arith.constant 0 : index
    %8 = vector.load %arg9[%c0_6, %c0_7] : memref<32x128xf32, #tpu.memory_space<vmem>>, vector<32x128xf32>
    tpu.vector_store %arg9[%c0_6, %c0_7], %7 {strides = array<i32>} : memref<32x128xf32, #tpu.memory_space<vmem>>, vector<32x128xf32>,
    %c8_i32 = arith.constant 8 : i32
    %9 = arith.cmpi eq, %arg2, %c8_i32 : i32
    %10 = arith.extui %9 : i1 to i32
    %c0_i32_8 = arith.constant 0 : i32
    %11 = arith.cmpi ne, %10, %c0_i32_8 : i32
    scf.if %11 {
      %c0_9 = arith.constant 0 : index
      %c0_10 = arith.constant 0 : index
      %12 = vector.load %arg9[%c0_9, %c0_10] : memref<32x128xf32, #tpu.memory_space<vmem>>, vector<32x128xf32>
      %c0_11 = arith.constant 0 : index
      %c0_12 = arith.constant 0 : index
      %13 = vector.load %arg5[%c0_11, %c0_12] : memref<1x128xf32, #tpu.memory_space<vmem>>, vector<1x128xf32>
      %14 = vector.broadcast %13 : vector<1x128xf32> to vector<32x128xf32>
      %15 = arith.mulf %12, %14 : vector<32x128xf32>
      %c0_13 = arith.constant 0 : index
      %c0_14 = arith.constant 0 : index
      %16 = vector.load %arg6[%c0_13, %c0_14] : memref<1x128xf32, #tpu.memory_space<vmem>>, vector<1x128xf32>
      %17 = vector.broadcast %16 : vector<1x128xf32> to vector<32x128xf32>
      %18 = arith.addf %15, %17 : vector<32x128xf32>
      %cst_15 = arith.constant 0.000000e+00 : f32
      %19 = vector.broadcast %cst_15 : f32 to vector<32x128xf32>
      %20 = arith.cmpf oge, %18, %19 : vector<32x128xf32>
      %c0_16 = arith.constant 0 : index
      %c0_17 = arith.constant 0 : index
      %21 = vector.load %arg7[%c0_16, %c0_17] : memref<1x128xf32, #tpu.memory_space<vmem>>, vector<1x128xf32>
      %22 = vector.broadcast %21 : vector<1x128xf32> to vector<32x128xf32>
      %23 = arith.mulf %18, %22 : vector<32x128xf32>
      %24 = arith.select %20, %18, %23 : vector<32x128xi1>, vector<32x128xf32>
      %c0_18 = arith.constant 0 : index
      %c0_19 = arith.constant 0 : index
      %25 = vector.load %arg8[%c0_18, %c0_19] : memref<32x128xf32, #tpu.memory_space<vmem>>, vector<32x128xf32>
      tpu.vector_store %arg8[%c0_18, %c0_19], %24 {strides = array<i32>} : memref<32x128xf32, #tpu.memory_space<vmem>>, vector<32x128xf32>,
    } else {
    }
    return
  }
  func.func @transform_0(%arg0: i32, %arg1: i32, %arg2: i32) -> (i32, i32) {
    %c0_i32 = arith.constant 0 : i32
    return %arg0, %arg2 : i32, i32
  }
  func.func @transform_1(%arg0: i32, %arg1: i32, %arg2: i32) -> (i32, i32) {
    %c0_i32 = arith.constant 0 : i32
    return %arg2, %arg1 : i32, i32
  }
  func.func @transform_2(%arg0: i32, %arg1: i32, %arg2: i32) -> (i32, i32) {
    %c0_i32 = arith.constant 0 : i32
    %c0_i32_0 = arith.constant 0 : i32
    return %c0_i32, %arg1 : i32, i32
  }
  func.func @transform_3(%arg0: i32, %arg1: i32, %arg2: i32) -> (i32, i32) {
    %c0_i32 = arith.constant 0 : i32
    %c0_i32_0 = arith.constant 0 : i32
    return %c0_i32, %arg1 : i32, i32
  }
  func.func @transform_4(%arg0: i32, %arg1: i32, %arg2: i32) -> (i32, i32) {
    %c0_i32 = arith.constant 0 : i32
    %c0_i32_0 = arith.constant 0 : i32
    return %c0_i32, %arg1 : i32, i32
  }
  func.func @transform_5(%arg0: i32, %arg1: i32, %arg2: i32) -> (i32, i32) {
    %c0_i32 = arith.constant 0 : i32
    return %arg0, %arg1 : i32, i32
  }
}

module attributes {stable_mosaic.version = 11 : i64} {
  func.func @_mm_res_kernel(%arg0: i32, %arg1: i32, %arg2: i32, %arg3: memref<32x128xbf16, #tpu.memory_space<vmem>>, %arg4: memref<128x128xbf16, #tpu.memory_space<vmem>>, %arg5: memref<1x128xf32, #tpu.memory_space<vmem>>, %arg6: memref<1x128xf32, #tpu.memory_space<vmem>>, %arg7: memref<1x128xf32, #tpu.memory_space<vmem>>, %arg8: memref<32x128xf32, #tpu.memory_space<vmem>>, %arg9: memref<32x128xf32, #tpu.memory_space<vmem>>, %arg10: memref<32x128xf32, #tpu.memory_space<vmem>>) attributes {dimension_semantics = [#tpu.dimension_semantics<parallel>, #tpu.dimension_semantics<parallel>, #tpu.dimension_semantics<arbitrary>], iteration_bounds = array<i64: 1, 1, 9>, scalar_prefetch = 0 : i64, scratch_operands = 1 : i64, tpu.core_type = #tpu.core_type<tc>, window_params = [{transform_indices = @transform_0, window_bounds = array<i64: 32, 128>}, {transform_indices = @transform_1, window_bounds = array<i64: 128, 128>}, {transform_indices = @transform_2, window_bounds = array<i64: 1, 128>}, {transform_indices = @transform_3, window_bounds = array<i64: 1, 128>}, {transform_indices = @transform_4, window_bounds = array<i64: 1, 128>}, {transform_indices = @transform_5, window_bounds = array<i64: 32, 128>}, {transform_indices = @transform_6, window_bounds = array<i64: 32, 128>}]} {
    %c0_i32 = arith.constant 0 : i32
    %0 = arith.cmpi eq, %arg2, %c0_i32 : i32
    %1 = arith.extui %0 : i1 to i32
    %c0_i32_0 = arith.constant 0 : i32
    %2 = arith.cmpi ne, %1, %c0_i32_0 : i32
    scf.if %2 {
      %cst_9 = arith.constant 0.000000e+00 : f32
      %12 = vector.broadcast %cst_9 : f32 to vector<32x128xf32>
      %c0_10 = arith.constant 0 : index
      %c0_11 = arith.constant 0 : index
      %13 = vector.load %arg10[%c0_10, %c0_11] : memref<32x128xf32, #tpu.memory_space<vmem>>, vector<32x128xf32>
      tpu.vector_store %arg10[%c0_10, %c0_11], %12 {strides = array<i32>} : memref<32x128xf32, #tpu.memory_space<vmem>>, vector<32x128xf32>,
    } else {
    }
    %c0 = arith.constant 0 : index
    %c0_1 = arith.constant 0 : index
    %3 = vector.load %arg10[%c0, %c0_1] : memref<32x128xf32, #tpu.memory_space<vmem>>, vector<32x128xf32>
    %c0_2 = arith.constant 0 : index
    %c0_3 = arith.constant 0 : index
    %4 = vector.load %arg3[%c0_2, %c0_3] : memref<32x128xbf16, #tpu.memory_space<vmem>>, vector<32x128xbf16>
    %c0_4 = arith.constant 0 : index
    %c0_5 = arith.constant 0 : index
    %5 = vector.load %arg4[%c0_4, %c0_5] : memref<128x128xbf16, #tpu.memory_space<vmem>>, vector<128x128xbf16>
    %cst = arith.constant dense<0.000000e+00> : vector<32x128xf32>
    %6 = tpu.matmul %4, %5, %cst {dimension_numbers = #tpu.dot_dimension_numbers<[1], [0], [0], [1], [0, 0, 1, 1], [], []>} : vector<32x128xbf16>, vector<128x128xbf16>, vector<32x128xf32> -> vector<32x128xf32>
    %7 = arith.addf %3, %6 : vector<32x128xf32>
    %c0_6 = arith.constant 0 : index
    %c0_7 = arith.constant 0 : index
    %8 = vector.load %arg10[%c0_6, %c0_7] : memref<32x128xf32, #tpu.memory_space<vmem>>, vector<32x128xf32>
    tpu.vector_store %arg10[%c0_6, %c0_7], %7 {strides = array<i32>} : memref<32x128xf32, #tpu.memory_space<vmem>>, vector<32x128xf32>,
    %c8_i32 = arith.constant 8 : i32
    %9 = arith.cmpi eq, %arg2, %c8_i32 : i32
    %10 = arith.extui %9 : i1 to i32
    %c0_i32_8 = arith.constant 0 : i32
    %11 = arith.cmpi ne, %10, %c0_i32_8 : i32
    scf.if %11 {
      %c0_9 = arith.constant 0 : index
      %c0_10 = arith.constant 0 : index
      %12 = vector.load %arg10[%c0_9, %c0_10] : memref<32x128xf32, #tpu.memory_space<vmem>>, vector<32x128xf32>
      %c0_11 = arith.constant 0 : index
      %c0_12 = arith.constant 0 : index
      %13 = vector.load %arg5[%c0_11, %c0_12] : memref<1x128xf32, #tpu.memory_space<vmem>>, vector<1x128xf32>
      %14 = vector.broadcast %13 : vector<1x128xf32> to vector<32x128xf32>
      %15 = arith.mulf %12, %14 : vector<32x128xf32>
      %c0_13 = arith.constant 0 : index
      %c0_14 = arith.constant 0 : index
      %16 = vector.load %arg6[%c0_13, %c0_14] : memref<1x128xf32, #tpu.memory_space<vmem>>, vector<1x128xf32>
      %17 = vector.broadcast %16 : vector<1x128xf32> to vector<32x128xf32>
      %18 = arith.addf %15, %17 : vector<32x128xf32>
      %cst_15 = arith.constant 0.000000e+00 : f32
      %19 = vector.broadcast %cst_15 : f32 to vector<32x128xf32>
      %20 = arith.cmpf oge, %18, %19 : vector<32x128xf32>
      %c0_16 = arith.constant 0 : index
      %c0_17 = arith.constant 0 : index
      %21 = vector.load %arg7[%c0_16, %c0_17] : memref<1x128xf32, #tpu.memory_space<vmem>>, vector<1x128xf32>
      %22 = vector.broadcast %21 : vector<1x128xf32> to vector<32x128xf32>
      %23 = arith.mulf %18, %22 : vector<32x128xf32>
      %24 = arith.select %20, %18, %23 : vector<32x128xi1>, vector<32x128xf32>
      %c0_18 = arith.constant 0 : index
      %c0_19 = arith.constant 0 : index
      %25 = vector.load %arg8[%c0_18, %c0_19] : memref<32x128xf32, #tpu.memory_space<vmem>>, vector<32x128xf32>
      %26 = arith.addf %24, %25 : vector<32x128xf32>
      %c0_20 = arith.constant 0 : index
      %c0_21 = arith.constant 0 : index
      %27 = vector.load %arg9[%c0_20, %c0_21] : memref<32x128xf32, #tpu.memory_space<vmem>>, vector<32x128xf32>
      tpu.vector_store %arg9[%c0_20, %c0_21], %26 {strides = array<i32>} : memref<32x128xf32, #tpu.memory_space<vmem>>, vector<32x128xf32>,
    } else {
    }
    return
  }
  func.func @transform_0(%arg0: i32, %arg1: i32, %arg2: i32) -> (i32, i32) {
    %c0_i32 = arith.constant 0 : i32
    return %arg0, %arg2 : i32, i32
  }
  func.func @transform_1(%arg0: i32, %arg1: i32, %arg2: i32) -> (i32, i32) {
    %c0_i32 = arith.constant 0 : i32
    return %arg2, %arg1 : i32, i32
  }
  func.func @transform_2(%arg0: i32, %arg1: i32, %arg2: i32) -> (i32, i32) {
    %c0_i32 = arith.constant 0 : i32
    %c0_i32_0 = arith.constant 0 : i32
    return %c0_i32, %arg1 : i32, i32
  }
  func.func @transform_3(%arg0: i32, %arg1: i32, %arg2: i32) -> (i32, i32) {
    %c0_i32 = arith.constant 0 : i32
    %c0_i32_0 = arith.constant 0 : i32
    return %c0_i32, %arg1 : i32, i32
  }
  func.func @transform_4(%arg0: i32, %arg1: i32, %arg2: i32) -> (i32, i32) {
    %c0_i32 = arith.constant 0 : i32
    %c0_i32_0 = arith.constant 0 : i32
    return %c0_i32, %arg1 : i32, i32
  }
  func.func @transform_5(%arg0: i32, %arg1: i32, %arg2: i32) -> (i32, i32) {
    %c0_i32 = arith.constant 0 : i32
    return %arg0, %arg1 : i32, i32
  }
  func.func @transform_6(%arg0: i32, %arg1: i32, %arg2: i32) -> (i32, i32) {
    %c0_i32 = arith.constant 0 : i32
    return %arg0, %arg1 : i32, i32
  }
}

module attributes {stable_mosaic.version = 11 : i64} {
  func.func @_add_kernel(%arg0: i32, %arg1: memref<32x128xf32, #tpu.memory_space<vmem>>, %arg2: memref<32x128xf32, #tpu.memory_space<vmem>>, %arg3: memref<32x128xf32, #tpu.memory_space<vmem>>) attributes {dimension_semantics = [#tpu.dimension_semantics<arbitrary>], iteration_bounds = array<i64: 1>, scalar_prefetch = 0 : i64, scratch_operands = 0 : i64, tpu.core_type = #tpu.core_type<tc>, window_params = [{pipeline_mode = #tpu.pipeline_mode<synchronous>, transform_indices = @transform_0, window_bounds = array<i64: 32, 128>}, {pipeline_mode = #tpu.pipeline_mode<synchronous>, transform_indices = @transform_1, window_bounds = array<i64: 32, 128>}, {pipeline_mode = #tpu.pipeline_mode<synchronous>, transform_indices = @transform_2, window_bounds = array<i64: 32, 128>}]} {
    %c0 = arith.constant 0 : index
    %c0_0 = arith.constant 0 : index
    %0 = vector.load %arg1[%c0, %c0_0] : memref<32x128xf32, #tpu.memory_space<vmem>>, vector<32x128xf32>
    %c0_1 = arith.constant 0 : index
    %c0_2 = arith.constant 0 : index
    %1 = vector.load %arg2[%c0_1, %c0_2] : memref<32x128xf32, #tpu.memory_space<vmem>>, vector<32x128xf32>
    %2 = arith.addf %0, %1 : vector<32x128xf32>
    %c0_3 = arith.constant 0 : index
    %c0_4 = arith.constant 0 : index
    %3 = vector.load %arg3[%c0_3, %c0_4] : memref<32x128xf32, #tpu.memory_space<vmem>>, vector<32x128xf32>
    tpu.vector_store %arg3[%c0_3, %c0_4], %2 {strides = array<i32>} : memref<32x128xf32, #tpu.memory_space<vmem>>, vector<32x128xf32>,
    return
  }
  func.func @transform_0(%arg0: i32) -> (i32, i32) {
    %c0_i32 = arith.constant 0 : i32
    %c0_i32_0 = arith.constant 0 : i32
    %c0_i32_1 = arith.constant 0 : i32
    return %c0_i32, %c0_i32_0 : i32, i32
  }
  func.func @transform_1(%arg0: i32) -> (i32, i32) {
    %c0_i32 = arith.constant 0 : i32
    %c0_i32_0 = arith.constant 0 : i32
    %c0_i32_1 = arith.constant 0 : i32
    return %c0_i32, %c0_i32_0 : i32, i32
  }
  func.func @transform_2(%arg0: i32) -> (i32, i32) {
    %c0_i32 = arith.constant 0 : i32
    %c0_i32_0 = arith.constant 0 : i32
    %c0_i32_1 = arith.constant 0 : i32
    return %c0_i32, %c0_i32_0 : i32, i32
  }
}

module attributes {stable_mosaic.version = 11 : i64} {
  func.func @_mm_kernel(%arg0: i32, %arg1: i32, %arg2: i32, %arg3: memref<16x128xbf16, #tpu.memory_space<vmem>>, %arg4: memref<128x128xbf16, #tpu.memory_space<vmem>>, %arg5: memref<1x128xf32, #tpu.memory_space<vmem>>, %arg6: memref<1x128xf32, #tpu.memory_space<vmem>>, %arg7: memref<1x128xf32, #tpu.memory_space<vmem>>, %arg8: memref<16x128xf32, #tpu.memory_space<vmem>>, %arg9: memref<16x128xf32, #tpu.memory_space<vmem>>) attributes {dimension_semantics = [#tpu.dimension_semantics<parallel>, #tpu.dimension_semantics<parallel>, #tpu.dimension_semantics<arbitrary>], iteration_bounds = array<i64: 1, 1, 26>, scalar_prefetch = 0 : i64, scratch_operands = 1 : i64, tpu.core_type = #tpu.core_type<tc>, window_params = [{transform_indices = @transform_0, window_bounds = array<i64: 16, 128>}, {transform_indices = @transform_1, window_bounds = array<i64: 128, 128>}, {transform_indices = @transform_2, window_bounds = array<i64: 1, 128>}, {transform_indices = @transform_3, window_bounds = array<i64: 1, 128>}, {transform_indices = @transform_4, window_bounds = array<i64: 1, 128>}, {transform_indices = @transform_5, window_bounds = array<i64: 16, 128>}]} {
    %c0_i32 = arith.constant 0 : i32
    %0 = arith.cmpi eq, %arg2, %c0_i32 : i32
    %1 = arith.extui %0 : i1 to i32
    %c0_i32_0 = arith.constant 0 : i32
    %2 = arith.cmpi ne, %1, %c0_i32_0 : i32
    scf.if %2 {
      %cst_9 = arith.constant 0.000000e+00 : f32
      %12 = vector.broadcast %cst_9 : f32 to vector<16x128xf32>
      %c0_10 = arith.constant 0 : index
      %c0_11 = arith.constant 0 : index
      %13 = vector.load %arg9[%c0_10, %c0_11] : memref<16x128xf32, #tpu.memory_space<vmem>>, vector<16x128xf32>
      tpu.vector_store %arg9[%c0_10, %c0_11], %12 {strides = array<i32>} : memref<16x128xf32, #tpu.memory_space<vmem>>, vector<16x128xf32>,
    } else {
    }
    %c0 = arith.constant 0 : index
    %c0_1 = arith.constant 0 : index
    %3 = vector.load %arg9[%c0, %c0_1] : memref<16x128xf32, #tpu.memory_space<vmem>>, vector<16x128xf32>
    %c0_2 = arith.constant 0 : index
    %c0_3 = arith.constant 0 : index
    %4 = vector.load %arg3[%c0_2, %c0_3] : memref<16x128xbf16, #tpu.memory_space<vmem>>, vector<16x128xbf16>
    %c0_4 = arith.constant 0 : index
    %c0_5 = arith.constant 0 : index
    %5 = vector.load %arg4[%c0_4, %c0_5] : memref<128x128xbf16, #tpu.memory_space<vmem>>, vector<128x128xbf16>
    %cst = arith.constant dense<0.000000e+00> : vector<16x128xf32>
    %6 = tpu.matmul %4, %5, %cst {dimension_numbers = #tpu.dot_dimension_numbers<[1], [0], [0], [1], [0, 0, 1, 1], [], []>} : vector<16x128xbf16>, vector<128x128xbf16>, vector<16x128xf32> -> vector<16x128xf32>
    %7 = arith.addf %3, %6 : vector<16x128xf32>
    %c0_6 = arith.constant 0 : index
    %c0_7 = arith.constant 0 : index
    %8 = vector.load %arg9[%c0_6, %c0_7] : memref<16x128xf32, #tpu.memory_space<vmem>>, vector<16x128xf32>
    tpu.vector_store %arg9[%c0_6, %c0_7], %7 {strides = array<i32>} : memref<16x128xf32, #tpu.memory_space<vmem>>, vector<16x128xf32>,
    %c25_i32 = arith.constant 25 : i32
    %9 = arith.cmpi eq, %arg2, %c25_i32 : i32
    %10 = arith.extui %9 : i1 to i32
    %c0_i32_8 = arith.constant 0 : i32
    %11 = arith.cmpi ne, %10, %c0_i32_8 : i32
    scf.if %11 {
      %c0_9 = arith.constant 0 : index
      %c0_10 = arith.constant 0 : index
      %12 = vector.load %arg9[%c0_9, %c0_10] : memref<16x128xf32, #tpu.memory_space<vmem>>, vector<16x128xf32>
      %c0_11 = arith.constant 0 : index
      %c0_12 = arith.constant 0 : index
      %13 = vector.load %arg5[%c0_11, %c0_12] : memref<1x128xf32, #tpu.memory_space<vmem>>, vector<1x128xf32>
      %14 = vector.broadcast %13 : vector<1x128xf32> to vector<16x128xf32>
      %15 = arith.mulf %12, %14 : vector<16x128xf32>
      %c0_13 = arith.constant 0 : index
      %c0_14 = arith.constant 0 : index
      %16 = vector.load %arg6[%c0_13, %c0_14] : memref<1x128xf32, #tpu.memory_space<vmem>>, vector<1x128xf32>
      %17 = vector.broadcast %16 : vector<1x128xf32> to vector<16x128xf32>
      %18 = arith.addf %15, %17 : vector<16x128xf32>
      %cst_15 = arith.constant 0.000000e+00 : f32
      %19 = vector.broadcast %cst_15 : f32 to vector<16x128xf32>
      %20 = arith.cmpf oge, %18, %19 : vector<16x128xf32>
      %c0_16 = arith.constant 0 : index
      %c0_17 = arith.constant 0 : index
      %21 = vector.load %arg7[%c0_16, %c0_17] : memref<1x128xf32, #tpu.memory_space<vmem>>, vector<1x128xf32>
      %22 = vector.broadcast %21 : vector<1x128xf32> to vector<16x128xf32>
      %23 = arith.mulf %18, %22 : vector<16x128xf32>
      %24 = arith.select %20, %18, %23 : vector<16x128xi1>, vector<16x128xf32>
      %c0_18 = arith.constant 0 : index
      %c0_19 = arith.constant 0 : index
      %25 = vector.load %arg8[%c0_18, %c0_19] : memref<16x128xf32, #tpu.memory_space<vmem>>, vector<16x128xf32>
      tpu.vector_store %arg8[%c0_18, %c0_19], %24 {strides = array<i32>} : memref<16x128xf32, #tpu.memory_space<vmem>>, vector<16x128xf32>,
    } else {
    }
    return
  }
  func.func @transform_0(%arg0: i32, %arg1: i32, %arg2: i32) -> (i32, i32) {
    %c0_i32 = arith.constant 0 : i32
    return %arg0, %arg2 : i32, i32
  }
  func.func @transform_1(%arg0: i32, %arg1: i32, %arg2: i32) -> (i32, i32) {
    %c0_i32 = arith.constant 0 : i32
    return %arg2, %arg1 : i32, i32
  }
  func.func @transform_2(%arg0: i32, %arg1: i32, %arg2: i32) -> (i32, i32) {
    %c0_i32 = arith.constant 0 : i32
    %c0_i32_0 = arith.constant 0 : i32
    return %c0_i32, %arg1 : i32, i32
  }
  func.func @transform_3(%arg0: i32, %arg1: i32, %arg2: i32) -> (i32, i32) {
    %c0_i32 = arith.constant 0 : i32
    %c0_i32_0 = arith.constant 0 : i32
    return %c0_i32, %arg1 : i32, i32
  }
  func.func @transform_4(%arg0: i32, %arg1: i32, %arg2: i32) -> (i32, i32) {
    %c0_i32 = arith.constant 0 : i32
    %c0_i32_0 = arith.constant 0 : i32
    return %c0_i32, %arg1 : i32, i32
  }
  func.func @transform_5(%arg0: i32, %arg1: i32, %arg2: i32) -> (i32, i32) {
    %c0_i32 = arith.constant 0 : i32
    return %arg0, %arg1 : i32, i32
  }
}

</mosaic_0001>

<llo_original>
// kernel: encoder_forward.4
$region0: #{encoder_forward.4}
  #allocation0 [shape = 'u32[]', space=smem, size = 0x4, offset = 0x4, fixed_abs, tag = 'smem constant byte address 0x4 - core index']
  #allocation1 [shape = 'u32[144,128]{1,0:T(1,128)}', space=vmem, size = 0x12000, scoped, tag = 'internal scratch']
  #allocation2 [shape = 'f32[128,128]{1,0:T(8,128)}', space=vmem, size = 0x10000, scoped, tag = 'scratch operand']
  %s0 = inlined_call_operand.vmem [shape: bf16[128,128], index: 0, kind: input, shape index: {}]
  %s1 = inlined_call_operand.vmem [shape: bf16[128,128], index: 1, kind: input, shape index: {}]
  %s2 = inlined_call_operand.vmem [shape: f32[1,128], index: 2, kind: input, shape index: {}]
  %s3 = inlined_call_operand.vmem [shape: f32[1,128], index: 3, kind: input, shape index: {}]
  %s4 = inlined_call_operand.vmem [shape: f32[1,128], index: 4, kind: input, shape index: {}]
  %s5 = inlined_call_operand.vmem [shape: f32[128,128], index: 5, kind: output, shape index: {}]
  %s6 = sld [smem:[#allocation0]]
  $region38: #{encoder_forward.4} parent=0
    _
  %s8 = ssub.s32 1, %s6
  %s9 = scalar_select 0, %s8, %s6
  // Predicated region
  $region2: #{encoder_forward.4} parent=0 // pred_check
    _
  $region3: #{encoder_forward.4} parent=0 // pred_check_branch
    %11 = sbr.rel (0) target = $region5
  $region4: #{encoder_forward.4} parent=0 // pred_region
    _
  $region5: #{encoder_forward.4} parent=0 // pred_fallthru
    _
  // Predicated region
  $region6: #{encoder_forward.4} parent=0 // pred_check
    _
  $region7: #{encoder_forward.4} parent=0 // pred_check_branch
    %13 = sbr.rel (0) target = $region9
  $region8: #{encoder_forward.4} parent=0 // pred_region
    _
  $region9: #{encoder_forward.4} parent=0 // pred_fallthru
    _
  // Predicated region
  $region10: #{encoder_forward.4} parent=0 // pred_check
    _
  $region11: #{encoder_forward.4} parent=0 // pred_check_branch
    %15 = sbr.rel (0) target = $region13
  $region12: #{encoder_forward.4} parent=0 // pred_region
    _
  $region13: #{encoder_forward.4} parent=0 // pred_fallthru
    _
  // Predicated region
  $region14: #{encoder_forward.4} parent=0 // pred_check
    _
  $region15: #{encoder_forward.4} parent=0 // pred_check_branch
    %17 = sbr.rel (0) target = $region17
  $region16: #{encoder_forward.4} parent=0 // pred_region
    _
  $region17: #{encoder_forward.4} parent=0 // pred_fallthru
    _
  // Predicated region
  $region18: #{encoder_forward.4} parent=0 // pred_check
    _
  $region19: #{encoder_forward.4} parent=0 // pred_check_branch
    %19 = sbr.rel (0) target = $region21
  $region20: #{encoder_forward.4} parent=0 // pred_region
    _
  $region21: #{encoder_forward.4} parent=0 // pred_fallthru
    _
  %p21 = scmp.eq.s32.totalorder 0, 0
  // Predicated region
  $region22: #{encoder_forward.4} parent=0 // pred_check
    %p22 = pneg %p21
  $region23: #{encoder_forward.4} parent=0 // pred_check_branch
    %24 = sbr.rel (%p22) target = $region25
  $region24: #{encoder_forward.4} parent=0 // pred_region
    %25 = vst [vmem:[#allocation2] sm:$0xff] 0.0
    %26 = vst [vmem:[#allocation2 + $0x8] sm:$0xff] 0.0
    %27 = vst [vmem:[#allocation2 + $0x10] sm:$0xff] 0.0
    %28 = vst [vmem:[#allocation2 + $0x18] sm:$0xff] 0.0
    %29 = vst [vmem:[#allocation2 + $0x20] sm:$0xff] 0.0
    %30 = vst [vmem:[#allocation2 + $0x28] sm:$0xff] 0.0
    %31 = vst [vmem:[#allocation2 + $0x30] sm:$0xff] 0.0
    %32 = vst [vmem:[#allocation2 + $0x38] sm:$0xff] 0.0
    %33 = vst [vmem:[#allocation2 + $0x40] sm:$0xff] 0.0
    %34 = vst [vmem:[#allocation2 + $0x48] sm:$0xff] 0.0
    %35 = vst [vmem:[#allocation2 + $0x50] sm:$0xff] 0.0
    %36 = vst [vmem:[#allocation2 + $0x58] sm:$0xff] 0.0
    %37 = vst [vmem:[#allocation2 + $0x60] sm:$0xff] 0.0
    %38 = vst [vmem:[#allocation2 + $0x68] sm:$0xff] 0.0
    %39 = vst [vmem:[#allocation2 + $0x70] sm:$0xff] 0.0
    %40 = vst [vmem:[#allocation2 + $0x78] sm:$0xff] 0.0
  $region25: #{encoder_forward.4} parent=0 // pred_fallthru
    _
  %v41 = vld [vmem:[#allocation2] sm:$0xff]
  %v42 = vld [vmem:[#allocation2 + $0x8] sm:$0xff]
  %v43 = vld [vmem:[#allocation2 + $0x10] sm:$0xff]
  %v44 = vld [vmem:[#allocation2 + $0x18] sm:$0xff]
  %v45 = vld [vmem:[#allocation2 + $0x20] sm:$0xff]
  %v46 = vld [vmem:[#allocation2 + $0x28] sm:$0xff]
  %v47 = vld [vmem:[#allocation2 + $0x30] sm:$0xff]
  %v48 = vld [vmem:[#allocation2 + $0x38] sm:$0xff]
  %v49 = vld [vmem:[#allocation2 + $0x40] sm:$0xff]
  %v50 = vld [vmem:[#allocation2 + $0x48] sm:$0xff]
  %v51 = vld [vmem:[#allocation2 + $0x50] sm:$0xff]
  %v52 = vld [vmem:[#allocation2 + $0x58] sm:$0xff]
  %v53 = vld [vmem:[#allocation2 + $0x60] sm:$0xff]
  %v54 = vld [vmem:[#allocation2 + $0x68] sm:$0xff]
  %v55 = vld [vmem:[#allocation2 + $0x70] sm:$0xff]
  %v56 = vld [vmem:[#allocation2 + $0x78] sm:$0xff]
  %v57 = vld [vmem:[%s0] sm:$0xf]
  %v58 = vld [vmem:[%s0 + $0x4] sm:$0xf]
  %v59 = vld [vmem:[%s0 + $0x8] sm:$0xf]
  %v60 = vld [vmem:[%s0 + $0xc] sm:$0xf]
  %v61 = vld [vmem:[%s0 + $0x10] sm:$0xf]
  %v62 = vld [vmem:[%s0 + $0x14] sm:$0xf]
  %v63 = vld [vmem:[%s0 + $0x18] sm:$0xf]
  %v64 = vld [vmem:[%s0 + $0x1c] sm:$0xf]
  %v65 = vld [vmem:[%s0 + $0x20] sm:$0xf]
  %v66 = vld [vmem:[%s0 + $0x24] sm:$0xf]
  %v67 = vld [vmem:[%s0 + $0x28] sm:$0xf]
  %v68 = vld [vmem:[%s0 + $0x2c] sm:$0xf]
  %v69 = vld [vmem:[%s0 + $0x30] sm:$0xf]
  %v70 = vld [vmem:[%s0 + $0x34] sm:$0xf]
  %v71 = vld [vmem:[%s0 + $0x38] sm:$0xf]
  %v72 = vld [vmem:[%s0 + $0x3c] sm:$0xf]
  %v73 = vld [vmem:[%s1] sm:$0xf]
  %v74 = vld [vmem:[%s1 + $0x4] sm:$0xf]
  %v75 = vld [vmem:[%s1 + $0x8] sm:$0xf]
  %v76 = vld [vmem:[%s1 + $0xc] sm:$0xf]
  %v77 = vld [vmem:[%s1 + $0x10] sm:$0xf]
  %v78 = vld [vmem:[%s1 + $0x14] sm:$0xf]
  %v79 = vld [vmem:[%s1 + $0x18] sm:$0xf]
  %v80 = vld [vmem:[%s1 + $0x1c] sm:$0xf]
  %v81 = vld [vmem:[%s1 + $0x20] sm:$0xf]
  %v82 = vld [vmem:[%s1 + $0x24] sm:$0xf]
  %v83 = vld [vmem:[%s1 + $0x28] sm:$0xf]
  %v84 = vld [vmem:[%s1 + $0x2c] sm:$0xf]
  %v85 = vld [vmem:[%s1 + $0x30] sm:$0xf]
  %v86 = vld [vmem:[%s1 + $0x34] sm:$0xf]
  %v87 = vld [vmem:[%s1 + $0x38] sm:$0xf]
  %v88 = vld [vmem:[%s1 + $0x3c] sm:$0xf]
  %v105 = vunpack.c.l.b16 %v57
  %v106 = vunpack.c.l.b16 %v58
  %v107 = vunpack.c.l.b16 %v59
  %v108 = vunpack.c.l.b16 %v60
  %v109 = vunpack.c.l.b16 %v61
  %v110 = vunpack.c.l.b16 %v62
  %v111 = vunpack.c.l.b16 %v63
  %v112 = vunpack.c.l.b16 %v64
  %v113 = vunpack.c.l.b16 %v65
  %v114 = vunpack.c.l.b16 %v66
  %v115 = vunpack.c.l.b16 %v67
  %v116 = vunpack.c.l.b16 %v68
  %v117 = vunpack.c.l.b16 %v69
  %v118 = vunpack.c.l.b16 %v70
  %v119 = vunpack.c.l.b16 %v71
  %v120 = vunpack.c.l.b16 %v72
  %v121 = vpack.c.b16 %v106, %v105
  %v122 = vpack.c.b16 %v108, %v107
  %v123 = vpack.c.b16 %v110, %v109
  %v124 = vpack.c.b16 %v112, %v111
  %v125 = vpack.c.b16 %v114, %v113
  %v126 = vpack.c.b16 %v116, %v115
  %v127 = vpack.c.b16 %v118, %v117
  %v128 = vpack.c.b16 %v120, %v119
  %v153 = vunpack.c.l.b16 %v73
  %v154 = vunpack.c.l.b16 %v74
  %v155 = vunpack.c.l.b16 %v75
  %v156 = vunpack.c.l.b16 %v76
  %v157 = vunpack.c.l.b16 %v77
  %v158 = vunpack.c.l.b16 %v78
  %v159 = vunpack.c.l.b16 %v79
  %v160 = vunpack.c.l.b16 %v80
  %v161 = vunpack.c.l.b16 %v81
  %v162 = vunpack.c.l.b16 %v82
  %v163 = vunpack.c.l.b16 %v83
  %v164 = vunpack.c.l.b16 %v84
  %v165 = vunpack.c.l.b16 %v85
  %v166 = vunpack.c.l.b16 %v86
  %v167 = vunpack.c.l.b16 %v87
  %v168 = vunpack.c.l.b16 %v88
  %v169 = vpack.c.b16 %v154, %v153
  %v170 = vpack.c.b16 %v156, %v155
  %v171 = vpack.c.b16 %v158, %v157
  %v172 = vpack.c.b16 %v160, %v159
  %v173 = vpack.c.b16 %v162, %v161
  %v174 = vpack.c.b16 %v164, %v163
  %v175 = vpack.c.b16 %v166, %v165
  %v176 = vpack.c.b16 %v168, %v167
  %185 = vmatprep.subr.bf16.mxu0 0
  %186 = vmatpush1.bf16.msra.mxu0 %v169
  %187 = vmatprep.subr.bf16.mxu0 0
  %188 = vmatpush1.bf16.msra.mxu0 %v170
  %189 = vmatprep.subr.bf16.mxu0 0
  %190 = vmatpush1.bf16.msra.mxu0 %v171
  %191 = vmatprep.subr.bf16.mxu0 0
  %192 = vmatpush1.bf16.msra.mxu0 %v172
  %193 = vmatprep.subr.bf16.mxu0 0
  %194 = vmatpush1.bf16.msra.mxu0 %v173
  %195 = vmatprep.subr.bf16.mxu0 0
  %196 = vmatpush1.bf16.msra.mxu0 %v174
  %197 = vmatprep.subr.bf16.mxu0 0
  %198 = vmatpush1.bf16.msra.mxu0 %v175
  %199 = vmatprep.subr.bf16.mxu0 0
  %200 = vmatpush1.bf16.msra.mxu0 %v176
  %201 = vmatprep.subr.bf16.mxu0 0
  %202 = vmatpush1.bf16.msra.mxu0 0
  %203 = vmatprep.subr.bf16.mxu0 0
  %204 = vmatpush1.bf16.msra.mxu0 0
  %205 = vmatprep.subr.bf16.mxu0 0
  %206 = vmatpush1.bf16.msra.mxu0 0
  %207 = vmatprep.subr.bf16.mxu0 0
  %208 = vmatpush1.bf16.msra.mxu0 0
  %209 = vmatprep.subr.bf16.mxu0 0
  %210 = vmatpush1.bf16.msra.mxu0 0
  %211 = vmatprep.subr.bf16.mxu0 0
  %212 = vmatpush1.bf16.msra.mxu0 0
  %213 = vmatprep.subr.bf16.mxu0 0
  %214 = vmatpush1.bf16.msra.mxu0 0
  %215 = vmatprep.subr.bf16.mxu0 0
  %216 = vmatpush1.bf16.msra.mxu0 0
  %217 = vmatprep.mubr.bf16.mxu0 0
  %218 = vmatmul.mubr.bf16.gmra.mrb[0].mxu0 %v121
  %v219 = vpop.f32.mrb[0].mxu0
  %v220 = vadd.f32 0.0, %v219
  %v221 = vpop.f32.mrb[0].mxu0
  %v222 = vpop.f32.mrb[0].mxu0
  %v223 = vadd.f32 0.0, %v222
  %v224 = vpop.f32.mrb[0].mxu0
  %225 = vmatprep.mubr.bf16.mxu0 0
  %226 = vmatmul.mubr.bf16.gmra.mrb[0].mxu0 %v122
  %v227 = vpop.f32.mrb[0].mxu0
  %v228 = vadd.f32 0.0, %v227
  %v229 = vpop.f32.mrb[0].mxu0
  %v230 = vpop.f32.mrb[0].mxu0
  %v231 = vadd.f32 0.0, %v230
  %v232 = vpop.f32.mrb[0].mxu0
  %233 = vmatprep.mubr.bf16.mxu0 0
  %234 = vmatmul.mubr.bf16.gmra.mrb[0].mxu0 %v123
  %v235 = vpop.f32.mrb[0].mxu0
  %v236 = vadd.f32 0.0, %v235
  %v237 = vpop.f32.mrb[0].mxu0
  %v238 = vpop.f32.mrb[0].mxu0
  %v239 = vadd.f32 0.0, %v238
  %v240 = vpop.f32.mrb[0].mxu0
  %241 = vmatprep.mubr.bf16.mxu0 0
  %242 = vmatmul.mubr.bf16.gmra.mrb[0].mxu0 %v124
  %v243 = vpop.f32.mrb[0].mxu0
  %v244 = vadd.f32 0.0, %v243
  %v245 = vpop.f32.mrb[0].mxu0
  %v246 = vpop.f32.mrb[0].mxu0
  %v247 = vadd.f32 0.0, %v246
  %v248 = vpop.f32.mrb[0].mxu0
  %249 = vmatprep.mubr.bf16.mxu0 0
  %250 = vmatmul.mubr.bf16.gmra.mrb[0].mxu0 %v125
  %v251 = vpop.f32.mrb[0].mxu0
  %v252 = vadd.f32 0.0, %v251
  %v253 = vpop.f32.mrb[0].mxu0
  %v254 = vpop.f32.mrb[0].mxu0
  %v255 = vadd.f32 0.0, %v254
  %v256 = vpop.f32.mrb[0].mxu0
  %257 = vmatprep.mubr.bf16.mxu0 0
  %258 = vmatmul.mubr.bf16.gmra.mrb[0].mxu0 %v126
  %v259 = vpop.f32.mrb[0].mxu0
  %v260 = vadd.f32 0.0, %v259
  %v261 = vpop.f32.mrb[0].mxu0
  %v262 = vpop.f32.mrb[0].mxu0
  %v263 = vadd.f32 0.0, %v262
  %v264 = vpop.f32.mrb[0].mxu0
  %265 = vmatprep.mubr.bf16.mxu0 0
  %266 = vmatmul.mubr.bf16.gmra.mrb[0].mxu0 %v127
  %v267 = vpop.f32.mrb[0].mxu0
  %v268 = vadd.f32 0.0, %v267
  %v269 = vpop.f32.mrb[0].mxu0
  %v270 = vpop.f32.mrb[0].mxu0
  %v271 = vadd.f32 0.0, %v270
  %v272 = vpop.f32.mrb[0].mxu0
  %273 = vmatprep.mubr.bf16.mxu0 0
  %274 = vmatmul.mubr.bf16.gmra.mrb[0].mxu0 %v128
  %v275 = vpop.f32.mrb[0].mxu0
  %v276 = vadd.f32 0.0, %v275
  %v277 = vpop.f32.mrb[0].mxu0
  %v278 = vpop.f32.mrb[0].mxu0
  %v279 = vadd.f32 0.0, %v278
  %v280 = vpop.f32.mrb[0].mxu0
  %281 = vdwg.mxu0
  %v282 = vadd.f32 %v41, %v220
  %v283 = vadd.f32 %v42, %v223
  %v284 = vadd.f32 %v43, %v228
  %v285 = vadd.f32 %v44, %v231
  %v286 = vadd.f32 %v45, %v236
  %v287 = vadd.f32 %v46, %v239
  %v288 = vadd.f32 %v47, %v244
  %v289 = vadd.f32 %v48, %v247
  %v290 = vadd.f32 %v49, %v252
  %v291 = vadd.f32 %v50, %v255
  %v292 = vadd.f32 %v51, %v260
  %v293 = vadd.f32 %v52, %v263
  %v294 = vadd.f32 %v53, %v268
  %v295 = vadd.f32 %v54, %v271
  %v296 = vadd.f32 %v55, %v276
  %v297 = vadd.f32 %v56, %v279
  %298 = vst [vmem:[#allocation2] sm:$0xff] %v282
  %299 = vst [vmem:[#allocation2 + $0x8] sm:$0xff] %v283
  %300 = vst [vmem:[#allocation2 + $0x10] sm:$0xff] %v284
  %301 = vst [vmem:[#allocation2 + $0x18] sm:$0xff] %v285
  %302 = vst [vmem:[#allocation2 + $0x20] sm:$0xff] %v286
  %303 = vst [vmem:[#allocation2 + $0x28] sm:$0xff] %v287
  %304 = vst [vmem:[#allocation2 + $0x30] sm:$0xff] %v288
  %305 = vst [vmem:[#allocation2 + $0x38] sm:$0xff] %v289
  %306 = vst [vmem:[#allocation2 + $0x40] sm:$0xff] %v290
  %307 = vst [vmem:[#allocation2 + $0x48] sm:$0xff] %v291
  %308 = vst [vmem:[#allocation2 + $0x50] sm:$0xff] %v292
  %309 = vst [vmem:[#allocation2 + $0x58] sm:$0xff] %v293
  %310 = vst [vmem:[#allocation2 + $0x60] sm:$0xff] %v294
  %311 = vst [vmem:[#allocation2 + $0x68] sm:$0xff] %v295
  %312 = vst [vmem:[#allocation2 + $0x70] sm:$0xff] %v296
  %313 = vst [vmem:[#allocation2 + $0x78] sm:$0xff] %v297
  // Predicated region
  $region26: #{encoder_forward.4} parent=0 // pred_check
    %p314 = pneg %p21
  $region27: #{encoder_forward.4} parent=0 // pred_check_branch
    %316 = sbr.rel (%p314) target = $region29
  $region28: #{encoder_forward.4} parent=0 // pred_region
    %v317 = vld [vmem:[#allocation2] sm:$0xff]
    %v318 = vld [vmem:[#allocation2 + $0x8] sm:$0xff]
    %v319 = vld [vmem:[#allocation2 + $0x10] sm:$0xff]
    %v320 = vld [vmem:[#allocation2 + $0x18] sm:$0xff]
    %v321 = vld [vmem:[#allocation2 + $0x20] sm:$0xff]
    %v322 = vld [vmem:[#allocation2 + $0x28] sm:$0xff]
    %v323 = vld [vmem:[#allocation2 + $0x30] sm:$0xff]
    %v324 = vld [vmem:[#allocation2 + $0x38] sm:$0xff]
    %v325 = vld [vmem:[#allocation2 + $0x40] sm:$0xff]
    %v326 = vld [vmem:[#allocation2 + $0x48] sm:$0xff]
    %v327 = vld [vmem:[#allocation2 + $0x50] sm:$0xff]
    %v328 = vld [vmem:[#allocation2 + $0x58] sm:$0xff]
    %v329 = vld [vmem:[#allocation2 + $0x60] sm:$0xff]
    %v330 = vld [vmem:[#allocation2 + $0x68] sm:$0xff]
    %v331 = vld [vmem:[#allocation2 + $0x70] sm:$0xff]
    %v332 = vld [vmem:[#allocation2 + $0x78] sm:$0xff]
    %v333 = vld [vmem:[%s2] sm:$0x1]
    %v335 = vlaneseq
    %v336 = vshrl.u32 %v335, 7
    %v337 = vsub.s32 0, %v336
    %v338 = vrot.slane %v333, %v337
    %v340 = vmul.f32 %v317, %v338
    %v341 = vmul.f32 %v318, %v338
    %v342 = vmul.f32 %v319, %v338
    %v343 = vmul.f32 %v320, %v338
    %v344 = vmul.f32 %v321, %v338
    %v345 = vmul.f32 %v322, %v338
    %v346 = vmul.f32 %v323, %v338
    %v347 = vmul.f32 %v324, %v338
    %v348 = vmul.f32 %v325, %v338
    %v349 = vmul.f32 %v326, %v338
    %v350 = vmul.f32 %v327, %v338
    %v351 = vmul.f32 %v328, %v338
    %v352 = vmul.f32 %v329, %v338
    %v353 = vmul.f32 %v330, %v338
    %v354 = vmul.f32 %v331, %v338
    %v355 = vmul.f32 %v332, %v338
    %v356 = vld [vmem:[%s3] sm:$0x1]
    %v358 = vlaneseq
    %v359 = vshrl.u32 %v358, 7
    %v360 = vsub.s32 0, %v359
    %v361 = vrot.slane %v356, %v360
    %v363 = vadd.f32 %v340, %v361
    %v364 = vadd.f32 %v341, %v361
    %v365 = vadd.f32 %v342, %v361
    %v366 = vadd.f32 %v343, %v361
    %v367 = vadd.f32 %v344, %v361
    %v368 = vadd.f32 %v345, %v361
    %v369 = vadd.f32 %v346, %v361
    %v370 = vadd.f32 %v347, %v361
    %v371 = vadd.f32 %v348, %v361
    %v372 = vadd.f32 %v349, %v361
    %v373 = vadd.f32 %v350, %v361
    %v374 = vadd.f32 %v351, %v361
    %v375 = vadd.f32 %v352, %v361
    %v376 = vadd.f32 %v353, %v361
    %v377 = vadd.f32 %v354, %v361
    %v378 = vadd.f32 %v355, %v361
    %vm379 = vcmp.ge.f32.partialorder %v363, 0.0
    %vm380 = vcmp.ge.f32.partialorder %v364, 0.0
    %vm381 = vcmp.ge.f32.partialorder %v365, 0.0
    %vm382 = vcmp.ge.f32.partialorder %v366, 0.0
    %vm383 = vcmp.ge.f32.partialorder %v367, 0.0
    %vm384 = vcmp.ge.f32.partialorder %v368, 0.0
    %vm385 = vcmp.ge.f32.partialorder %v369, 0.0
    %vm386 = vcmp.ge.f32.partialorder %v370, 0.0
    %vm387 = vcmp.ge.f32.partialorder %v371, 0.0
    %vm388 = vcmp.ge.f32.partialorder %v372, 0.0
    %vm389 = vcmp.ge.f32.partialorder %v373, 0.0
    %vm390 = vcmp.ge.f32.partialorder %v374, 0.0
    %vm391 = vcmp.ge.f32.partialorder %v375, 0.0
    %vm392 = vcmp.ge.f32.partialorder %v376, 0.0
    %vm393 = vcmp.ge.f32.partialorder %v377, 0.0
    %vm394 = vcmp.ge.f32.partialorder %v378, 0.0
    %v395 = vld [vmem:[%s4] sm:$0x1]
    %v397 = vlaneseq
    %v398 = vshrl.u32 %v397, 7
    %v399 = vsub.s32 0, %v398
    %v400 = vrot.slane %v395, %v399
    %v402 = vmul.f32 %v363, %v400
    %v403 = vmul.f32 %v364, %v400
    %v404 = vmul.f32 %v365, %v400
    %v405 = vmul.f32 %v366, %v400
    %v406 = vmul.f32 %v367, %v400
    %v407 = vmul.f32 %v368, %v400
    %v408 = vmul.f32 %v369, %v400
    %v409 = vmul.f32 %v370, %v400
    %v410 = vmul.f32 %v371, %v400
    %v411 = vmul.f32 %v372, %v400
    %v412 = vmul.f32 %v373, %v400
    %v413 = vmul.f32 %v374, %v400
    %v414 = vmul.f32 %v375, %v400
    %v415 = vmul.f32 %v376, %v400
    %v416 = vmul.f32 %v377, %v400
    %v417 = vmul.f32 %v378, %v400
    %v418 = vsel %vm379, %v363, %v402
    %v419 = vsel %vm380, %v364, %v403
    %v420 = vsel %vm381, %v365, %v404
    %v421 = vsel %vm382, %v366, %v405
    %v422 = vsel %vm383, %v367, %v406
    %v423 = vsel %vm384, %v368, %v407
    %v424 = vsel %vm385, %v369, %v408
    %v425 = vsel %vm386, %v370, %v409
    %v426 = vsel %vm387, %v371, %v410
    %v427 = vsel %vm388, %v372, %v411
    %v428 = vsel %vm389, %v373, %v412
    %v429 = vsel %vm390, %v374, %v413
    %v430 = vsel %vm391, %v375, %v414
    %v431 = vsel %vm392, %v376, %v415
    %v432 = vsel %vm393, %v377, %v416
    %v433 = vsel %vm394, %v378, %v417
    %434 = vst [vmem:[%s5] sm:$0xff] %v418
    %435 = vst [vmem:[%s5 + $0x8] sm:$0xff] %v419
    %436 = vst [vmem:[%s5 + $0x10] sm:$0xff] %v420
    %437 = vst [vmem:[%s5 + $0x18] sm:$0xff] %v421
    %438 = vst [vmem:[%s5 + $0x20] sm:$0xff] %v422
    %439 = vst [vmem:[%s5 + $0x28] sm:$0xff] %v423
    %440 = vst [vmem:[%s5 + $0x30] sm:$0xff] %v424
    %441 = vst [vmem:[%s5 + $0x38] sm:$0xff] %v425
    %442 = vst [vmem:[%s5 + $0x40] sm:$0xff] %v426
    %443 = vst [vmem:[%s5 + $0x48] sm:$0xff] %v427
    %444 = vst [vmem:[%s5 + $0x50] sm:$0xff] %v428
    %445 = vst [vmem:[%s5 + $0x58] sm:$0xff] %v429
    %446 = vst [vmem:[%s5 + $0x60] sm:$0xff] %v430
    %447 = vst [vmem:[%s5 + $0x68] sm:$0xff] %v431
    %448 = vst [vmem:[%s5 + $0x70] sm:$0xff] %v432
    %449 = vst [vmem:[%s5 + $0x78] sm:$0xff] %v433
  $region29: #{encoder_forward.4} parent=0 // pred_fallthru
    _
  // Predicated region
  $region30: #{encoder_forward.4} parent=0 // pred_check
    _
  $region31: #{encoder_forward.4} parent=0 // pred_check_branch
    %451 = sbr.rel (0) target = $region33
  $region32: #{encoder_forward.4} parent=0 // pred_region
    _
  $region33: #{encoder_forward.4} parent=0 // pred_fallthru
    _
  // Predicated region
  $region34: #{encoder_forward.4} parent=0 // pred_check
    _
  $region35: #{encoder_forward.4} parent=0 // pred_check_branch
    %453 = sbr.rel (0) target = $region37
  $region36: #{encoder_forward.4} parent=0 // pred_region
    _
  $region37: #{encoder_forward.4} parent=0 // pred_fallthru
    _

// kernel: encoder_forward.5
$region0: #{encoder_forward.5}
  #allocation0 [shape = 'u32[]', space=smem, size = 0x4, offset = 0x4, fixed_abs, tag = 'smem constant byte address 0x4 - core index']
  #allocation1 [shape = 'u32[144,128]{1,0:T(1,128)}', space=vmem, size = 0x12000, scoped, tag = 'internal scratch']
  #allocation2 [shape = 'f32[32,128]{1,0:T(8,128)}', space=vmem, size = 0x4000, scoped, tag = 'scratch operand']
  %s0 = inlined_call_operand.vmem [shape: bf16[32,1664], index: 0, kind: input, shape index: {}]
  %s1 = inlined_call_operand.vmem [shape: bf16[1664,128], index: 1, kind: input, shape index: {}]
  %s2 = inlined_call_operand.vmem [shape: f32[1,128], index: 2, kind: input, shape index: {}]
  %s3 = inlined_call_operand.vmem [shape: f32[1,128], index: 3, kind: input, shape index: {}]
  %s4 = inlined_call_operand.vmem [shape: f32[1,128], index: 4, kind: input, shape index: {}]
  %s5 = inlined_call_operand.vmem [shape: f32[32,128], index: 5, kind: output, shape index: {}]
  %s6 = sld [smem:[#allocation0]]
  $region102: #{encoder_forward.5} parent=0
    _
  %s8 = ssub.s32 1, %s6
  %s9 = scalar_select 0, %s8, %s6
  $region1: #{encoder_forward.5} parent=0
    #allocation3 [shape = 'u8[16384]{0}', space=vmem, size = 0x4000, scoped, tag = 'input window, operand 0']
    loop: start=0, step=1, limit=15
    $region2: #{encoder_forward.5} parent=1 // loop_pre_header
      _
    $region3: #{encoder_forward.5} parent=1 // loop_header
      %s11 = sphi 0, %s15
      %p12 = scmp.ge.s32.totalorder %s11, 15
      %s18 = sphi 0, %s37
      %s19 = sphi 0, %s33
      %s20 = sphi 0, %s29
      %s21 = sphi 0, %s18
      %s22 = sphi 0, %s19
      %s23 = sphi 0, %s20
      %s24 = sphi 0, %s21
      %s25 = sphi 0, %s22
      %s26 = sphi 0, %s23
      %s42 = sphi 0, %s44
      %s45 = sphi 0, %s42
      %s46 = sphi 0, %s45
      %s62 = sphi 0, %s46
      %s70 = sphi 0, %s72
      %s73 = sphi 0, %s70
      %s74 = sphi 0, %s73
      %s90 = sphi 0, %s74
      %s96 = sphi 0, %s98
      %s99 = sphi 0, %s96
      %s100 = sphi 0, %s99
      %s116 = sphi 0, %s100
      %s122 = sphi 0, %s124
      %s125 = sphi 0, %s122
      %s126 = sphi 0, %s125
      %s142 = sphi 0, %s126
      %s148 = sphi 0, %s150
      %s151 = sphi 0, %s148
      %s152 = sphi 0, %s151
      %s168 = sphi 0, %s152
      %s176 = sphi 0, %s178
      %s179 = sphi 0, %s176
      %s180 = sphi 0, %s179
      %s196 = sphi 0, %s180
    $region4: #{encoder_forward.5} parent=1 // loop_header_branch
      %14 = sbr.rel (%p12) target = $region8
    $region5: #{encoder_forward.5} parent=1 // loop_body
      %s16 = ssub.s32 %s11, 1
      %s17 = ssub.s32 %s11, 2
      %s27 = sadd.s32 1, %s20
      %p28 = scmp.ge.s32.totalorder %s27, 13
      %s29 = scalar_select %p28, 0, %s27
      %s30 = sadd.s32 1, %s19
      %s31 = scalar_select %p28, %s30, %s19
      %p32 = scmp.ge.s32.totalorder %s31, 1
      %s33 = scalar_select %p32, 0, %s31
      %s34 = sadd.s32 1, %s18
      %s35 = scalar_select %p32, %s34, %s18
      %p36 = scmp.ge.s32.totalorder %s35, 1
      %s37 = scalar_select %p36, 0, %s35
      %s38 = ssub.s32 %s18, %s37
      %s39 = ssub.s32 %s20, %s29
      %s40 = sor.u32 %s38, %s39
      %p41 = scmp.eq.s32.totalorder %s40, 0
      %s43 = sadd.s32 %s42, 1
      %s44 = scalar_select %p41, %s42, %s43
      %p47 = pneg %p41
      %p48 = scmp.eq.s32.totalorder %s11, 12
      %p49 = por %p47, %p48
      %p50 = scmp.ne.s32.totalorder %s42, %s45
      %p51 = scmp.eq.s32.totalorder %s11, 0
      %p52 = por %p50, %p51
      %p53 = scmp.ne.s32.totalorder %s42, %s45
      %p54 = scmp.eq.s32.totalorder %s16, 12
      %p55 = por %p53, %p54
      %p56 = scmp.ne.s32.totalorder %s45, %s46
      %p57 = scmp.eq.s32.totalorder %s16, 0
      %p58 = por %p56, %p57
      %p59 = scmp.ne.s32.totalorder %s45, %s46
      %p60 = scmp.eq.s32.totalorder %s17, 12
      %p61 = por %p59, %p60
      %p63 = scmp.ne.s32.totalorder %s46, %s62
      %p64 = scmp.eq.s32.totalorder %s17, 0
      %p65 = por %p63, %p64
      %s66 = ssub.s32 %s20, %s29
      %s67 = ssub.s32 %s19, %s33
      %s68 = sor.u32 %s66, %s67
      %p69 = scmp.eq.s32.totalorder %s68, 0
      %s71 = sadd.s32 %s70, 1
      %s72 = scalar_select %p69, %s70, %s71
      %p75 = pneg %p69
      %p76 = scmp.eq.s32.totalorder %s11, 12
      %p77 = por %p75, %p76
      %p78 = scmp.ne.s32.totalorder %s70, %s73
      %p79 = scmp.eq.s32.totalorder %s11, 0
      %p80 = por %p78, %p79
      %p81 = scmp.ne.s32.totalorder %s70, %s73
      %p82 = scmp.eq.s32.totalorder %s16, 12
      %p83 = por %p81, %p82
      %p84 = scmp.ne.s32.totalorder %s73, %s74
      %p85 = scmp.eq.s32.totalorder %s16, 0
      %p86 = por %p84, %p85
      %p87 = scmp.ne.s32.totalorder %s73, %s74
      %p88 = scmp.eq.s32.totalorder %s17, 12
      %p89 = por %p87, %p88
      %p91 = scmp.ne.s32.totalorder %s74, %s90
      %p92 = scmp.eq.s32.totalorder %s17, 0
      %p93 = por %p91, %p92
      %s94 = ssub.s32 %s19, %s33
      %p95 = scmp.eq.s32.totalorder %s94, 0
      %s97 = sadd.s32 %s96, 1
      %s98 = scalar_select %p95, %s96, %s97
      %p101 = pneg %p95
      %p102 = scmp.eq.s32.totalorder %s11, 12
      %p103 = por %p101, %p102
      %p104 = scmp.ne.s32.totalorder %s96, %s99
      %p105 = scmp.eq.s32.totalorder %s11, 0
      %p106 = por %p104, %p105
      %p107 = scmp.ne.s32.totalorder %s96, %s99
      %p108 = scmp.eq.s32.totalorder %s16, 12
      %p109 = por %p107, %p108
      %p110 = scmp.ne.s32.totalorder %s99, %s100
      %p111 = scmp.eq.s32.totalorder %s16, 0
      %p112 = por %p110, %p111
      %p113 = scmp.ne.s32.totalorder %s99, %s100
      %p114 = scmp.eq.s32.totalorder %s17, 12
      %p115 = por %p113, %p114
      %p117 = scmp.ne.s32.totalorder %s100, %s116
      %p118 = scmp.eq.s32.totalorder %s17, 0
      %p119 = por %p117, %p118
      %s120 = ssub.s32 %s19, %s33
      %p121 = scmp.eq.s32.totalorder %s120, 0
      %s123 = sadd.s32 %s122, 1
      %s124 = scalar_select %p121, %s122, %s123
      %p127 = pneg %p121
      %p128 = scmp.eq.s32.totalorder %s11, 12
      %p129 = por %p127, %p128
      %p130 = scmp.ne.s32.totalorder %s122, %s125
      %p131 = scmp.eq.s32.totalorder %s11, 0
      %p132 = por %p130, %p131
      %p133 = scmp.ne.s32.totalorder %s122, %s125
      %p134 = scmp.eq.s32.totalorder %s16, 12
      %p135 = por %p133, %p134
      %p136 = scmp.ne.s32.totalorder %s125, %s126
      %p137 = scmp.eq.s32.totalorder %s16, 0
      %p138 = por %p136, %p137
      %p139 = scmp.ne.s32.totalorder %s125, %s126
      %p140 = scmp.eq.s32.totalorder %s17, 12
      %p141 = por %p139, %p140
      %p143 = scmp.ne.s32.totalorder %s126, %s142
      %p144 = scmp.eq.s32.totalorder %s17, 0
      %p145 = por %p143, %p144
      %s146 = ssub.s32 %s19, %s33
      %p147 = scmp.eq.s32.totalorder %s146, 0
      %s149 = sadd.s32 %s148, 1
      %s150 = scalar_select %p147, %s148, %s149
      %p153 = pneg %p147
      %p154 = scmp.eq.s32.totalorder %s11, 12
      %p155 = por %p153, %p154
      %p156 = scmp.ne.s32.totalorder %s148, %s151
      %p157 = scmp.eq.s32.totalorder %s11, 0
      %p158 = por %p156, %p157
      %p159 = scmp.ne.s32.totalorder %s148, %s151
      %p160 = scmp.eq.s32.totalorder %s16, 12
      %p161 = por %p159, %p160
      %p162 = scmp.ne.s32.totalorder %s151, %s152
      %p163 = scmp.eq.s32.totalorder %s16, 0
      %p164 = por %p162, %p163
      %p165 = scmp.ne.s32.totalorder %s151, %s152
      %p166 = scmp.eq.s32.totalorder %s17, 12
      %p167 = por %p165, %p166
      %p169 = scmp.ne.s32.totalorder %s152, %s168
      %p170 = scmp.eq.s32.totalorder %s17, 0
      %p171 = por %p169, %p170
      %s172 = ssub.s32 %s18, %s37
      %s173 = ssub.s32 %s19, %s33
      %s174 = sor.u32 %s172, %s173
      %p175 = scmp.eq.s32.totalorder %s174, 0
      %s177 = sadd.s32 %s176, 1
      %s178 = scalar_select %p175, %s176, %s177
      %p181 = pneg %p175
      %p182 = scmp.eq.s32.totalorder %s11, 12
      %p183 = por %p181, %p182
      %p184 = scmp.ne.s32.totalorder %s176, %s179
      %p185 = scmp.eq.s32.totalorder %s11, 0
      %p186 = por %p184, %p185
      %p187 = scmp.ne.s32.totalorder %s176, %s179
      %p188 = scmp.eq.s32.totalorder %s16, 12
      %p189 = por %p187, %p188
      %p190 = scmp.ne.s32.totalorder %s179, %s180
      %p191 = scmp.eq.s32.totalorder %s16, 0
      %p192 = por %p190, %p191
      %p193 = scmp.ne.s32.totalorder %s179, %s180
      %p194 = scmp.eq.s32.totalorder %s17, 12
      %p195 = por %p193, %p194
      %p197 = scmp.ne.s32.totalorder %s180, %s196
      %p198 = scmp.eq.s32.totalorder %s17, 0
      %p199 = por %p197, %p198
      %p200 = scmp.le.s32.totalorder 1, %s11
      %p201 = scmp.lt.s32.totalorder %s11, 14
      %p202 = pnand %p200, %p201
      %p203 = pneg %p202
      // Predicated region
      $region9: #{encoder_forward.5} parent=5 // pred_check
        _
      $region10: #{encoder_forward.5} parent=5 // pred_check_branch
        %205 = sbr.rel (%p202) target = $region12
      $region11: #{encoder_forward.5} parent=5 // pred_region
        %s206 = ssub.s32 %s11, 1
        // Predicated region
        $region13: #{encoder_forward.5} parent=11 // pred_check
          %p207 = pneg %p112
        $region14: #{encoder_forward.5} parent=11 // pred_check_branch
          %209 = sbr.rel (%p207) target = $region16
        $region15: #{encoder_forward.5} parent=11 // pred_region
          %p210 = scmp.lt.s32.totalorder %s22, 0
          %s211 = scalar_select %p210, %s22, 0
          %s212 = scalar_lea.vmem %s2, %s211
        $region16: #{encoder_forward.5} parent=11 // pred_fallthru
          _
        // Predicated region
        $region17: #{encoder_forward.5} parent=11 // pred_check
          %p213 = pneg %p138
        $region18: #{encoder_forward.5} parent=11 // pred_check_branch
          %215 = sbr.rel (%p213) target = $region20
        $region19: #{encoder_forward.5} parent=11 // pred_region
          %p216 = scmp.lt.s32.totalorder %s22, 0
          %s217 = scalar_select %p216, %s22, 0
          %s218 = scalar_lea.vmem %s3, %s217
        $region20: #{encoder_forward.5} parent=11 // pred_fallthru
          _
        // Predicated region
        $region21: #{encoder_forward.5} parent=11 // pred_check
          %p219 = pneg %p164
        $region22: #{encoder_forward.5} parent=11 // pred_check_branch
          %221 = sbr.rel (%p219) target = $region24
        $region23: #{encoder_forward.5} parent=11 // pred_region
          %p222 = scmp.lt.s32.totalorder %s22, 0
          %s223 = scalar_select %p222, %s22, 0
          %s224 = scalar_lea.vmem %s4, %s223
        $region24: #{encoder_forward.5} parent=11 // pred_fallthru
          _
      $region12: #{encoder_forward.5} parent=5 // pred_fallthru
        _
      %p225 = scmp.lt.s32.totalorder %s11, 13
      // Predicated region
      $region25: #{encoder_forward.5} parent=5 // pred_check
        %p226 = pneg %p225
      $region26: #{encoder_forward.5} parent=5 // pred_check_branch
        %228 = sbr.rel (%p226) target = $region28
      $region27: #{encoder_forward.5} parent=5 // pred_region
        // Predicated region
        $region29: #{encoder_forward.5} parent=27 // pred_check
          %p229 = pneg %p52
        $region30: #{encoder_forward.5} parent=27 // pred_check_branch
          %231 = sbr.rel (%p229) target = $region32
        $region31: #{encoder_forward.5} parent=27 // pred_region
          %s232 = sand.u32 %s42, 1
          %s233 = sand.u32 %s42, 1
          %s234 = smul.addr %s233, 16
          %s235 = scalar_lea.vmem [#allocation3], %s234
          %s236 = smul.u32 4, %s18
          %s237 = smul.addr %s236, 13
          %s238 = sadd.s32 %s20, %s237
          %s239 = smul.addr %s238, 4
          %s240 = scalar_lea.vmem %s0, %s239
          // Predicated region
          $region33: #{encoder_forward.5} parent=31 // pred_check
            _
          $region34: #{encoder_forward.5} parent=31 // pred_check_branch
            %242 = sbr.rel (0) target = $region36
          $region35: #{encoder_forward.5} parent=31 // pred_region
            // Predicated region
            $region37: #{encoder_forward.5} parent=35 // pred_check
              _
            $region38: #{encoder_forward.5} parent=35 // pred_check_branch
              %244 = sbr.rel target = $region40
            $region39: #{encoder_forward.5} parent=35 // pred_region
              // Predicated region
              $region52: #{encoder_forward.5} parent=39 // pred_check
                _
              $region53: #{encoder_forward.5} parent=39 // pred_check_branch
                %265 = sbr.rel (0) target = $region55
              $region54: #{encoder_forward.5} parent=39 // pred_region
                loop: start=0, step=1, limit=1
                $region56: #{encoder_forward.5} parent=54 // loop_pre_header
                  _
                $region57: #{encoder_forward.5} parent=54 // loop_header
                  %s267 = sphi 0, %s271
                  %p268 = scmp.ge.s32.totalorder %s267, 1
                  %s272 = sphi %s240, %s240
                  %s273 = sphi %s235, %s235
                $region58: #{encoder_forward.5} parent=54 // loop_header_branch
                  %270 = sbr.rel (%p268) target = $region62
                $region59: #{encoder_forward.5} parent=54 // loop_body
                  _
                $region60: #{encoder_forward.5} parent=54 // loop_footer
                  %s271 = sadd.s32 1, %s267
                $region61: #{encoder_forward.5} parent=54 // loop_footer_branch
                  %266 = sbr.rel target = $region57
                $region62: #{encoder_forward.5} parent=54 // loop_exit
                  _
                loop: start=0, step=1, limit=1
                $region63: #{encoder_forward.5} parent=54 // loop_pre_header
                  _
                $region64: #{encoder_forward.5} parent=54 // loop_header
                  %s276 = sphi 0, %s280
                  %p277 = scmp.ge.s32.totalorder %s276, 1
                  %s281 = sphi %s240, %s240
                  %s282 = sphi %s235, %s235
                $region65: #{encoder_forward.5} parent=54 // loop_header_branch
                  %279 = sbr.rel (%p277) target = $region69
                $region66: #{encoder_forward.5} parent=54 // loop_body
                  %v283 = vld [vmem:[%s281] sm:$0xf]
                  %284 = vst [vmem:[%s282] sm:$0xf] %v283
                  %v285 = vld [vmem:[%s281 + $0x34] sm:$0xf]
                  %286 = vst [vmem:[%s282 + $0x4] sm:$0xf] %v285
                  %v287 = vld [vmem:[%s281 + $0x68] sm:$0xf]
                  %288 = vst [vmem:[%s282 + $0x8] sm:$0xf] %v287
                  %v289 = vld [vmem:[%s281 + $0x9c] sm:$0xf]
                  %290 = vst [vmem:[%s282 + $0xc] sm:$0xf] %v289
                $region67: #{encoder_forward.5} parent=54 // loop_footer
                  %s280 = sadd.s32 1, %s276
                $region68: #{encoder_forward.5} parent=54 // loop_footer_branch
                  %275 = sbr.rel target = $region64
                $region69: #{encoder_forward.5} parent=54 // loop_exit
                  _
              $region55: #{encoder_forward.5} parent=39 // pred_fallthru
                _
            $region40: #{encoder_forward.5} parent=35 // pred_fallthru
              _
            // Predicated region
            $region41: #{encoder_forward.5} parent=35 // pred_check
              _
            $region42: #{encoder_forward.5} parent=35 // pred_check_branch
              %246 = sbr.rel (0) target = $region44
            $region43: #{encoder_forward.5} parent=35 // pred_region
              loop: start=0, step=1, limit=1
              $region45: #{encoder_forward.5} parent=43 // loop_pre_header
                _
              $region46: #{encoder_forward.5} parent=43 // loop_header
                %s249 = sphi 0, %s253
                %p250 = scmp.ge.s32.totalorder %s249, 1
                %s254 = sphi %s240, %s240
                %s255 = sphi %s235, %s235
              $region47: #{encoder_forward.5} parent=43 // loop_header_branch
                %252 = sbr.rel (%p250) target = $region51
              $region48: #{encoder_forward.5} parent=43 // loop_body
                %v256 = vld [vmem:[%s254] sm:$0xf]
                %257 = vst [vmem:[%s255] sm:$0xf] %v256
                %v258 = vld [vmem:[%s254 + $0x34] sm:$0xf]
                %259 = vst [vmem:[%s255 + $0x4] sm:$0xf] %v258
                %v260 = vld [vmem:[%s254 + $0x68] sm:$0xf]
                %261 = vst [vmem:[%s255 + $0x8] sm:$0xf] %v260
                %v262 = vld [vmem:[%s254 + $0x9c] sm:$0xf]
                %263 = vst [vmem:[%s255 + $0xc] sm:$0xf] %v262
              $region49: #{encoder_forward.5} parent=43 // loop_footer
                %s253 = sadd.s32 1, %s249
              $region50: #{encoder_forward.5} parent=43 // loop_footer_branch
                %248 = sbr.rel target = $region46
              $region51: #{encoder_forward.5} parent=43 // loop_exit
                _
            $region44: #{encoder_forward.5} parent=35 // pred_fallthru
              _
          $region36: #{encoder_forward.5} parent=31 // pred_fallthru
            _
          %291 = vnop
        $region32: #{encoder_forward.5} parent=27 // pred_fallthru
          _
        // Predicated region
        $region70: #{encoder_forward.5} parent=27 // pred_check
          %p292 = pneg %p80
        $region71: #{encoder_forward.5} parent=27 // pred_check_branch
          %294 = sbr.rel (%p292) target = $region73
        $region72: #{encoder_forward.5} parent=27 // pred_region
          %s295 = smul.u32 16, %s20
          %p296 = scmp.lt.s32.totalorder %s295, 207
          %s297 = scalar_select %p296, %s295, 207
          %p298 = scmp.lt.s32.totalorder %s19, 0
          %s299 = scalar_select %p298, %s19, 0
          %s300 = sadd.s32 %s299, %s297
          %s301 = smul.addr %s300, 4
          %s302 = scalar_lea.vmem %s1, %s301
          %s303 = smul.u32 16, %s20
        $region73: #{encoder_forward.5} parent=27 // pred_fallthru
          _
      $region28: #{encoder_forward.5} parent=5 // pred_fallthru
        _
      %p304 = scmp.le.s32.totalorder 1, %s11
      %p305 = scmp.lt.s32.totalorder %s11, 14
      %p306 = pnand %p304, %p305
      %p307 = pneg %p306
      // Predicated region
      $region74: #{encoder_forward.5} parent=5 // pred_check
        _
      $region75: #{encoder_forward.5} parent=5 // pred_check_branch
        %309 = sbr.rel (%p306) target = $region77
      $region76: #{encoder_forward.5} parent=5 // pred_region
        %s310 = ssub.s32 %s11, 1
        %s311 = sand.u32 %s45, 1
        %s312 = sand.u32 %s45, 1
        %s313 = smul.addr %s312, 16
        %s314 = scalar_lea.vmem [#allocation3], %s313
        // Predicated region
        $region78: #{encoder_forward.5} parent=76 // pred_check
          %p315 = pneg %p58
        $region79: #{encoder_forward.5} parent=76 // pred_check_branch
          %317 = sbr.rel (%p315) target = $region81
        $region80: #{encoder_forward.5} parent=76 // pred_region
          _
        $region81: #{encoder_forward.5} parent=76 // pred_fallthru
          _
        %s318 = sand.u32 %s45, 1
        %s319 = sand.u32 %s45, 1
        %s320 = smul.addr %s319, 16
        %s321 = scalar_lea.vmem [#allocation3], %s320
        %p322 = pneg %p58
        %p323 = pneg %p55
        %s324 = smul.u32 16, %s23
        %p325 = scmp.lt.s32.totalorder %s324, 207
        %s326 = scalar_select %p325, %s324, 207
        %p327 = scmp.lt.s32.totalorder %s22, 0
        %s328 = scalar_select %p327, %s22, 0
        %s329 = sadd.s32 %s328, %s326
        %s330 = smul.addr %s329, 4
        %s331 = scalar_lea.vmem %s1, %s330
        %p332 = pneg %p86
        %p333 = pneg %p83
        %p334 = scmp.lt.s32.totalorder %s22, 0
        %s335 = scalar_select %p334, %s22, 0
        %s336 = scalar_lea.vmem %s2, %s335
        %p337 = pneg %p112
        %p338 = pneg %p109
        %p339 = scmp.lt.s32.totalorder %s22, 0
        %s340 = scalar_select %p339, %s22, 0
        %s341 = scalar_lea.vmem %s3, %s340
        %p342 = pneg %p138
        %p343 = pneg %p135
        %p344 = scmp.lt.s32.totalorder %s22, 0
        %s345 = scalar_select %p344, %s22, 0
        %s346 = scalar_lea.vmem %s4, %s345
        %p347 = pneg %p164
        %p348 = pneg %p161
        %p349 = pneg %p192
        %p350 = pneg %p189
        %s351 = smul.u32 4, %s21
        %p352 = scmp.lt.s32.totalorder %s351, 3
        %s353 = scalar_select %p352, %s351, 3
        %p354 = scmp.lt.s32.totalorder %s22, 0
        %s355 = scalar_select %p354, %s22, 0
        %s356 = sadd.s32 %s355, %s353
        %s357 = smul.addr %s356, 8
        %s358 = scalar_lea.vmem %s5, %s357
        %s359 = smul.u32 4, %s21
        %s360 = smul.u32 16, %s23
        %p361 = scmp.lt.s32.totalorder %s360, 207
        %s362 = scalar_select %p361, %s360, 207
        %p363 = scmp.lt.s32.totalorder %s22, 0
        %s364 = scalar_select %p363, %s22, 0
        %s365 = sadd.s32 %s364, %s362
        %s366 = smul.addr %s365, 4
        %s367 = scalar_lea.vmem %s1, %s366
        %s368 = smul.u32 16, %s23
        %p369 = scmp.lt.s32.totalorder %s22, 0
        %s370 = scalar_select %p369, %s22, 0
        %s371 = scalar_lea.vmem %s2, %s370
        %p372 = scmp.lt.s32.totalorder %s22, 0
        %s373 = scalar_select %p372, %s22, 0
        %s374 = scalar_lea.vmem %s3, %s373
        %p375 = scmp.lt.s32.totalorder %s22, 0
        %s376 = scalar_select %p375, %s22, 0
        %s377 = scalar_lea.vmem %s4, %s376
        %s378 = smul.u32 4, %s21
        %p379 = scmp.lt.s32.totalorder %s378, 3
        %s380 = scalar_select %p379, %s378, 3
        %p381 = scmp.lt.s32.totalorder %s22, 0
        %s382 = scalar_select %p381, %s22, 0
        %s383 = sadd.s32 %s382, %s380
        %s384 = smul.addr %s383, 8
        %s385 = scalar_lea.vmem %s5, %s384
        %s386 = smul.u32 4, %s21
        %p388 = scmp.eq.s32.totalorder %s23, 0
        // Predicated region
        $region82: #{encoder_forward.5} parent=76 // pred_check
          %p389 = pneg %p388
        $region83: #{encoder_forward.5} parent=76 // pred_check_branch
          %391 = sbr.rel (%p389) target = $region85
        $region84: #{encoder_forward.5} parent=76 // pred_region
          %392 = vst [vmem:[#allocation2] sm:$0xff] 0.0
          %393 = vst [vmem:[#allocation2 + $0x8] sm:$0xff] 0.0
          %394 = vst [vmem:[#allocation2 + $0x10] sm:$0xff] 0.0
          %395 = vst [vmem:[#allocation2 + $0x18] sm:$0xff] 0.0
        $region85: #{encoder_forward.5} parent=76 // pred_fallthru
          _
        %v396 = vld [vmem:[#allocation2] sm:$0xff]
        %v397 = vld [vmem:[#allocation2 + $0x8] sm:$0xff]
        %v398 = vld [vmem:[#allocation2 + $0x10] sm:$0xff]
        %v399 = vld [vmem:[#allocation2 + $0x18] sm:$0xff]
        %v400 = vld [vmem:[%s314] sm:$0xf]
        %v401 = vld [vmem:[%s314 + $0x4] sm:$0xf]
        %v402 = vld [vmem:[%s314 + $0x8] sm:$0xf]
        %v403 = vld [vmem:[%s314 + $0xc] sm:$0xf]
        %v404 = vld [vmem:[%s367] sm:$0xf]
        %v405 = vld [vmem:[%s367 + $0x4] sm:$0xf]
        %v406 = vld [vmem:[%s367 + $0x8] sm:$0xf]
        %v407 = vld [vmem:[%s367 + $0xc] sm:$0xf]
        %v408 = vld [vmem:[%s367 + $0x10] sm:$0xf]
        %v409 = vld [vmem:[%s367 + $0x14] sm:$0xf]
        %v410 = vld [vmem:[%s367 + $0x18] sm:$0xf]
        %v411 = vld [vmem:[%s367 + $0x1c] sm:$0xf]
        %v412 = vld [vmem:[%s367 + $0x20] sm:$0xf]
        %v413 = vld [vmem:[%s367 + $0x24] sm:$0xf]
        %v414 = vld [vmem:[%s367 + $0x28] sm:$0xf]
        %v415 = vld [vmem:[%s367 + $0x2c] sm:$0xf]
        %v416 = vld [vmem:[%s367 + $0x30] sm:$0xf]
        %v417 = vld [vmem:[%s367 + $0x34] sm:$0xf]
        %v418 = vld [vmem:[%s367 + $0x38] sm:$0xf]
        %v419 = vld [vmem:[%s367 + $0x3c] sm:$0xf]
        %v424 = vunpack.c.l.b16 %v400
        %v425 = vunpack.c.l.b16 %v401
        %v426 = vunpack.c.l.b16 %v402
        %v427 = vunpack.c.l.b16 %v403
        %v428 = vpack.c.b16 %v425, %v424
        %v429 = vpack.c.b16 %v427, %v426
        %v448 = vunpack.c.l.b16 %v404
        %v449 = vunpack.c.l.b16 %v405
        %v450 = vunpack.c.l.b16 %v406
        %v451 = vunpack.c.l.b16 %v407
        %v452 = vunpack.c.l.b16 %v408
        %v453 = vunpack.c.l.b16 %v409
        %v454 = vunpack.c.l.b16 %v410
        %v455 = vunpack.c.l.b16 %v411
        %v456 = vunpack.c.l.b16 %v412
        %v457 = vunpack.c.l.b16 %v413
        %v458 = vunpack.c.l.b16 %v414
        %v459 = vunpack.c.l.b16 %v415
        %v460 = vunpack.c.l.b16 %v416
        %v461 = vunpack.c.l.b16 %v417
        %v462 = vunpack.c.l.b16 %v418
        %v463 = vunpack.c.l.b16 %v419
        %v464 = vpack.c.b16 %v449, %v448
        %v465 = vpack.c.b16 %v451, %v450
        %v466 = vpack.c.b16 %v453, %v452
        %v467 = vpack.c.b16 %v455, %v454
        %v468 = vpack.c.b16 %v457, %v456
        %v469 = vpack.c.b16 %v459, %v458
        %v470 = vpack.c.b16 %v461, %v460
        %v471 = vpack.c.b16 %v463, %v462
        %480 = vmatprep.subr.bf16.mxu0 0
        %481 = vmatpush1.bf16.msra.mxu0 %v464
        %482 = vmatprep.subr.bf16.mxu0 0
        %483 = vmatpush1.bf16.msra.mxu0 %v465
        %484 = vmatprep.subr.bf16.mxu0 0
        %485 = vmatpush1.bf16.msra.mxu0 %v466
        %486 = vmatprep.subr.bf16.mxu0 0
        %487 = vmatpush1.bf16.msra.mxu0 %v467
        %488 = vmatprep.subr.bf16.mxu0 0
        %489 = vmatpush1.bf16.msra.mxu0 %v468
        %490 = vmatprep.subr.bf16.mxu0 0
        %491 = vmatpush1.bf16.msra.mxu0 %v469
        %492 = vmatprep.subr.bf16.mxu0 0
        %493 = vmatpush1.bf16.msra.mxu0 %v470
        %494 = vmatprep.subr.bf16.mxu0 0
        %495 = vmatpush1.bf16.msra.mxu0 %v471
        %496 = vmatprep.subr.bf16.mxu0 0
        %497 = vmatpush1.bf16.msra.mxu0 0
        %498 = vmatprep.subr.bf16.mxu0 0
        %499 = vmatpush1.bf16.msra.mxu0 0
        %500 = vmatprep.subr.bf16.mxu0 0
        %501 = vmatpush1.bf16.msra.mxu0 0
        %502 = vmatprep.subr.bf16.mxu0 0
        %503 = vmatpush1.bf16.msra.mxu0 0
        %504 = vmatprep.subr.bf16.mxu0 0
        %505 = vmatpush1.bf16.msra.mxu0 0
        %506 = vmatprep.subr.bf16.mxu0 0
        %507 = vmatpush1.bf16.msra.mxu0 0
        %508 = vmatprep.subr.bf16.mxu0 0
        %509 = vmatpush1.bf16.msra.mxu0 0
        %510 = vmatprep.subr.bf16.mxu0 0
        %511 = vmatpush1.bf16.msra.mxu0 0
        %512 = vmatprep.mubr.bf16.mxu0 0
        %513 = vmatmul.mubr.bf16.gmra.mrb[0].mxu0 %v428
        %v514 = vpop.f32.mrb[0].mxu0
        %v515 = vadd.f32 0.0, %v514
        %v516 = vpop.f32.mrb[0].mxu0
        %v517 = vpop.f32.mrb[0].mxu0
        %v518 = vadd.f32 0.0, %v517
        %v519 = vpop.f32.mrb[0].mxu0
        %520 = vmatprep.mubr.bf16.mxu0 0
        %521 = vmatmul.mubr.bf16.gmra.mrb[0].mxu0 %v429
        %v522 = vpop.f32.mrb[0].mxu0
        %v523 = vadd.f32 0.0, %v522
        %v524 = vpop.f32.mrb[0].mxu0
        %v525 = vpop.f32.mrb[0].mxu0
        %v526 = vadd.f32 0.0, %v525
        %v527 = vpop.f32.mrb[0].mxu0
        %528 = vdwg.mxu0
        %v529 = vadd.f32 %v396, %v515
        %v530 = vadd.f32 %v397, %v518
        %v531 = vadd.f32 %v398, %v523
        %v532 = vadd.f32 %v399, %v526
        %533 = vst [vmem:[#allocation2] sm:$0xff] %v529
        %534 = vst [vmem:[#allocation2 + $0x8] sm:$0xff] %v530
        %535 = vst [vmem:[#allocation2 + $0x10] sm:$0xff] %v531
        %536 = vst [vmem:[#allocation2 + $0x18] sm:$0xff] %v532
        %p537 = scmp.eq.s32.totalorder %s23, 12
        // Predicated region
        $region86: #{encoder_forward.5} parent=76 // pred_check
          %p538 = pneg %p537
        $region87: #{encoder_forward.5} parent=76 // pred_check_branch
          %540 = sbr.rel (%p538) target = $region89
        $region88: #{encoder_forward.5} parent=76 // pred_region
          %v541 = vld [vmem:[#allocation2] sm:$0xff]
          %v542 = vld [vmem:[#allocation2 + $0x8] sm:$0xff]
          %v543 = vld [vmem:[#allocation2 + $0x10] sm:$0xff]
          %v544 = vld [vmem:[#allocation2 + $0x18] sm:$0xff]
          %v545 = vld [vmem:[%s371] sm:$0x1]
          %v547 = vlaneseq
          %v548 = vshrl.u32 %v547, 7
          %v549 = vsub.s32 0, %v548
          %v550 = vrot.slane %v545, %v549
          %v552 = vmul.f32 %v541, %v550
          %v553 = vmul.f32 %v542, %v550
          %v554 = vmul.f32 %v543, %v550
          %v555 = vmul.f32 %v544, %v550
          %v556 = vld [vmem:[%s374] sm:$0x1]
          %v558 = vlaneseq
          %v559 = vshrl.u32 %v558, 7
          %v560 = vsub.s32 0, %v559
          %v561 = vrot.slane %v556, %v560
          %v563 = vadd.f32 %v552, %v561
          %v564 = vadd.f32 %v553, %v561
          %v565 = vadd.f32 %v554, %v561
          %v566 = vadd.f32 %v555, %v561
          %vm567 = vcmp.ge.f32.partialorder %v563, 0.0
          %vm568 = vcmp.ge.f32.partialorder %v564, 0.0
          %vm569 = vcmp.ge.f32.partialorder %v565, 0.0
          %vm570 = vcmp.ge.f32.partialorder %v566, 0.0
          %v571 = vld [vmem:[%s377] sm:$0x1]
          %v573 = vlaneseq
          %v574 = vshrl.u32 %v573, 7
          %v575 = vsub.s32 0, %v574
          %v576 = vrot.slane %v571, %v575
          %v578 = vmul.f32 %v563, %v576
          %v579 = vmul.f32 %v564, %v576
          %v580 = vmul.f32 %v565, %v576
          %v581 = vmul.f32 %v566, %v576
          %v582 = vsel %vm567, %v563, %v578
          %v583 = vsel %vm568, %v564, %v579
          %v584 = vsel %vm569, %v565, %v580
          %v585 = vsel %vm570, %v566, %v581
          %586 = vst [vmem:[%s385] sm:$0xff] %v582
          %587 = vst [vmem:[%s385 + $0x8] sm:$0xff] %v583
          %588 = vst [vmem:[%s385 + $0x10] sm:$0xff] %v584
          %589 = vst [vmem:[%s385 + $0x18] sm:$0xff] %v585
        $region89: #{encoder_forward.5} parent=76 // pred_fallthru
          _
        %s590 = smul.u32 4, %s21
        %p591 = scmp.lt.s32.totalorder %s590, 3
        %s592 = scalar_select %p591, %s590, 3
        %p593 = scmp.lt.s32.totalorder %s22, 0
        %s594 = scalar_select %p593, %s22, 0
        %s595 = sadd.s32 %s594, %s592
        %s596 = smul.addr %s595, 8
        %s597 = scalar_lea.vmem %s5, %s596
        // Predicated region
        $region90: #{encoder_forward.5} parent=76 // pred_check
          %p598 = pneg %p189
        $region91: #{encoder_forward.5} parent=76 // pred_check_branch
          %600 = sbr.rel (%p598) target = $region93
        $region92: #{encoder_forward.5} parent=76 // pred_region
          %s601 = smul.u32 4, %s21
        $region93: #{encoder_forward.5} parent=76 // pred_fallthru
          _
        // Predicated region
        $region94: #{encoder_forward.5} parent=76 // pred_check
          %p602 = pneg %p189
        $region95: #{encoder_forward.5} parent=76 // pred_check_branch
          %604 = sbr.rel (%p602) target = $region97
        $region96: #{encoder_forward.5} parent=76 // pred_region
          %s605 = smul.u32 4, %s21
          %p606 = scmp.lt.s32.totalorder %s605, 3
          %s607 = scalar_select %p606, %s605, 3
          %p608 = scmp.lt.s32.totalorder %s22, 0
          %s609 = scalar_select %p608, %s22, 0
          %s610 = sadd.s32 %s609, %s607
          %s611 = smul.addr %s610, 8
          %s612 = scalar_lea.vmem %s5, %s611
        $region97: #{encoder_forward.5} parent=76 // pred_fallthru
          _
      $region77: #{encoder_forward.5} parent=5 // pred_fallthru
        _
      %p613 = scmp.le.s32.totalorder 2, %s11
      // Predicated region
      $region98: #{encoder_forward.5} parent=5 // pred_check
        %p614 = pneg %p613
      $region99: #{encoder_forward.5} parent=5 // pred_check_branch
        %616 = sbr.rel (%p614) target = $region101
      $region100: #{encoder_forward.5} parent=5 // pred_region
        %s617 = ssub.s32 %s11, 2
      $region101: #{encoder_forward.5} parent=5 // pred_fallthru
        _
    $region6: #{encoder_forward.5} parent=1 // loop_footer
      %s15 = sadd.s32 1, %s11
    $region7: #{encoder_forward.5} parent=1 // loop_footer_branch
      %10 = sbr.rel target = $region3
    $region8: #{encoder_forward.5} parent=1 // loop_exit
      _

// kernel: closed_call.42
$region0: #{closed_call.42}
  #allocation0 [shape = 'u32[]', space=smem, size = 0x4, offset = 0x4, fixed_abs, tag = 'smem constant byte address 0x4 - core index']
  #allocation1 [shape = 'u32[144,128]{1,0:T(1,128)}', space=vmem, size = 0x12000, scoped, tag = 'internal scratch']
  #allocation2 [shape = 'f32[32,128]{1,0:T(8,128)}', space=vmem, size = 0x4000, scoped, tag = 'scratch operand']
  %s0 = inlined_call_operand.vmem [shape: bf16[32,1152], index: 0, kind: input, shape index: {}]
  %s1 = inlined_call_operand.vmem [shape: bf16[1152,128], index: 1, kind: input, shape index: {}]
  %s2 = inlined_call_operand.vmem [shape: f32[1,128], index: 2, kind: input, shape index: {}]
  %s3 = inlined_call_operand.vmem [shape: f32[1,128], index: 3, kind: input, shape index: {}]
  %s4 = inlined_call_operand.vmem [shape: f32[1,128], index: 4, kind: input, shape index: {}]
  %s5 = inlined_call_operand.vmem [shape: f32[32,128], index: 5, kind: output, shape index: {}]
  %s6 = sld [smem:[#allocation0]]
  $region102: #{closed_call.42} parent=0
    _
  %s8 = ssub.s32 1, %s6
  %s9 = scalar_select 0, %s8, %s6
  $region1: #{closed_call.42} parent=0
    #allocation3 [shape = 'u8[16384]{0}', space=vmem, size = 0x4000, scoped, tag = 'input window, operand 0']
    loop: start=0, step=1, limit=11
    $region2: #{closed_call.42} parent=1 // loop_pre_header
      _
    $region3: #{closed_call.42} parent=1 // loop_header
      %s11 = sphi 0, %s15
      %p12 = scmp.ge.s32.totalorder %s11, 11
      %s18 = sphi 0, %s37
      %s19 = sphi 0, %s33
      %s20 = sphi 0, %s29
      %s21 = sphi 0, %s18
      %s22 = sphi 0, %s19
      %s23 = sphi 0, %s20
      %s24 = sphi 0, %s21
      %s25 = sphi 0, %s22
      %s26 = sphi 0, %s23
      %s42 = sphi 0, %s44
      %s45 = sphi 0, %s42
      %s46 = sphi 0, %s45
      %s62 = sphi 0, %s46
      %s70 = sphi 0, %s72
      %s73 = sphi 0, %s70
      %s74 = sphi 0, %s73
      %s90 = sphi 0, %s74
      %s96 = sphi 0, %s98
      %s99 = sphi 0, %s96
      %s100 = sphi 0, %s99
      %s116 = sphi 0, %s100
      %s122 = sphi 0, %s124
      %s125 = sphi 0, %s122
      %s126 = sphi 0, %s125
      %s142 = sphi 0, %s126
      %s148 = sphi 0, %s150
      %s151 = sphi 0, %s148
      %s152 = sphi 0, %s151
      %s168 = sphi 0, %s152
      %s176 = sphi 0, %s178
      %s179 = sphi 0, %s176
      %s180 = sphi 0, %s179
      %s196 = sphi 0, %s180
    $region4: #{closed_call.42} parent=1 // loop_header_branch
      %14 = sbr.rel (%p12) target = $region8
    $region5: #{closed_call.42} parent=1 // loop_body
      %s16 = ssub.s32 %s11, 1
      %s17 = ssub.s32 %s11, 2
      %s27 = sadd.s32 1, %s20
      %p28 = scmp.ge.s32.totalorder %s27, 9
      %s29 = scalar_select %p28, 0, %s27
      %s30 = sadd.s32 1, %s19
      %s31 = scalar_select %p28, %s30, %s19
      %p32 = scmp.ge.s32.totalorder %s31, 1
      %s33 = scalar_select %p32, 0, %s31
      %s34 = sadd.s32 1, %s18
      %s35 = scalar_select %p32, %s34, %s18
      %p36 = scmp.ge.s32.totalorder %s35, 1
      %s37 = scalar_select %p36, 0, %s35
      %s38 = ssub.s32 %s18, %s37
      %s39 = ssub.s32 %s20, %s29
      %s40 = sor.u32 %s38, %s39
      %p41 = scmp.eq.s32.totalorder %s40, 0
      %s43 = sadd.s32 %s42, 1
      %s44 = scalar_select %p41, %s42, %s43
      %p47 = pneg %p41
      %p48 = scmp.eq.s32.totalorder %s11, 8
      %p49 = por %p47, %p48
      %p50 = scmp.ne.s32.totalorder %s42, %s45
      %p51 = scmp.eq.s32.totalorder %s11, 0
      %p52 = por %p50, %p51
      %p53 = scmp.ne.s32.totalorder %s42, %s45
      %p54 = scmp.eq.s32.totalorder %s16, 8
      %p55 = por %p53, %p54
      %p56 = scmp.ne.s32.totalorder %s45, %s46
      %p57 = scmp.eq.s32.totalorder %s16, 0
      %p58 = por %p56, %p57
      %p59 = scmp.ne.s32.totalorder %s45, %s46
      %p60 = scmp.eq.s32.totalorder %s17, 8
      %p61 = por %p59, %p60
      %p63 = scmp.ne.s32.totalorder %s46, %s62
      %p64 = scmp.eq.s32.totalorder %s17, 0
      %p65 = por %p63, %p64
      %s66 = ssub.s32 %s20, %s29
      %s67 = ssub.s32 %s19, %s33
      %s68 = sor.u32 %s66, %s67
      %p69 = scmp.eq.s32.totalorder %s68, 0
      %s71 = sadd.s32 %s70, 1
      %s72 = scalar_select %p69, %s70, %s71
      %p75 = pneg %p69
      %p76 = scmp.eq.s32.totalorder %s11, 8
      %p77 = por %p75, %p76
      %p78 = scmp.ne.s32.totalorder %s70, %s73
      %p79 = scmp.eq.s32.totalorder %s11, 0
      %p80 = por %p78, %p79
      %p81 = scmp.ne.s32.totalorder %s70, %s73
      %p82 = scmp.eq.s32.totalorder %s16, 8
      %p83 = por %p81, %p82
      %p84 = scmp.ne.s32.totalorder %s73, %s74
      %p85 = scmp.eq.s32.totalorder %s16, 0
      %p86 = por %p84, %p85
      %p87 = scmp.ne.s32.totalorder %s73, %s74
      %p88 = scmp.eq.s32.totalorder %s17, 8
      %p89 = por %p87, %p88
      %p91 = scmp.ne.s32.totalorder %s74, %s90
      %p92 = scmp.eq.s32.totalorder %s17, 0
      %p93 = por %p91, %p92
      %s94 = ssub.s32 %s19, %s33
      %p95 = scmp.eq.s32.totalorder %s94, 0
      %s97 = sadd.s32 %s96, 1
      %s98 = scalar_select %p95, %s96, %s97
      %p101 = pneg %p95
      %p102 = scmp.eq.s32.totalorder %s11, 8
      %p103 = por %p101, %p102
      %p104 = scmp.ne.s32.totalorder %s96, %s99
      %p105 = scmp.eq.s32.totalorder %s11, 0
      %p106 = por %p104, %p105
      %p107 = scmp.ne.s32.totalorder %s96, %s99
      %p108 = scmp.eq.s32.totalorder %s16, 8
      %p109 = por %p107, %p108
      %p110 = scmp.ne.s32.totalorder %s99, %s100
      %p111 = scmp.eq.s32.totalorder %s16, 0
      %p112 = por %p110, %p111
      %p113 = scmp.ne.s32.totalorder %s99, %s100
      %p114 = scmp.eq.s32.totalorder %s17, 8
      %p115 = por %p113, %p114
      %p117 = scmp.ne.s32.totalorder %s100, %s116
      %p118 = scmp.eq.s32.totalorder %s17, 0
      %p119 = por %p117, %p118
      %s120 = ssub.s32 %s19, %s33
      %p121 = scmp.eq.s32.totalorder %s120, 0
      %s123 = sadd.s32 %s122, 1
      %s124 = scalar_select %p121, %s122, %s123
      %p127 = pneg %p121
      %p128 = scmp.eq.s32.totalorder %s11, 8
      %p129 = por %p127, %p128
      %p130 = scmp.ne.s32.totalorder %s122, %s125
      %p131 = scmp.eq.s32.totalorder %s11, 0
      %p132 = por %p130, %p131
      %p133 = scmp.ne.s32.totalorder %s122, %s125
      %p134 = scmp.eq.s32.totalorder %s16, 8
      %p135 = por %p133, %p134
      %p136 = scmp.ne.s32.totalorder %s125, %s126
      %p137 = scmp.eq.s32.totalorder %s16, 0
      %p138 = por %p136, %p137
      %p139 = scmp.ne.s32.totalorder %s125, %s126
      %p140 = scmp.eq.s32.totalorder %s17, 8
      %p141 = por %p139, %p140
      %p143 = scmp.ne.s32.totalorder %s126, %s142
      %p144 = scmp.eq.s32.totalorder %s17, 0
      %p145 = por %p143, %p144
      %s146 = ssub.s32 %s19, %s33
      %p147 = scmp.eq.s32.totalorder %s146, 0
      %s149 = sadd.s32 %s148, 1
      %s150 = scalar_select %p147, %s148, %s149
      %p153 = pneg %p147
      %p154 = scmp.eq.s32.totalorder %s11, 8
      %p155 = por %p153, %p154
      %p156 = scmp.ne.s32.totalorder %s148, %s151
      %p157 = scmp.eq.s32.totalorder %s11, 0
      %p158 = por %p156, %p157
      %p159 = scmp.ne.s32.totalorder %s148, %s151
      %p160 = scmp.eq.s32.totalorder %s16, 8
      %p161 = por %p159, %p160
      %p162 = scmp.ne.s32.totalorder %s151, %s152
      %p163 = scmp.eq.s32.totalorder %s16, 0
      %p164 = por %p162, %p163
      %p165 = scmp.ne.s32.totalorder %s151, %s152
      %p166 = scmp.eq.s32.totalorder %s17, 8
      %p167 = por %p165, %p166
      %p169 = scmp.ne.s32.totalorder %s152, %s168
      %p170 = scmp.eq.s32.totalorder %s17, 0
      %p171 = por %p169, %p170
      %s172 = ssub.s32 %s18, %s37
      %s173 = ssub.s32 %s19, %s33
      %s174 = sor.u32 %s172, %s173
      %p175 = scmp.eq.s32.totalorder %s174, 0
      %s177 = sadd.s32 %s176, 1
      %s178 = scalar_select %p175, %s176, %s177
      %p181 = pneg %p175
      %p182 = scmp.eq.s32.totalorder %s11, 8
      %p183 = por %p181, %p182
      %p184 = scmp.ne.s32.totalorder %s176, %s179
      %p185 = scmp.eq.s32.totalorder %s11, 0
      %p186 = por %p184, %p185
      %p187 = scmp.ne.s32.totalorder %s176, %s179
      %p188 = scmp.eq.s32.totalorder %s16, 8
      %p189 = por %p187, %p188
      %p190 = scmp.ne.s32.totalorder %s179, %s180
      %p191 = scmp.eq.s32.totalorder %s16, 0
      %p192 = por %p190, %p191
      %p193 = scmp.ne.s32.totalorder %s179, %s180
      %p194 = scmp.eq.s32.totalorder %s17, 8
      %p195 = por %p193, %p194
      %p197 = scmp.ne.s32.totalorder %s180, %s196
      %p198 = scmp.eq.s32.totalorder %s17, 0
      %p199 = por %p197, %p198
      %p200 = scmp.le.s32.totalorder 1, %s11
      %p201 = scmp.lt.s32.totalorder %s11, 10
      %p202 = pnand %p200, %p201
      %p203 = pneg %p202
      // Predicated region
      $region9: #{closed_call.42} parent=5 // pred_check
        _
      $region10: #{closed_call.42} parent=5 // pred_check_branch
        %205 = sbr.rel (%p202) target = $region12
      $region11: #{closed_call.42} parent=5 // pred_region
        %s206 = ssub.s32 %s11, 1
        // Predicated region
        $region13: #{closed_call.42} parent=11 // pred_check
          %p207 = pneg %p112
        $region14: #{closed_call.42} parent=11 // pred_check_branch
          %209 = sbr.rel (%p207) target = $region16
        $region15: #{closed_call.42} parent=11 // pred_region
          %p210 = scmp.lt.s32.totalorder %s22, 0
          %s211 = scalar_select %p210, %s22, 0
          %s212 = scalar_lea.vmem %s2, %s211
        $region16: #{closed_call.42} parent=11 // pred_fallthru
          _
        // Predicated region
        $region17: #{closed_call.42} parent=11 // pred_check
          %p213 = pneg %p138
        $region18: #{closed_call.42} parent=11 // pred_check_branch
          %215 = sbr.rel (%p213) target = $region20
        $region19: #{closed_call.42} parent=11 // pred_region
          %p216 = scmp.lt.s32.totalorder %s22, 0
          %s217 = scalar_select %p216, %s22, 0
          %s218 = scalar_lea.vmem %s3, %s217
        $region20: #{closed_call.42} parent=11 // pred_fallthru
          _
        // Predicated region
        $region21: #{closed_call.42} parent=11 // pred_check
          %p219 = pneg %p164
        $region22: #{closed_call.42} parent=11 // pred_check_branch
          %221 = sbr.rel (%p219) target = $region24
        $region23: #{closed_call.42} parent=11 // pred_region
          %p222 = scmp.lt.s32.totalorder %s22, 0
          %s223 = scalar_select %p222, %s22, 0
          %s224 = scalar_lea.vmem %s4, %s223
        $region24: #{closed_call.42} parent=11 // pred_fallthru
          _
      $region12: #{closed_call.42} parent=5 // pred_fallthru
        _
      %p225 = scmp.lt.s32.totalorder %s11, 9
      // Predicated region
      $region25: #{closed_call.42} parent=5 // pred_check
        %p226 = pneg %p225
      $region26: #{closed_call.42} parent=5 // pred_check_branch
        %228 = sbr.rel (%p226) target = $region28
      $region27: #{closed_call.42} parent=5 // pred_region
        // Predicated region
        $region29: #{closed_call.42} parent=27 // pred_check
          %p229 = pneg %p52
        $region30: #{closed_call.42} parent=27 // pred_check_branch
          %231 = sbr.rel (%p229) target = $region32
        $region31: #{closed_call.42} parent=27 // pred_region
          %s232 = sand.u32 %s42, 1
          %s233 = sand.u32 %s42, 1
          %s234 = smul.addr %s233, 16
          %s235 = scalar_lea.vmem [#allocation3], %s234
          %s236 = smul.u32 4, %s18
          %s237 = smul.addr %s236, 9
          %s238 = sadd.s32 %s20, %s237
          %s239 = smul.addr %s238, 4
          %s240 = scalar_lea.vmem %s0, %s239
          // Predicated region
          $region33: #{closed_call.42} parent=31 // pred_check
            _
          $region34: #{closed_call.42} parent=31 // pred_check_branch
            %242 = sbr.rel (0) target = $region36
          $region35: #{closed_call.42} parent=31 // pred_region
            // Predicated region
            $region37: #{closed_call.42} parent=35 // pred_check
              _
            $region38: #{closed_call.42} parent=35 // pred_check_branch
              %244 = sbr.rel target = $region40
            $region39: #{closed_call.42} parent=35 // pred_region
              // Predicated region
              $region52: #{closed_call.42} parent=39 // pred_check
                _
              $region53: #{closed_call.42} parent=39 // pred_check_branch
                %265 = sbr.rel (0) target = $region55
              $region54: #{closed_call.42} parent=39 // pred_region
                loop: start=0, step=1, limit=1
                $region56: #{closed_call.42} parent=54 // loop_pre_header
                  _
                $region57: #{closed_call.42} parent=54 // loop_header
                  %s267 = sphi 0, %s271
                  %p268 = scmp.ge.s32.totalorder %s267, 1
                  %s272 = sphi %s240, %s240
                  %s273 = sphi %s235, %s235
                $region58: #{closed_call.42} parent=54 // loop_header_branch
                  %270 = sbr.rel (%p268) target = $region62
                $region59: #{closed_call.42} parent=54 // loop_body
                  _
                $region60: #{closed_call.42} parent=54 // loop_footer
                  %s271 = sadd.s32 1, %s267
                $region61: #{closed_call.42} parent=54 // loop_footer_branch
                  %266 = sbr.rel target = $region57
                $region62: #{closed_call.42} parent=54 // loop_exit
                  _
                loop: start=0, step=1, limit=1
                $region63: #{closed_call.42} parent=54 // loop_pre_header
                  _
                $region64: #{closed_call.42} parent=54 // loop_header
                  %s276 = sphi 0, %s280
                  %p277 = scmp.ge.s32.totalorder %s276, 1
                  %s281 = sphi %s240, %s240
                  %s282 = sphi %s235, %s235
                $region65: #{closed_call.42} parent=54 // loop_header_branch
                  %279 = sbr.rel (%p277) target = $region69
                $region66: #{closed_call.42} parent=54 // loop_body
                  %v283 = vld [vmem:[%s281] sm:$0xf]
                  %284 = vst [vmem:[%s282] sm:$0xf] %v283
                  %v285 = vld [vmem:[%s281 + $0x24] sm:$0xf]
                  %286 = vst [vmem:[%s282 + $0x4] sm:$0xf] %v285
                  %v287 = vld [vmem:[%s281 + $0x48] sm:$0xf]
                  %288 = vst [vmem:[%s282 + $0x8] sm:$0xf] %v287
                  %v289 = vld [vmem:[%s281 + $0x6c] sm:$0xf]
                  %290 = vst [vmem:[%s282 + $0xc] sm:$0xf] %v289
                $region67: #{closed_call.42} parent=54 // loop_footer
                  %s280 = sadd.s32 1, %s276
                $region68: #{closed_call.42} parent=54 // loop_footer_branch
                  %275 = sbr.rel target = $region64
                $region69: #{closed_call.42} parent=54 // loop_exit
                  _
              $region55: #{closed_call.42} parent=39 // pred_fallthru
                _
            $region40: #{closed_call.42} parent=35 // pred_fallthru
              _
            // Predicated region
            $region41: #{closed_call.42} parent=35 // pred_check
              _
            $region42: #{closed_call.42} parent=35 // pred_check_branch
              %246 = sbr.rel (0) target = $region44
            $region43: #{closed_call.42} parent=35 // pred_region
              loop: start=0, step=1, limit=1
              $region45: #{closed_call.42} parent=43 // loop_pre_header
                _
              $region46: #{closed_call.42} parent=43 // loop_header
                %s249 = sphi 0, %s253
                %p250 = scmp.ge.s32.totalorder %s249, 1
                %s254 = sphi %s240, %s240
                %s255 = sphi %s235, %s235
              $region47: #{closed_call.42} parent=43 // loop_header_branch
                %252 = sbr.rel (%p250) target = $region51
              $region48: #{closed_call.42} parent=43 // loop_body
                %v256 = vld [vmem:[%s254] sm:$0xf]
                %257 = vst [vmem:[%s255] sm:$0xf] %v256
                %v258 = vld [vmem:[%s254 + $0x24] sm:$0xf]
                %259 = vst [vmem:[%s255 + $0x4] sm:$0xf] %v258
                %v260 = vld [vmem:[%s254 + $0x48] sm:$0xf]
                %261 = vst [vmem:[%s255 + $0x8] sm:$0xf] %v260
                %v262 = vld [vmem:[%s254 + $0x6c] sm:$0xf]
                %263 = vst [vmem:[%s255 + $0xc] sm:$0xf] %v262
              $region49: #{closed_call.42} parent=43 // loop_footer
                %s253 = sadd.s32 1, %s249
              $region50: #{closed_call.42} parent=43 // loop_footer_branch
                %248 = sbr.rel target = $region46
              $region51: #{closed_call.42} parent=43 // loop_exit
                _
            $region44: #{closed_call.42} parent=35 // pred_fallthru
              _
          $region36: #{closed_call.42} parent=31 // pred_fallthru
            _
          %291 = vnop
        $region32: #{closed_call.42} parent=27 // pred_fallthru
          _
        // Predicated region
        $region70: #{closed_call.42} parent=27 // pred_check
          %p292 = pneg %p80
        $region71: #{closed_call.42} parent=27 // pred_check_branch
          %294 = sbr.rel (%p292) target = $region73
        $region72: #{closed_call.42} parent=27 // pred_region
          %s295 = smul.u32 16, %s20
          %p296 = scmp.lt.s32.totalorder %s295, 143
          %s297 = scalar_select %p296, %s295, 143
          %p298 = scmp.lt.s32.totalorder %s19, 0
          %s299 = scalar_select %p298, %s19, 0
          %s300 = sadd.s32 %s299, %s297
          %s301 = smul.addr %s300, 4
          %s302 = scalar_lea.vmem %s1, %s301
          %s303 = smul.u32 16, %s20
        $region73: #{closed_call.42} parent=27 // pred_fallthru
          _
      $region28: #{closed_call.42} parent=5 // pred_fallthru
        _
      %p304 = scmp.le.s32.totalorder 1, %s11
      %p305 = scmp.lt.s32.totalorder %s11, 10
      %p306 = pnand %p304, %p305
      %p307 = pneg %p306
      // Predicated region
      $region74: #{closed_call.42} parent=5 // pred_check
        _
      $region75: #{closed_call.42} parent=5 // pred_check_branch
        %309 = sbr.rel (%p306) target = $region77
      $region76: #{closed_call.42} parent=5 // pred_region
        %s310 = ssub.s32 %s11, 1
        %s311 = sand.u32 %s45, 1
        %s312 = sand.u32 %s45, 1
        %s313 = smul.addr %s312, 16
        %s314 = scalar_lea.vmem [#allocation3], %s313
        // Predicated region
        $region78: #{closed_call.42} parent=76 // pred_check
          %p315 = pneg %p58
        $region79: #{closed_call.42} parent=76 // pred_check_branch
          %317 = sbr.rel (%p315) target = $region81
        $region80: #{closed_call.42} parent=76 // pred_region
          _
        $region81: #{closed_call.42} parent=76 // pred_fallthru
          _
        %s318 = sand.u32 %s45, 1
        %s319 = sand.u32 %s45, 1
        %s320 = smul.addr %s319, 16
        %s321 = scalar_lea.vmem [#allocation3], %s320
        %p322 = pneg %p58
        %p323 = pneg %p55
        %s324 = smul.u32 16, %s23
        %p325 = scmp.lt.s32.totalorder %s324, 143
        %s326 = scalar_select %p325, %s324, 143
        %p327 = scmp.lt.s32.totalorder %s22, 0
        %s328 = scalar_select %p327, %s22, 0
        %s329 = sadd.s32 %s328, %s326
        %s330 = smul.addr %s329, 4
        %s331 = scalar_lea.vmem %s1, %s330
        %p332 = pneg %p86
        %p333 = pneg %p83
        %p334 = scmp.lt.s32.totalorder %s22, 0
        %s335 = scalar_select %p334, %s22, 0
        %s336 = scalar_lea.vmem %s2, %s335
        %p337 = pneg %p112
        %p338 = pneg %p109
        %p339 = scmp.lt.s32.totalorder %s22, 0
        %s340 = scalar_select %p339, %s22, 0
        %s341 = scalar_lea.vmem %s3, %s340
        %p342 = pneg %p138
        %p343 = pneg %p135
        %p344 = scmp.lt.s32.totalorder %s22, 0
        %s345 = scalar_select %p344, %s22, 0
        %s346 = scalar_lea.vmem %s4, %s345
        %p347 = pneg %p164
        %p348 = pneg %p161
        %p349 = pneg %p192
        %p350 = pneg %p189
        %s351 = smul.u32 4, %s21
        %p352 = scmp.lt.s32.totalorder %s351, 3
        %s353 = scalar_select %p352, %s351, 3
        %p354 = scmp.lt.s32.totalorder %s22, 0
        %s355 = scalar_select %p354, %s22, 0
        %s356 = sadd.s32 %s355, %s353
        %s357 = smul.addr %s356, 8
        %s358 = scalar_lea.vmem %s5, %s357
        %s359 = smul.u32 4, %s21
        %s360 = smul.u32 16, %s23
        %p361 = scmp.lt.s32.totalorder %s360, 143
        %s362 = scalar_select %p361, %s360, 143
        %p363 = scmp.lt.s32.totalorder %s22, 0
        %s364 = scalar_select %p363, %s22, 0
        %s365 = sadd.s32 %s364, %s362
        %s366 = smul.addr %s365, 4
        %s367 = scalar_lea.vmem %s1, %s366
        %s368 = smul.u32 16, %s23
        %p369 = scmp.lt.s32.totalorder %s22, 0
        %s370 = scalar_select %p369, %s22, 0
        %s371 = scalar_lea.vmem %s2, %s370
        %p372 = scmp.lt.s32.totalorder %s22, 0
        %s373 = scalar_select %p372, %s22, 0
        %s374 = scalar_lea.vmem %s3, %s373
        %p375 = scmp.lt.s32.totalorder %s22, 0
        %s376 = scalar_select %p375, %s22, 0
        %s377 = scalar_lea.vmem %s4, %s376
        %s378 = smul.u32 4, %s21
        %p379 = scmp.lt.s32.totalorder %s378, 3
        %s380 = scalar_select %p379, %s378, 3
        %p381 = scmp.lt.s32.totalorder %s22, 0
        %s382 = scalar_select %p381, %s22, 0
        %s383 = sadd.s32 %s382, %s380
        %s384 = smul.addr %s383, 8
        %s385 = scalar_lea.vmem %s5, %s384
        %s386 = smul.u32 4, %s21
        %p388 = scmp.eq.s32.totalorder %s23, 0
        // Predicated region
        $region82: #{closed_call.42} parent=76 // pred_check
          %p389 = pneg %p388
        $region83: #{closed_call.42} parent=76 // pred_check_branch
          %391 = sbr.rel (%p389) target = $region85
        $region84: #{closed_call.42} parent=76 // pred_region
          %392 = vst [vmem:[#allocation2] sm:$0xff] 0.0
          %393 = vst [vmem:[#allocation2 + $0x8] sm:$0xff] 0.0
          %394 = vst [vmem:[#allocation2 + $0x10] sm:$0xff] 0.0
          %395 = vst [vmem:[#allocation2 + $0x18] sm:$0xff] 0.0
        $region85: #{closed_call.42} parent=76 // pred_fallthru
          _
        %v396 = vld [vmem:[#allocation2] sm:$0xff]
        %v397 = vld [vmem:[#allocation2 + $0x8] sm:$0xff]
        %v398 = vld [vmem:[#allocation2 + $0x10] sm:$0xff]
        %v399 = vld [vmem:[#allocation2 + $0x18] sm:$0xff]
        %v400 = vld [vmem:[%s314] sm:$0xf]
        %v401 = vld [vmem:[%s314 + $0x4] sm:$0xf]
        %v402 = vld [vmem:[%s314 + $0x8] sm:$0xf]
        %v403 = vld [vmem:[%s314 + $0xc] sm:$0xf]
        %v404 = vld [vmem:[%s367] sm:$0xf]
        %v405 = vld [vmem:[%s367 + $0x4] sm:$0xf]
        %v406 = vld [vmem:[%s367 + $0x8] sm:$0xf]
        %v407 = vld [vmem:[%s367 + $0xc] sm:$0xf]
        %v408 = vld [vmem:[%s367 + $0x10] sm:$0xf]
        %v409 = vld [vmem:[%s367 + $0x14] sm:$0xf]
        %v410 = vld [vmem:[%s367 + $0x18] sm:$0xf]
        %v411 = vld [vmem:[%s367 + $0x1c] sm:$0xf]
        %v412 = vld [vmem:[%s367 + $0x20] sm:$0xf]
        %v413 = vld [vmem:[%s367 + $0x24] sm:$0xf]
        %v414 = vld [vmem:[%s367 + $0x28] sm:$0xf]
        %v415 = vld [vmem:[%s367 + $0x2c] sm:$0xf]
        %v416 = vld [vmem:[%s367 + $0x30] sm:$0xf]
        %v417 = vld [vmem:[%s367 + $0x34] sm:$0xf]
        %v418 = vld [vmem:[%s367 + $0x38] sm:$0xf]
        %v419 = vld [vmem:[%s367 + $0x3c] sm:$0xf]
        %v424 = vunpack.c.l.b16 %v400
        %v425 = vunpack.c.l.b16 %v401
        %v426 = vunpack.c.l.b16 %v402
        %v427 = vunpack.c.l.b16 %v403
        %v428 = vpack.c.b16 %v425, %v424
        %v429 = vpack.c.b16 %v427, %v426
        %v448 = vunpack.c.l.b16 %v404
        %v449 = vunpack.c.l.b16 %v405
        %v450 = vunpack.c.l.b16 %v406
        %v451 = vunpack.c.l.b16 %v407
        %v452 = vunpack.c.l.b16 %v408
        %v453 = vunpack.c.l.b16 %v409
        %v454 = vunpack.c.l.b16 %v410
        %v455 = vunpack.c.l.b16 %v411
        %v456 = vunpack.c.l.b16 %v412
        %v457 = vunpack.c.l.b16 %v413
        %v458 = vunpack.c.l.b16 %v414
        %v459 = vunpack.c.l.b16 %v415
        %v460 = vunpack.c.l.b16 %v416
        %v461 = vunpack.c.l.b16 %v417
        %v462 = vunpack.c.l.b16 %v418
        %v463 = vunpack.c.l.b16 %v419
        %v464 = vpack.c.b16 %v449, %v448
        %v465 = vpack.c.b16 %v451, %v450
        %v466 = vpack.c.b16 %v453, %v452
        %v467 = vpack.c.b16 %v455, %v454
        %v468 = vpack.c.b16 %v457, %v456
        %v469 = vpack.c.b16 %v459, %v458
        %v470 = vpack.c.b16 %v461, %v460
        %v471 = vpack.c.b16 %v463, %v462
        %480 = vmatprep.subr.bf16.mxu0 0
        %481 = vmatpush1.bf16.msra.mxu0 %v464
        %482 = vmatprep.subr.bf16.mxu0 0
        %483 = vmatpush1.bf16.msra.mxu0 %v465
        %484 = vmatprep.subr.bf16.mxu0 0
        %485 = vmatpush1.bf16.msra.mxu0 %v466
        %486 = vmatprep.subr.bf16.mxu0 0
        %487 = vmatpush1.bf16.msra.mxu0 %v467
        %488 = vmatprep.subr.bf16.mxu0 0
        %489 = vmatpush1.bf16.msra.mxu0 %v468
        %490 = vmatprep.subr.bf16.mxu0 0
        %491 = vmatpush1.bf16.msra.mxu0 %v469
        %492 = vmatprep.subr.bf16.mxu0 0
        %493 = vmatpush1.bf16.msra.mxu0 %v470
        %494 = vmatprep.subr.bf16.mxu0 0
        %495 = vmatpush1.bf16.msra.mxu0 %v471
        %496 = vmatprep.subr.bf16.mxu0 0
        %497 = vmatpush1.bf16.msra.mxu0 0
        %498 = vmatprep.subr.bf16.mxu0 0
        %499 = vmatpush1.bf16.msra.mxu0 0
        %500 = vmatprep.subr.bf16.mxu0 0
        %501 = vmatpush1.bf16.msra.mxu0 0
        %502 = vmatprep.subr.bf16.mxu0 0
        %503 = vmatpush1.bf16.msra.mxu0 0
        %504 = vmatprep.subr.bf16.mxu0 0
        %505 = vmatpush1.bf16.msra.mxu0 0
        %506 = vmatprep.subr.bf16.mxu0 0
        %507 = vmatpush1.bf16.msra.mxu0 0
        %508 = vmatprep.subr.bf16.mxu0 0
        %509 = vmatpush1.bf16.msra.mxu0 0
        %510 = vmatprep.subr.bf16.mxu0 0
        %511 = vmatpush1.bf16.msra.mxu0 0
        %512 = vmatprep.mubr.bf16.mxu0 0
        %513 = vmatmul.mubr.bf16.gmra.mrb[0].mxu0 %v428
        %v514 = vpop.f32.mrb[0].mxu0
        %v515 = vadd.f32 0.0, %v514
        %v516 = vpop.f32.mrb[0].mxu0
        %v517 = vpop.f32.mrb[0].mxu0
        %v518 = vadd.f32 0.0, %v517
        %v519 = vpop.f32.mrb[0].mxu0
        %520 = vmatprep.mubr.bf16.mxu0 0
        %521 = vmatmul.mubr.bf16.gmra.mrb[0].mxu0 %v429
        %v522 = vpop.f32.mrb[0].mxu0
        %v523 = vadd.f32 0.0, %v522
        %v524 = vpop.f32.mrb[0].mxu0
        %v525 = vpop.f32.mrb[0].mxu0
        %v526 = vadd.f32 0.0, %v525
        %v527 = vpop.f32.mrb[0].mxu0
        %528 = vdwg.mxu0
        %v529 = vadd.f32 %v396, %v515
        %v530 = vadd.f32 %v397, %v518
        %v531 = vadd.f32 %v398, %v523
        %v532 = vadd.f32 %v399, %v526
        %533 = vst [vmem:[#allocation2] sm:$0xff] %v529
        %534 = vst [vmem:[#allocation2 + $0x8] sm:$0xff] %v530
        %535 = vst [vmem:[#allocation2 + $0x10] sm:$0xff] %v531
        %536 = vst [vmem:[#allocation2 + $0x18] sm:$0xff] %v532
        %p537 = scmp.eq.s32.totalorder %s23, 8
        // Predicated region
        $region86: #{closed_call.42} parent=76 // pred_check
          %p538 = pneg %p537
        $region87: #{closed_call.42} parent=76 // pred_check_branch
          %540 = sbr.rel (%p538) target = $region89
        $region88: #{closed_call.42} parent=76 // pred_region
          %v541 = vld [vmem:[#allocation2] sm:$0xff]
          %v542 = vld [vmem:[#allocation2 + $0x8] sm:$0xff]
          %v543 = vld [vmem:[#allocation2 + $0x10] sm:$0xff]
          %v544 = vld [vmem:[#allocation2 + $0x18] sm:$0xff]
          %v545 = vld [vmem:[%s371] sm:$0x1]
          %v547 = vlaneseq
          %v548 = vshrl.u32 %v547, 7
          %v549 = vsub.s32 0, %v548
          %v550 = vrot.slane %v545, %v549
          %v552 = vmul.f32 %v541, %v550
          %v553 = vmul.f32 %v542, %v550
          %v554 = vmul.f32 %v543, %v550
          %v555 = vmul.f32 %v544, %v550
          %v556 = vld [vmem:[%s374] sm:$0x1]
          %v558 = vlaneseq
          %v559 = vshrl.u32 %v558, 7
          %v560 = vsub.s32 0, %v559
          %v561 = vrot.slane %v556, %v560
          %v563 = vadd.f32 %v552, %v561
          %v564 = vadd.f32 %v553, %v561
          %v565 = vadd.f32 %v554, %v561
          %v566 = vadd.f32 %v555, %v561
          %vm567 = vcmp.ge.f32.partialorder %v563, 0.0
          %vm568 = vcmp.ge.f32.partialorder %v564, 0.0
          %vm569 = vcmp.ge.f32.partialorder %v565, 0.0
          %vm570 = vcmp.ge.f32.partialorder %v566, 0.0
          %v571 = vld [vmem:[%s377] sm:$0x1]
          %v573 = vlaneseq
          %v574 = vshrl.u32 %v573, 7
          %v575 = vsub.s32 0, %v574
          %v576 = vrot.slane %v571, %v575
          %v578 = vmul.f32 %v563, %v576
          %v579 = vmul.f32 %v564, %v576
          %v580 = vmul.f32 %v565, %v576
          %v581 = vmul.f32 %v566, %v576
          %v582 = vsel %vm567, %v563, %v578
          %v583 = vsel %vm568, %v564, %v579
          %v584 = vsel %vm569, %v565, %v580
          %v585 = vsel %vm570, %v566, %v581
          %586 = vst [vmem:[%s385] sm:$0xff] %v582
          %587 = vst [vmem:[%s385 + $0x8] sm:$0xff] %v583
          %588 = vst [vmem:[%s385 + $0x10] sm:$0xff] %v584
          %589 = vst [vmem:[%s385 + $0x18] sm:$0xff] %v585
        $region89: #{closed_call.42} parent=76 // pred_fallthru
          _
        %s590 = smul.u32 4, %s21
        %p591 = scmp.lt.s32.totalorder %s590, 3
        %s592 = scalar_select %p591, %s590, 3
        %p593 = scmp.lt.s32.totalorder %s22, 0
        %s594 = scalar_select %p593, %s22, 0
        %s595 = sadd.s32 %s594, %s592
        %s596 = smul.addr %s595, 8
        %s597 = scalar_lea.vmem %s5, %s596
        // Predicated region
        $region90: #{closed_call.42} parent=76 // pred_check
          %p598 = pneg %p189
        $region91: #{closed_call.42} parent=76 // pred_check_branch
          %600 = sbr.rel (%p598) target = $region93
        $region92: #{closed_call.42} parent=76 // pred_region
          %s601 = smul.u32 4, %s21
        $region93: #{closed_call.42} parent=76 // pred_fallthru
          _
        // Predicated region
        $region94: #{closed_call.42} parent=76 // pred_check
          %p602 = pneg %p189
        $region95: #{closed_call.42} parent=76 // pred_check_branch
          %604 = sbr.rel (%p602) target = $region97
        $region96: #{closed_call.42} parent=76 // pred_region
          %s605 = smul.u32 4, %s21
          %p606 = scmp.lt.s32.totalorder %s605, 3
          %s607 = scalar_select %p606, %s605, 3
          %p608 = scmp.lt.s32.totalorder %s22, 0
          %s609 = scalar_select %p608, %s22, 0
          %s610 = sadd.s32 %s609, %s607
          %s611 = smul.addr %s610, 8
          %s612 = scalar_lea.vmem %s5, %s611
        $region97: #{closed_call.42} parent=76 // pred_fallthru
          _
      $region77: #{closed_call.42} parent=5 // pred_fallthru
        _
      %p613 = scmp.le.s32.totalorder 2, %s11
      // Predicated region
      $region98: #{closed_call.42} parent=5 // pred_check
        %p614 = pneg %p613
      $region99: #{closed_call.42} parent=5 // pred_check_branch
        %616 = sbr.rel (%p614) target = $region101
      $region100: #{closed_call.42} parent=5 // pred_region
        %s617 = ssub.s32 %s11, 2
      $region101: #{closed_call.42} parent=5 // pred_fallthru
        _
    $region6: #{closed_call.42} parent=1 // loop_footer
      %s15 = sadd.s32 1, %s11
    $region7: #{closed_call.42} parent=1 // loop_footer_branch
      %10 = sbr.rel target = $region3
    $region8: #{closed_call.42} parent=1 // loop_exit
      _

// kernel: closed_call.48
$region0: #{closed_call.48}
  #allocation0 [shape = 'u32[]', space=smem, size = 0x4, offset = 0x4, fixed_abs, tag = 'smem constant byte address 0x4 - core index']
  #allocation1 [shape = 'u32[144,128]{1,0:T(1,128)}', space=vmem, size = 0x12000, scoped, tag = 'internal scratch']
  %s0 = inlined_call_operand.vmem [shape: f32[32,128], index: 0, kind: input, shape index: {}]
  %s1 = inlined_call_operand.vmem [shape: f32[32,128], index: 1, kind: input, shape index: {}]
  %s2 = inlined_call_operand.vmem [shape: f32[32,128], index: 2, kind: output, shape index: {}]
  %s3 = sld [smem:[#allocation0]]
  $region18: #{closed_call.48} parent=0
    _
  %s5 = ssub.s32 1, %s3
  %s6 = scalar_select 0, %s5, %s3
  // Predicated region
  $region2: #{closed_call.48} parent=0 // pred_check
    _
  $region3: #{closed_call.48} parent=0 // pred_check_branch
    %8 = sbr.rel (0) target = $region5
  $region4: #{closed_call.48} parent=0 // pred_region
    _
  $region5: #{closed_call.48} parent=0 // pred_fallthru
    _
  // Predicated region
  $region6: #{closed_call.48} parent=0 // pred_check
    _
  $region7: #{closed_call.48} parent=0 // pred_check_branch
    %10 = sbr.rel (0) target = $region9
  $region8: #{closed_call.48} parent=0 // pred_region
    _
  $region9: #{closed_call.48} parent=0 // pred_fallthru
    _
  %v11 = vld [vmem:[%s0] sm:$0xff]
  %v12 = vld [vmem:[%s0 + $0x8] sm:$0xff]
  %v13 = vld [vmem:[%s0 + $0x10] sm:$0xff]
  %v14 = vld [vmem:[%s0 + $0x18] sm:$0xff]
  %v15 = vld [vmem:[%s1] sm:$0xff]
  %v16 = vld [vmem:[%s1 + $0x8] sm:$0xff]
  %v17 = vld [vmem:[%s1 + $0x10] sm:$0xff]
  %v18 = vld [vmem:[%s1 + $0x18] sm:$0xff]
  %v19 = vadd.f32 %v11, %v15
  %v20 = vadd.f32 %v12, %v16
  %v21 = vadd.f32 %v13, %v17
  %v22 = vadd.f32 %v14, %v18
  %23 = vst [vmem:[%s2] sm:$0xff] %v19
  %24 = vst [vmem:[%s2 + $0x8] sm:$0xff] %v20
  %25 = vst [vmem:[%s2 + $0x10] sm:$0xff] %v21
  %26 = vst [vmem:[%s2 + $0x18] sm:$0xff] %v22
  // Predicated region
  $region10: #{closed_call.48} parent=0 // pred_check
    _
  $region11: #{closed_call.48} parent=0 // pred_check_branch
    %28 = sbr.rel (0) target = $region13
  $region12: #{closed_call.48} parent=0 // pred_region
    _
  $region13: #{closed_call.48} parent=0 // pred_fallthru
    _
  // Predicated region
  $region14: #{closed_call.48} parent=0 // pred_check
    _
  $region15: #{closed_call.48} parent=0 // pred_check_branch
    %30 = sbr.rel (0) target = $region17
  $region16: #{closed_call.48} parent=0 // pred_region
    _
  $region17: #{closed_call.48} parent=0 // pred_fallthru
    _

// kernel: closed_call.43
$region0: #{closed_call.43}
  #allocation0 [shape = 'u32[]', space=smem, size = 0x4, offset = 0x4, fixed_abs, tag = 'smem constant byte address 0x4 - core index']
  #allocation1 [shape = 'u32[144,128]{1,0:T(1,128)}', space=vmem, size = 0x12000, scoped, tag = 'internal scratch']
  #allocation2 [shape = 'f32[32,128]{1,0:T(8,128)}', space=vmem, size = 0x4000, scoped, tag = 'scratch operand']
  %s0 = inlined_call_operand.vmem [shape: bf16[32,1152], index: 0, kind: input, shape index: {}]
  %s1 = inlined_call_operand.vmem [shape: bf16[1152,128], index: 1, kind: input, shape index: {}]
  %s2 = inlined_call_operand.vmem [shape: f32[1,128], index: 2, kind: input, shape index: {}]
  %s3 = inlined_call_operand.vmem [shape: f32[1,128], index: 3, kind: input, shape index: {}]
  %s4 = inlined_call_operand.vmem [shape: f32[1,128], index: 4, kind: input, shape index: {}]
  %s5 = inlined_call_operand.vmem [shape: f32[32,128], index: 5, kind: input, shape index: {}]
  %s6 = inlined_call_operand.vmem [shape: f32[32,128], index: 6, kind: output, shape index: {}]
  %s7 = sld [smem:[#allocation0]]
  $region106: #{closed_call.43} parent=0
    _
  %s9 = ssub.s32 1, %s7
  %s10 = scalar_select 0, %s9, %s7
  $region1: #{closed_call.43} parent=0
    #allocation3 [shape = 'u8[16384]{0}', space=vmem, size = 0x4000, scoped, tag = 'input window, operand 0']
    loop: start=0, step=1, limit=11
    $region2: #{closed_call.43} parent=1 // loop_pre_header
      _
    $region3: #{closed_call.43} parent=1 // loop_header
      %s12 = sphi 0, %s16
      %p13 = scmp.ge.s32.totalorder %s12, 11
      %s19 = sphi 0, %s38
      %s20 = sphi 0, %s34
      %s21 = sphi 0, %s30
      %s22 = sphi 0, %s19
      %s23 = sphi 0, %s20
      %s24 = sphi 0, %s21
      %s25 = sphi 0, %s22
      %s26 = sphi 0, %s23
      %s27 = sphi 0, %s24
      %s43 = sphi 0, %s45
      %s46 = sphi 0, %s43
      %s47 = sphi 0, %s46
      %s63 = sphi 0, %s47
      %s71 = sphi 0, %s73
      %s74 = sphi 0, %s71
      %s75 = sphi 0, %s74
      %s91 = sphi 0, %s75
      %s97 = sphi 0, %s99
      %s100 = sphi 0, %s97
      %s101 = sphi 0, %s100
      %s117 = sphi 0, %s101
      %s123 = sphi 0, %s125
      %s126 = sphi 0, %s123
      %s127 = sphi 0, %s126
      %s143 = sphi 0, %s127
      %s149 = sphi 0, %s151
      %s152 = sphi 0, %s149
      %s153 = sphi 0, %s152
      %s169 = sphi 0, %s153
      %s177 = sphi 0, %s179
      %s180 = sphi 0, %s177
      %s181 = sphi 0, %s180
      %s197 = sphi 0, %s181
      %s205 = sphi 0, %s207
      %s208 = sphi 0, %s205
      %s209 = sphi 0, %s208
      %s225 = sphi 0, %s209
    $region4: #{closed_call.43} parent=1 // loop_header_branch
      %15 = sbr.rel (%p13) target = $region8
    $region5: #{closed_call.43} parent=1 // loop_body
      %s17 = ssub.s32 %s12, 1
      %s18 = ssub.s32 %s12, 2
      %s28 = sadd.s32 1, %s21
      %p29 = scmp.ge.s32.totalorder %s28, 9
      %s30 = scalar_select %p29, 0, %s28
      %s31 = sadd.s32 1, %s20
      %s32 = scalar_select %p29, %s31, %s20
      %p33 = scmp.ge.s32.totalorder %s32, 1
      %s34 = scalar_select %p33, 0, %s32
      %s35 = sadd.s32 1, %s19
      %s36 = scalar_select %p33, %s35, %s19
      %p37 = scmp.ge.s32.totalorder %s36, 1
      %s38 = scalar_select %p37, 0, %s36
      %s39 = ssub.s32 %s19, %s38
      %s40 = ssub.s32 %s21, %s30
      %s41 = sor.u32 %s39, %s40
      %p42 = scmp.eq.s32.totalorder %s41, 0
      %s44 = sadd.s32 %s43, 1
      %s45 = scalar_select %p42, %s43, %s44
      %p48 = pneg %p42
      %p49 = scmp.eq.s32.totalorder %s12, 8
      %p50 = por %p48, %p49
      %p51 = scmp.ne.s32.totalorder %s43, %s46
      %p52 = scmp.eq.s32.totalorder %s12, 0
      %p53 = por %p51, %p52
      %p54 = scmp.ne.s32.totalorder %s43, %s46
      %p55 = scmp.eq.s32.totalorder %s17, 8
      %p56 = por %p54, %p55
      %p57 = scmp.ne.s32.totalorder %s46, %s47
      %p58 = scmp.eq.s32.totalorder %s17, 0
      %p59 = por %p57, %p58
      %p60 = scmp.ne.s32.totalorder %s46, %s47
      %p61 = scmp.eq.s32.totalorder %s18, 8
      %p62 = por %p60, %p61
      %p64 = scmp.ne.s32.totalorder %s47, %s63
      %p65 = scmp.eq.s32.totalorder %s18, 0
      %p66 = por %p64, %p65
      %s67 = ssub.s32 %s21, %s30
      %s68 = ssub.s32 %s20, %s34
      %s69 = sor.u32 %s67, %s68
      %p70 = scmp.eq.s32.totalorder %s69, 0
      %s72 = sadd.s32 %s71, 1
      %s73 = scalar_select %p70, %s71, %s72
      %p76 = pneg %p70
      %p77 = scmp.eq.s32.totalorder %s12, 8
      %p78 = por %p76, %p77
      %p79 = scmp.ne.s32.totalorder %s71, %s74
      %p80 = scmp.eq.s32.totalorder %s12, 0
      %p81 = por %p79, %p80
      %p82 = scmp.ne.s32.totalorder %s71, %s74
      %p83 = scmp.eq.s32.totalorder %s17, 8
      %p84 = por %p82, %p83
      %p85 = scmp.ne.s32.totalorder %s74, %s75
      %p86 = scmp.eq.s32.totalorder %s17, 0
      %p87 = por %p85, %p86
      %p88 = scmp.ne.s32.totalorder %s74, %s75
      %p89 = scmp.eq.s32.totalorder %s18, 8
      %p90 = por %p88, %p89
      %p92 = scmp.ne.s32.totalorder %s75, %s91
      %p93 = scmp.eq.s32.totalorder %s18, 0
      %p94 = por %p92, %p93
      %s95 = ssub.s32 %s20, %s34
      %p96 = scmp.eq.s32.totalorder %s95, 0
      %s98 = sadd.s32 %s97, 1
      %s99 = scalar_select %p96, %s97, %s98
      %p102 = pneg %p96
      %p103 = scmp.eq.s32.totalorder %s12, 8
      %p104 = por %p102, %p103
      %p105 = scmp.ne.s32.totalorder %s97, %s100
      %p106 = scmp.eq.s32.totalorder %s12, 0
      %p107 = por %p105, %p106
      %p108 = scmp.ne.s32.totalorder %s97, %s100
      %p109 = scmp.eq.s32.totalorder %s17, 8
      %p110 = por %p108, %p109
      %p111 = scmp.ne.s32.totalorder %s100, %s101
      %p112 = scmp.eq.s32.totalorder %s17, 0
      %p113 = por %p111, %p112
      %p114 = scmp.ne.s32.totalorder %s100, %s101
      %p115 = scmp.eq.s32.totalorder %s18, 8
      %p116 = por %p114, %p115
      %p118 = scmp.ne.s32.totalorder %s101, %s117
      %p119 = scmp.eq.s32.totalorder %s18, 0
      %p120 = por %p118, %p119
      %s121 = ssub.s32 %s20, %s34
      %p122 = scmp.eq.s32.totalorder %s121, 0
      %s124 = sadd.s32 %s123, 1
      %s125 = scalar_select %p122, %s123, %s124
      %p128 = pneg %p122
      %p129 = scmp.eq.s32.totalorder %s12, 8
      %p130 = por %p128, %p129
      %p131 = scmp.ne.s32.totalorder %s123, %s126
      %p132 = scmp.eq.s32.totalorder %s12, 0
      %p133 = por %p131, %p132
      %p134 = scmp.ne.s32.totalorder %s123, %s126
      %p135 = scmp.eq.s32.totalorder %s17, 8
      %p136 = por %p134, %p135
      %p137 = scmp.ne.s32.totalorder %s126, %s127
      %p138 = scmp.eq.s32.totalorder %s17, 0
      %p139 = por %p137, %p138
      %p140 = scmp.ne.s32.totalorder %s126, %s127
      %p141 = scmp.eq.s32.totalorder %s18, 8
      %p142 = por %p140, %p141
      %p144 = scmp.ne.s32.totalorder %s127, %s143
      %p145 = scmp.eq.s32.totalorder %s18, 0
      %p146 = por %p144, %p145
      %s147 = ssub.s32 %s20, %s34
      %p148 = scmp.eq.s32.totalorder %s147, 0
      %s150 = sadd.s32 %s149, 1
      %s151 = scalar_select %p148, %s149, %s150
      %p154 = pneg %p148
      %p155 = scmp.eq.s32.totalorder %s12, 8
      %p156 = por %p154, %p155
      %p157 = scmp.ne.s32.totalorder %s149, %s152
      %p158 = scmp.eq.s32.totalorder %s12, 0
      %p159 = por %p157, %p158
      %p160 = scmp.ne.s32.totalorder %s149, %s152
      %p161 = scmp.eq.s32.totalorder %s17, 8
      %p162 = por %p160, %p161
      %p163 = scmp.ne.s32.totalorder %s152, %s153
      %p164 = scmp.eq.s32.totalorder %s17, 0
      %p165 = por %p163, %p164
      %p166 = scmp.ne.s32.totalorder %s152, %s153
      %p167 = scmp.eq.s32.totalorder %s18, 8
      %p168 = por %p166, %p167
      %p170 = scmp.ne.s32.totalorder %s153, %s169
      %p171 = scmp.eq.s32.totalorder %s18, 0
      %p172 = por %p170, %p171
      %s173 = ssub.s32 %s19, %s38
      %s174 = ssub.s32 %s20, %s34
      %s175 = sor.u32 %s173, %s174
      %p176 = scmp.eq.s32.totalorder %s175, 0
      %s178 = sadd.s32 %s177, 1
      %s179 = scalar_select %p176, %s177, %s178
      %p182 = pneg %p176
      %p183 = scmp.eq.s32.totalorder %s12, 8
      %p184 = por %p182, %p183
      %p185 = scmp.ne.s32.totalorder %s177, %s180
      %p186 = scmp.eq.s32.totalorder %s12, 0
      %p187 = por %p185, %p186
      %p188 = scmp.ne.s32.totalorder %s177, %s180
      %p189 = scmp.eq.s32.totalorder %s17, 8
      %p190 = por %p188, %p189
      %p191 = scmp.ne.s32.totalorder %s180, %s181
      %p192 = scmp.eq.s32.totalorder %s17, 0
      %p193 = por %p191, %p192
      %p194 = scmp.ne.s32.totalorder %s180, %s181
      %p195 = scmp.eq.s32.totalorder %s18, 8
      %p196 = por %p194, %p195
      %p198 = scmp.ne.s32.totalorder %s181, %s197
      %p199 = scmp.eq.s32.totalorder %s18, 0
      %p200 = por %p198, %p199
      %s201 = ssub.s32 %s19, %s38
      %s202 = ssub.s32 %s20, %s34
      %s203 = sor.u32 %s201, %s202
      %p204 = scmp.eq.s32.totalorder %s203, 0
      %s206 = sadd.s32 %s205, 1
      %s207 = scalar_select %p204, %s205, %s206
      %p210 = pneg %p204
      %p211 = scmp.eq.s32.totalorder %s12, 8
      %p212 = por %p210, %p211
      %p213 = scmp.ne.s32.totalorder %s205, %s208
      %p214 = scmp.eq.s32.totalorder %s12, 0
      %p215 = por %p213, %p214
      %p216 = scmp.ne.s32.totalorder %s205, %s208
      %p217 = scmp.eq.s32.totalorder %s17, 8
      %p218 = por %p216, %p217
      %p219 = scmp.ne.s32.totalorder %s208, %s209
      %p220 = scmp.eq.s32.totalorder %s17, 0
      %p221 = por %p219, %p220
      %p222 = scmp.ne.s32.totalorder %s208, %s209
      %p223 = scmp.eq.s32.totalorder %s18, 8
      %p224 = por %p222, %p223
      %p226 = scmp.ne.s32.totalorder %s209, %s225
      %p227 = scmp.eq.s32.totalorder %s18, 0
      %p228 = por %p226, %p227
      %p229 = scmp.le.s32.totalorder 1, %s12
      %p230 = scmp.lt.s32.totalorder %s12, 10
      %p231 = pnand %p229, %p230
      %p232 = pneg %p231
      // Predicated region
      $region9: #{closed_call.43} parent=5 // pred_check
        _
      $region10: #{closed_call.43} parent=5 // pred_check_branch
        %234 = sbr.rel (%p231) target = $region12
      $region11: #{closed_call.43} parent=5 // pred_region
        %s235 = ssub.s32 %s12, 1
        // Predicated region
        $region13: #{closed_call.43} parent=11 // pred_check
          %p236 = pneg %p113
        $region14: #{closed_call.43} parent=11 // pred_check_branch
          %238 = sbr.rel (%p236) target = $region16
        $region15: #{closed_call.43} parent=11 // pred_region
          %p239 = scmp.lt.s32.totalorder %s23, 0
          %s240 = scalar_select %p239, %s23, 0
          %s241 = scalar_lea.vmem %s2, %s240
        $region16: #{closed_call.43} parent=11 // pred_fallthru
          _
        // Predicated region
        $region17: #{closed_call.43} parent=11 // pred_check
          %p242 = pneg %p139
        $region18: #{closed_call.43} parent=11 // pred_check_branch
          %244 = sbr.rel (%p242) target = $region20
        $region19: #{closed_call.43} parent=11 // pred_region
          %p245 = scmp.lt.s32.totalorder %s23, 0
          %s246 = scalar_select %p245, %s23, 0
          %s247 = scalar_lea.vmem %s3, %s246
        $region20: #{closed_call.43} parent=11 // pred_fallthru
          _
        // Predicated region
        $region21: #{closed_call.43} parent=11 // pred_check
          %p248 = pneg %p165
        $region22: #{closed_call.43} parent=11 // pred_check_branch
          %250 = sbr.rel (%p248) target = $region24
        $region23: #{closed_call.43} parent=11 // pred_region
          %p251 = scmp.lt.s32.totalorder %s23, 0
          %s252 = scalar_select %p251, %s23, 0
          %s253 = scalar_lea.vmem %s4, %s252
        $region24: #{closed_call.43} parent=11 // pred_fallthru
          _
        // Predicated region
        $region25: #{closed_call.43} parent=11 // pred_check
          %p254 = pneg %p193
        $region26: #{closed_call.43} parent=11 // pred_check_branch
          %256 = sbr.rel (%p254) target = $region28
        $region27: #{closed_call.43} parent=11 // pred_region
          %s257 = smul.u32 4, %s22
          %p258 = scmp.lt.s32.totalorder %s257, 3
          %s259 = scalar_select %p258, %s257, 3
          %p260 = scmp.lt.s32.totalorder %s23, 0
          %s261 = scalar_select %p260, %s23, 0
          %s262 = sadd.s32 %s261, %s259
          %s263 = smul.addr %s262, 8
          %s264 = scalar_lea.vmem %s5, %s263
          %s265 = smul.u32 4, %s22
        $region28: #{closed_call.43} parent=11 // pred_fallthru
          _
      $region12: #{closed_call.43} parent=5 // pred_fallthru
        _
      %p266 = scmp.lt.s32.totalorder %s12, 9
      // Predicated region
      $region29: #{closed_call.43} parent=5 // pred_check
        %p267 = pneg %p266
      $region30: #{closed_call.43} parent=5 // pred_check_branch
        %269 = sbr.rel (%p267) target = $region32
      $region31: #{closed_call.43} parent=5 // pred_region
        // Predicated region
        $region33: #{closed_call.43} parent=31 // pred_check
          %p270 = pneg %p53
        $region34: #{closed_call.43} parent=31 // pred_check_branch
          %272 = sbr.rel (%p270) target = $region36
        $region35: #{closed_call.43} parent=31 // pred_region
          %s273 = sand.u32 %s43, 1
          %s274 = sand.u32 %s43, 1
          %s275 = smul.addr %s274, 16
          %s276 = scalar_lea.vmem [#allocation3], %s275
          %s277 = smul.u32 4, %s19
          %s278 = smul.addr %s277, 9
          %s279 = sadd.s32 %s21, %s278
          %s280 = smul.addr %s279, 4
          %s281 = scalar_lea.vmem %s0, %s280
          // Predicated region
          $region37: #{closed_call.43} parent=35 // pred_check
            _
          $region38: #{closed_call.43} parent=35 // pred_check_branch
            %283 = sbr.rel (0) target = $region40
          $region39: #{closed_call.43} parent=35 // pred_region
            // Predicated region
            $region41: #{closed_call.43} parent=39 // pred_check
              _
            $region42: #{closed_call.43} parent=39 // pred_check_branch
              %285 = sbr.rel target = $region44
            $region43: #{closed_call.43} parent=39 // pred_region
              // Predicated region
              $region56: #{closed_call.43} parent=43 // pred_check
                _
              $region57: #{closed_call.43} parent=43 // pred_check_branch
                %306 = sbr.rel (0) target = $region59
              $region58: #{closed_call.43} parent=43 // pred_region
                loop: start=0, step=1, limit=1
                $region60: #{closed_call.43} parent=58 // loop_pre_header
                  _
                $region61: #{closed_call.43} parent=58 // loop_header
                  %s308 = sphi 0, %s312
                  %p309 = scmp.ge.s32.totalorder %s308, 1
                  %s313 = sphi %s281, %s281
                  %s314 = sphi %s276, %s276
                $region62: #{closed_call.43} parent=58 // loop_header_branch
                  %311 = sbr.rel (%p309) target = $region66
                $region63: #{closed_call.43} parent=58 // loop_body
                  _
                $region64: #{closed_call.43} parent=58 // loop_footer
                  %s312 = sadd.s32 1, %s308
                $region65: #{closed_call.43} parent=58 // loop_footer_branch
                  %307 = sbr.rel target = $region61
                $region66: #{closed_call.43} parent=58 // loop_exit
                  _
                loop: start=0, step=1, limit=1
                $region67: #{closed_call.43} parent=58 // loop_pre_header
                  _
                $region68: #{closed_call.43} parent=58 // loop_header
                  %s317 = sphi 0, %s321
                  %p318 = scmp.ge.s32.totalorder %s317, 1
                  %s322 = sphi %s281, %s281
                  %s323 = sphi %s276, %s276
                $region69: #{closed_call.43} parent=58 // loop_header_branch
                  %320 = sbr.rel (%p318) target = $region73
                $region70: #{closed_call.43} parent=58 // loop_body
                  %v324 = vld [vmem:[%s322] sm:$0xf]
                  %325 = vst [vmem:[%s323] sm:$0xf] %v324
                  %v326 = vld [vmem:[%s322 + $0x24] sm:$0xf]
                  %327 = vst [vmem:[%s323 + $0x4] sm:$0xf] %v326
                  %v328 = vld [vmem:[%s322 + $0x48] sm:$0xf]
                  %329 = vst [vmem:[%s323 + $0x8] sm:$0xf] %v328
                  %v330 = vld [vmem:[%s322 + $0x6c] sm:$0xf]
                  %331 = vst [vmem:[%s323 + $0xc] sm:$0xf] %v330
                $region71: #{closed_call.43} parent=58 // loop_footer
                  %s321 = sadd.s32 1, %s317
                $region72: #{closed_call.43} parent=58 // loop_footer_branch
                  %316 = sbr.rel target = $region68
                $region73: #{closed_call.43} parent=58 // loop_exit
                  _
              $region59: #{closed_call.43} parent=43 // pred_fallthru
                _
            $region44: #{closed_call.43} parent=39 // pred_fallthru
              _
            // Predicated region
            $region45: #{closed_call.43} parent=39 // pred_check
              _
            $region46: #{closed_call.43} parent=39 // pred_check_branch
              %287 = sbr.rel (0) target = $region48
            $region47: #{closed_call.43} parent=39 // pred_region
              loop: start=0, step=1, limit=1
              $region49: #{closed_call.43} parent=47 // loop_pre_header
                _
              $region50: #{closed_call.43} parent=47 // loop_header
                %s290 = sphi 0, %s294
                %p291 = scmp.ge.s32.totalorder %s290, 1
                %s295 = sphi %s281, %s281
                %s296 = sphi %s276, %s276
              $region51: #{closed_call.43} parent=47 // loop_header_branch
                %293 = sbr.rel (%p291) target = $region55
              $region52: #{closed_call.43} parent=47 // loop_body
                %v297 = vld [vmem:[%s295] sm:$0xf]
                %298 = vst [vmem:[%s296] sm:$0xf] %v297
                %v299 = vld [vmem:[%s295 + $0x24] sm:$0xf]
                %300 = vst [vmem:[%s296 + $0x4] sm:$0xf] %v299
                %v301 = vld [vmem:[%s295 + $0x48] sm:$0xf]
                %302 = vst [vmem:[%s296 + $0x8] sm:$0xf] %v301
                %v303 = vld [vmem:[%s295 + $0x6c] sm:$0xf]
                %304 = vst [vmem:[%s296 + $0xc] sm:$0xf] %v303
              $region53: #{closed_call.43} parent=47 // loop_footer
                %s294 = sadd.s32 1, %s290
              $region54: #{closed_call.43} parent=47 // loop_footer_branch
                %289 = sbr.rel target = $region50
              $region55: #{closed_call.43} parent=47 // loop_exit
                _
            $region48: #{closed_call.43} parent=39 // pred_fallthru
              _
          $region40: #{closed_call.43} parent=35 // pred_fallthru
            _
          %332 = vnop
        $region36: #{closed_call.43} parent=31 // pred_fallthru
          _
        // Predicated region
        $region74: #{closed_call.43} parent=31 // pred_check
          %p333 = pneg %p81
        $region75: #{closed_call.43} parent=31 // pred_check_branch
          %335 = sbr.rel (%p333) target = $region77
        $region76: #{closed_call.43} parent=31 // pred_region
          %s336 = smul.u32 16, %s21
          %p337 = scmp.lt.s32.totalorder %s336, 143
          %s338 = scalar_select %p337, %s336, 143
          %p339 = scmp.lt.s32.totalorder %s20, 0
          %s340 = scalar_select %p339, %s20, 0
          %s341 = sadd.s32 %s340, %s338
          %s342 = smul.addr %s341, 4
          %s343 = scalar_lea.vmem %s1, %s342
          %s344 = smul.u32 16, %s21
        $region77: #{closed_call.43} parent=31 // pred_fallthru
          _
      $region32: #{closed_call.43} parent=5 // pred_fallthru
        _
      %p345 = scmp.le.s32.totalorder 1, %s12
      %p346 = scmp.lt.s32.totalorder %s12, 10
      %p347 = pnand %p345, %p346
      %p348 = pneg %p347
      // Predicated region
      $region78: #{closed_call.43} parent=5 // pred_check
        _
      $region79: #{closed_call.43} parent=5 // pred_check_branch
        %350 = sbr.rel (%p347) target = $region81
      $region80: #{closed_call.43} parent=5 // pred_region
        %s351 = ssub.s32 %s12, 1
        %s352 = sand.u32 %s46, 1
        %s353 = sand.u32 %s46, 1
        %s354 = smul.addr %s353, 16
        %s355 = scalar_lea.vmem [#allocation3], %s354
        // Predicated region
        $region82: #{closed_call.43} parent=80 // pred_check
          %p356 = pneg %p59
        $region83: #{closed_call.43} parent=80 // pred_check_branch
          %358 = sbr.rel (%p356) target = $region85
        $region84: #{closed_call.43} parent=80 // pred_region
          _
        $region85: #{closed_call.43} parent=80 // pred_fallthru
          _
        %s359 = sand.u32 %s46, 1
        %s360 = sand.u32 %s46, 1
        %s361 = smul.addr %s360, 16
        %s362 = scalar_lea.vmem [#allocation3], %s361
        %p363 = pneg %p59
        %p364 = pneg %p56
        %s365 = smul.u32 16, %s24
        %p366 = scmp.lt.s32.totalorder %s365, 143
        %s367 = scalar_select %p366, %s365, 143
        %p368 = scmp.lt.s32.totalorder %s23, 0
        %s369 = scalar_select %p368, %s23, 0
        %s370 = sadd.s32 %s369, %s367
        %s371 = smul.addr %s370, 4
        %s372 = scalar_lea.vmem %s1, %s371
        %p373 = pneg %p87
        %p374 = pneg %p84
        %p375 = scmp.lt.s32.totalorder %s23, 0
        %s376 = scalar_select %p375, %s23, 0
        %s377 = scalar_lea.vmem %s2, %s376
        %p378 = pneg %p113
        %p379 = pneg %p110
        %p380 = scmp.lt.s32.totalorder %s23, 0
        %s381 = scalar_select %p380, %s23, 0
        %s382 = scalar_lea.vmem %s3, %s381
        %p383 = pneg %p139
        %p384 = pneg %p136
        %p385 = scmp.lt.s32.totalorder %s23, 0
        %s386 = scalar_select %p385, %s23, 0
        %s387 = scalar_lea.vmem %s4, %s386
        %p388 = pneg %p165
        %p389 = pneg %p162
        %s390 = smul.u32 4, %s22
        %p391 = scmp.lt.s32.totalorder %s390, 3
        %s392 = scalar_select %p391, %s390, 3
        %p393 = scmp.lt.s32.totalorder %s23, 0
        %s394 = scalar_select %p393, %s23, 0
        %s395 = sadd.s32 %s394, %s392
        %s396 = smul.addr %s395, 8
        %s397 = scalar_lea.vmem %s5, %s396
        %p398 = pneg %p193
        %p399 = pneg %p190
        %p400 = pneg %p221
        %p401 = pneg %p218
        %s402 = smul.u32 4, %s22
        %p403 = scmp.lt.s32.totalorder %s402, 3
        %s404 = scalar_select %p403, %s402, 3
        %p405 = scmp.lt.s32.totalorder %s23, 0
        %s406 = scalar_select %p405, %s23, 0
        %s407 = sadd.s32 %s406, %s404
        %s408 = smul.addr %s407, 8
        %s409 = scalar_lea.vmem %s6, %s408
        %s410 = smul.u32 4, %s22
        %s411 = smul.u32 16, %s24
        %p412 = scmp.lt.s32.totalorder %s411, 143
        %s413 = scalar_select %p412, %s411, 143
        %p414 = scmp.lt.s32.totalorder %s23, 0
        %s415 = scalar_select %p414, %s23, 0
        %s416 = sadd.s32 %s415, %s413
        %s417 = smul.addr %s416, 4
        %s418 = scalar_lea.vmem %s1, %s417
        %s419 = smul.u32 16, %s24
        %p420 = scmp.lt.s32.totalorder %s23, 0
        %s421 = scalar_select %p420, %s23, 0
        %s422 = scalar_lea.vmem %s2, %s421
        %p423 = scmp.lt.s32.totalorder %s23, 0
        %s424 = scalar_select %p423, %s23, 0
        %s425 = scalar_lea.vmem %s3, %s424
        %p426 = scmp.lt.s32.totalorder %s23, 0
        %s427 = scalar_select %p426, %s23, 0
        %s428 = scalar_lea.vmem %s4, %s427
        %s429 = smul.u32 4, %s22
        %p430 = scmp.lt.s32.totalorder %s429, 3
        %s431 = scalar_select %p430, %s429, 3
        %p432 = scmp.lt.s32.totalorder %s23, 0
        %s433 = scalar_select %p432, %s23, 0
        %s434 = sadd.s32 %s433, %s431
        %s435 = smul.addr %s434, 8
        %s436 = scalar_lea.vmem %s5, %s435
        %s437 = smul.u32 4, %s22
        %s438 = smul.u32 4, %s22
        %p439 = scmp.lt.s32.totalorder %s438, 3
        %s440 = scalar_select %p439, %s438, 3
        %p441 = scmp.lt.s32.totalorder %s23, 0
        %s442 = scalar_select %p441, %s23, 0
        %s443 = sadd.s32 %s442, %s440
        %s444 = smul.addr %s443, 8
        %s445 = scalar_lea.vmem %s6, %s444
        %s446 = smul.u32 4, %s22
        %p448 = scmp.eq.s32.totalorder %s24, 0
        // Predicated region
        $region86: #{closed_call.43} parent=80 // pred_check
          %p449 = pneg %p448
        $region87: #{closed_call.43} parent=80 // pred_check_branch
          %451 = sbr.rel (%p449) target = $region89
        $region88: #{closed_call.43} parent=80 // pred_region
          %452 = vst [vmem:[#allocation2] sm:$0xff] 0.0
          %453 = vst [vmem:[#allocation2 + $0x8] sm:$0xff] 0.0
          %454 = vst [vmem:[#allocation2 + $0x10] sm:$0xff] 0.0
          %455 = vst [vmem:[#allocation2 + $0x18] sm:$0xff] 0.0
        $region89: #{closed_call.43} parent=80 // pred_fallthru
          _
        %v456 = vld [vmem:[#allocation2] sm:$0xff]
        %v457 = vld [vmem:[#allocation2 + $0x8] sm:$0xff]
        %v458 = vld [vmem:[#allocation2 + $0x10] sm:$0xff]
        %v459 = vld [vmem:[#allocation2 + $0x18] sm:$0xff]
        %v460 = vld [vmem:[%s355] sm:$0xf]
        %v461 = vld [vmem:[%s355 + $0x4] sm:$0xf]
        %v462 = vld [vmem:[%s355 + $0x8] sm:$0xf]
        %v463 = vld [vmem:[%s355 + $0xc] sm:$0xf]
        %v464 = vld [vmem:[%s418] sm:$0xf]
        %v465 = vld [vmem:[%s418 + $0x4] sm:$0xf]
        %v466 = vld [vmem:[%s418 + $0x8] sm:$0xf]
        %v467 = vld [vmem:[%s418 + $0xc] sm:$0xf]
        %v468 = vld [vmem:[%s418 + $0x10] sm:$0xf]
        %v469 = vld [vmem:[%s418 + $0x14] sm:$0xf]
        %v470 = vld [vmem:[%s418 + $0x18] sm:$0xf]
        %v471 = vld [vmem:[%s418 + $0x1c] sm:$0xf]
        %v472 = vld [vmem:[%s418 + $0x20] sm:$0xf]
        %v473 = vld [vmem:[%s418 + $0x24] sm:$0xf]
        %v474 = vld [vmem:[%s418 + $0x28] sm:$0xf]
        %v475 = vld [vmem:[%s418 + $0x2c] sm:$0xf]
        %v476 = vld [vmem:[%s418 + $0x30] sm:$0xf]
        %v477 = vld [vmem:[%s418 + $0x34] sm:$0xf]
        %v478 = vld [vmem:[%s418 + $0x38] sm:$0xf]
        %v479 = vld [vmem:[%s418 + $0x3c] sm:$0xf]
        %v484 = vunpack.c.l.b16 %v460
        %v485 = vunpack.c.l.b16 %v461
        %v486 = vunpack.c.l.b16 %v462
        %v487 = vunpack.c.l.b16 %v463
        %v488 = vpack.c.b16 %v485, %v484
        %v489 = vpack.c.b16 %v487, %v486
        %v508 = vunpack.c.l.b16 %v464
        %v509 = vunpack.c.l.b16 %v465
        %v510 = vunpack.c.l.b16 %v466
        %v511 = vunpack.c.l.b16 %v467
        %v512 = vunpack.c.l.b16 %v468
        %v513 = vunpack.c.l.b16 %v469
        %v514 = vunpack.c.l.b16 %v470
        %v515 = vunpack.c.l.b16 %v471
        %v516 = vunpack.c.l.b16 %v472
        %v517 = vunpack.c.l.b16 %v473
        %v518 = vunpack.c.l.b16 %v474
        %v519 = vunpack.c.l.b16 %v475
        %v520 = vunpack.c.l.b16 %v476
        %v521 = vunpack.c.l.b16 %v477
        %v522 = vunpack.c.l.b16 %v478
        %v523 = vunpack.c.l.b16 %v479
        %v524 = vpack.c.b16 %v509, %v508
        %v525 = vpack.c.b16 %v511, %v510
        %v526 = vpack.c.b16 %v513, %v512
        %v527 = vpack.c.b16 %v515, %v514
        %v528 = vpack.c.b16 %v517, %v516
        %v529 = vpack.c.b16 %v519, %v518
        %v530 = vpack.c.b16 %v521, %v520
        %v531 = vpack.c.b16 %v523, %v522
        %540 = vmatprep.subr.bf16.mxu0 0
        %541 = vmatpush1.bf16.msra.mxu0 %v524
        %542 = vmatprep.subr.bf16.mxu0 0
        %543 = vmatpush1.bf16.msra.mxu0 %v525
        %544 = vmatprep.subr.bf16.mxu0 0
        %545 = vmatpush1.bf16.msra.mxu0 %v526
        %546 = vmatprep.subr.bf16.mxu0 0
        %547 = vmatpush1.bf16.msra.mxu0 %v527
        %548 = vmatprep.subr.bf16.mxu0 0
        %549 = vmatpush1.bf16.msra.mxu0 %v528
        %550 = vmatprep.subr.bf16.mxu0 0
        %551 = vmatpush1.bf16.msra.mxu0 %v529
        %552 = vmatprep.subr.bf16.mxu0 0
        %553 = vmatpush1.bf16.msra.mxu0 %v530
        %554 = vmatprep.subr.bf16.mxu0 0
        %555 = vmatpush1.bf16.msra.mxu0 %v531
        %556 = vmatprep.subr.bf16.mxu0 0
        %557 = vmatpush1.bf16.msra.mxu0 0
        %558 = vmatprep.subr.bf16.mxu0 0
        %559 = vmatpush1.bf16.msra.mxu0 0
        %560 = vmatprep.subr.bf16.mxu0 0
        %561 = vmatpush1.bf16.msra.mxu0 0
        %562 = vmatprep.subr.bf16.mxu0 0
        %563 = vmatpush1.bf16.msra.mxu0 0
        %564 = vmatprep.subr.bf16.mxu0 0
        %565 = vmatpush1.bf16.msra.mxu0 0
        %566 = vmatprep.subr.bf16.mxu0 0
        %567 = vmatpush1.bf16.msra.mxu0 0
        %568 = vmatprep.subr.bf16.mxu0 0
        %569 = vmatpush1.bf16.msra.mxu0 0
        %570 = vmatprep.subr.bf16.mxu0 0
        %571 = vmatpush1.bf16.msra.mxu0 0
        %572 = vmatprep.mubr.bf16.mxu0 0
        %573 = vmatmul.mubr.bf16.gmra.mrb[0].mxu0 %v488
        %v574 = vpop.f32.mrb[0].mxu0
        %v575 = vadd.f32 0.0, %v574
        %v576 = vpop.f32.mrb[0].mxu0
        %v577 = vpop.f32.mrb[0].mxu0
        %v578 = vadd.f32 0.0, %v577
        %v579 = vpop.f32.mrb[0].mxu0
        %580 = vmatprep.mubr.bf16.mxu0 0
        %581 = vmatmul.mubr.bf16.gmra.mrb[0].mxu0 %v489
        %v582 = vpop.f32.mrb[0].mxu0
        %v583 = vadd.f32 0.0, %v582
        %v584 = vpop.f32.mrb[0].mxu0
        %v585 = vpop.f32.mrb[0].mxu0
        %v586 = vadd.f32 0.0, %v585
        %v587 = vpop.f32.mrb[0].mxu0
        %588 = vdwg.mxu0
        %v589 = vadd.f32 %v456, %v575
        %v590 = vadd.f32 %v457, %v578
        %v591 = vadd.f32 %v458, %v583
        %v592 = vadd.f32 %v459, %v586
        %593 = vst [vmem:[#allocation2] sm:$0xff] %v589
        %594 = vst [vmem:[#allocation2 + $0x8] sm:$0xff] %v590
        %595 = vst [vmem:[#allocation2 + $0x10] sm:$0xff] %v591
        %596 = vst [vmem:[#allocation2 + $0x18] sm:$0xff] %v592
        %p597 = scmp.eq.s32.totalorder %s24, 8
        // Predicated region
        $region90: #{closed_call.43} parent=80 // pred_check
          %p598 = pneg %p597
        $region91: #{closed_call.43} parent=80 // pred_check_branch
          %600 = sbr.rel (%p598) target = $region93
        $region92: #{closed_call.43} parent=80 // pred_region
          %v601 = vld [vmem:[#allocation2] sm:$0xff]
          %v602 = vld [vmem:[#allocation2 + $0x8] sm:$0xff]
          %v603 = vld [vmem:[#allocation2 + $0x10] sm:$0xff]
          %v604 = vld [vmem:[#allocation2 + $0x18] sm:$0xff]
          %v605 = vld [vmem:[%s422] sm:$0x1]
          %v607 = vlaneseq
          %v608 = vshrl.u32 %v607, 7
          %v609 = vsub.s32 0, %v608
          %v610 = vrot.slane %v605, %v609
          %v612 = vmul.f32 %v601, %v610
          %v613 = vmul.f32 %v602, %v610
          %v614 = vmul.f32 %v603, %v610
          %v615 = vmul.f32 %v604, %v610
          %v616 = vld [vmem:[%s425] sm:$0x1]
          %v618 = vlaneseq
          %v619 = vshrl.u32 %v618, 7
          %v620 = vsub.s32 0, %v619
          %v621 = vrot.slane %v616, %v620
          %v623 = vadd.f32 %v612, %v621
          %v624 = vadd.f32 %v613, %v621
          %v625 = vadd.f32 %v614, %v621
          %v626 = vadd.f32 %v615, %v621
          %vm627 = vcmp.ge.f32.partialorder %v623, 0.0
          %vm628 = vcmp.ge.f32.partialorder %v624, 0.0
          %vm629 = vcmp.ge.f32.partialorder %v625, 0.0
          %vm630 = vcmp.ge.f32.partialorder %v626, 0.0
          %v631 = vld [vmem:[%s428] sm:$0x1]
          %v633 = vlaneseq
          %v634 = vshrl.u32 %v633, 7
          %v635 = vsub.s32 0, %v634
          %v636 = vrot.slane %v631, %v635
          %v638 = vmul.f32 %v623, %v636
          %v639 = vmul.f32 %v624, %v636
          %v640 = vmul.f32 %v625, %v636
          %v641 = vmul.f32 %v626, %v636
          %v642 = vsel %vm627, %v623, %v638
          %v643 = vsel %vm628, %v624, %v639
          %v644 = vsel %vm629, %v625, %v640
          %v645 = vsel %vm630, %v626, %v641
          %v646 = vld [vmem:[%s436] sm:$0xff]
          %v647 = vld [vmem:[%s436 + $0x8] sm:$0xff]
          %v648 = vld [vmem:[%s436 + $0x10] sm:$0xff]
          %v649 = vld [vmem:[%s436 + $0x18] sm:$0xff]
          %v650 = vadd.f32 %v642, %v646
          %v651 = vadd.f32 %v643, %v647
          %v652 = vadd.f32 %v644, %v648
          %v653 = vadd.f32 %v645, %v649
          %654 = vst [vmem:[%s445] sm:$0xff] %v650
          %655 = vst [vmem:[%s445 + $0x8] sm:$0xff] %v651
          %656 = vst [vmem:[%s445 + $0x10] sm:$0xff] %v652
          %657 = vst [vmem:[%s445 + $0x18] sm:$0xff] %v653
        $region93: #{closed_call.43} parent=80 // pred_fallthru
          _
        %s658 = smul.u32 4, %s22
        %p659 = scmp.lt.s32.totalorder %s658, 3
        %s660 = scalar_select %p659, %s658, 3
        %p661 = scmp.lt.s32.totalorder %s23, 0
        %s662 = scalar_select %p661, %s23, 0
        %s663 = sadd.s32 %s662, %s660
        %s664 = smul.addr %s663, 8
        %s665 = scalar_lea.vmem %s6, %s664
        // Predicated region
        $region94: #{closed_call.43} parent=80 // pred_check
          %p666 = pneg %p218
        $region95: #{closed_call.43} parent=80 // pred_check_branch
          %668 = sbr.rel (%p666) target = $region97
        $region96: #{closed_call.43} parent=80 // pred_region
          %s669 = smul.u32 4, %s22
        $region97: #{closed_call.43} parent=80 // pred_fallthru
          _
        // Predicated region
        $region98: #{closed_call.43} parent=80 // pred_check
          %p670 = pneg %p218
        $region99: #{closed_call.43} parent=80 // pred_check_branch
          %672 = sbr.rel (%p670) target = $region101
        $region100: #{closed_call.43} parent=80 // pred_region
          %s673 = smul.u32 4, %s22
          %p674 = scmp.lt.s32.totalorder %s673, 3
          %s675 = scalar_select %p674, %s673, 3
          %p676 = scmp.lt.s32.totalorder %s23, 0
          %s677 = scalar_select %p676, %s23, 0
          %s678 = sadd.s32 %s677, %s675
          %s679 = smul.addr %s678, 8
          %s680 = scalar_lea.vmem %s6, %s679
        $region101: #{closed_call.43} parent=80 // pred_fallthru
          _
      $region81: #{closed_call.43} parent=5 // pred_fallthru
        _
      %p681 = scmp.le.s32.totalorder 2, %s12
      // Predicated region
      $region102: #{closed_call.43} parent=5 // pred_check
        %p682 = pneg %p681
      $region103: #{closed_call.43} parent=5 // pred_check_branch
        %684 = sbr.rel (%p682) target = $region105
      $region104: #{closed_call.43} parent=5 // pred_region
        %s685 = ssub.s32 %s12, 2
      $region105: #{closed_call.43} parent=5 // pred_fallthru
        _
    $region6: #{closed_call.43} parent=1 // loop_footer
      %s16 = sadd.s32 1, %s12
    $region7: #{closed_call.43} parent=1 // loop_footer_branch
      %11 = sbr.rel target = $region3
    $region8: #{closed_call.43} parent=1 // loop_exit
      _

// kernel: encoder_forward.7
$region0: #{encoder_forward.7}
  #allocation0 [shape = 'u32[]', space=smem, size = 0x4, offset = 0x4, fixed_abs, tag = 'smem constant byte address 0x4 - core index']
  #allocation1 [shape = 'u32[144,128]{1,0:T(1,128)}', space=vmem, size = 0x12000, scoped, tag = 'internal scratch']
  #allocation2 [shape = 'f32[16,128]{1,0:T(8,128)}', space=vmem, size = 0x2000, scoped, tag = 'scratch operand']
  %s0 = inlined_call_operand.vmem [shape: bf16[16,3328], index: 0, kind: input, shape index: {}]
  %s1 = inlined_call_operand.vmem [shape: bf16[3328,128], index: 1, kind: input, shape index: {}]
  %s2 = inlined_call_operand.vmem [shape: f32[1,128], index: 2, kind: input, shape index: {}]
  %s3 = inlined_call_operand.vmem [shape: f32[1,128], index: 3, kind: input, shape index: {}]
  %s4 = inlined_call_operand.vmem [shape: f32[1,128], index: 4, kind: input, shape index: {}]
  %s5 = inlined_call_operand.vmem [shape: f32[16,128], index: 5, kind: output, shape index: {}]
  %s6 = sld [smem:[#allocation0]]
  $region102: #{encoder_forward.7} parent=0
    _
  %s8 = ssub.s32 1, %s6
  %s9 = scalar_select 0, %s8, %s6
  $region1: #{encoder_forward.7} parent=0
    #allocation3 [shape = 'u8[8192]{0}', space=vmem, size = 0x2000, scoped, tag = 'input window, operand 0']
    loop: start=0, step=1, limit=28
    $region2: #{encoder_forward.7} parent=1 // loop_pre_header
      _
    $region3: #{encoder_forward.7} parent=1 // loop_header
      %s11 = sphi 0, %s15
      %p12 = scmp.ge.s32.totalorder %s11, 28
      %s18 = sphi 0, %s37
      %s19 = sphi 0, %s33
      %s20 = sphi 0, %s29
      %s21 = sphi 0, %s18
      %s22 = sphi 0, %s19
      %s23 = sphi 0, %s20
      %s24 = sphi 0, %s21
      %s25 = sphi 0, %s22
      %s26 = sphi 0, %s23
      %s42 = sphi 0, %s44
      %s45 = sphi 0, %s42
      %s46 = sphi 0, %s45
      %s62 = sphi 0, %s46
      %s70 = sphi 0, %s72
      %s73 = sphi 0, %s70
      %s74 = sphi 0, %s73
      %s90 = sphi 0, %s74
      %s96 = sphi 0, %s98
      %s99 = sphi 0, %s96
      %s100 = sphi 0, %s99
      %s116 = sphi 0, %s100
      %s122 = sphi 0, %s124
      %s125 = sphi 0, %s122
      %s126 = sphi 0, %s125
      %s142 = sphi 0, %s126
      %s148 = sphi 0, %s150
      %s151 = sphi 0, %s148
      %s152 = sphi 0, %s151
      %s168 = sphi 0, %s152
      %s176 = sphi 0, %s178
      %s179 = sphi 0, %s176
      %s180 = sphi 0, %s179
      %s196 = sphi 0, %s180
    $region4: #{encoder_forward.7} parent=1 // loop_header_branch
      %14 = sbr.rel (%p12) target = $region8
    $region5: #{encoder_forward.7} parent=1 // loop_body
      %s16 = ssub.s32 %s11, 1
      %s17 = ssub.s32 %s11, 2
      %s27 = sadd.s32 1, %s20
      %p28 = scmp.ge.s32.totalorder %s27, 26
      %s29 = scalar_select %p28, 0, %s27
      %s30 = sadd.s32 1, %s19
      %s31 = scalar_select %p28, %s30, %s19
      %p32 = scmp.ge.s32.totalorder %s31, 1
      %s33 = scalar_select %p32, 0, %s31
      %s34 = sadd.s32 1, %s18
      %s35 = scalar_select %p32, %s34, %s18
      %p36 = scmp.ge.s32.totalorder %s35, 1
      %s37 = scalar_select %p36, 0, %s35
      %s38 = ssub.s32 %s18, %s37
      %s39 = ssub.s32 %s20, %s29
      %s40 = sor.u32 %s38, %s39
      %p41 = scmp.eq.s32.totalorder %s40, 0
      %s43 = sadd.s32 %s42, 1
      %s44 = scalar_select %p41, %s42, %s43
      %p47 = pneg %p41
      %p48 = scmp.eq.s32.totalorder %s11, 25
      %p49 = por %p47, %p48
      %p50 = scmp.ne.s32.totalorder %s42, %s45
      %p51 = scmp.eq.s32.totalorder %s11, 0
      %p52 = por %p50, %p51
      %p53 = scmp.ne.s32.totalorder %s42, %s45
      %p54 = scmp.eq.s32.totalorder %s16, 25
      %p55 = por %p53, %p54
      %p56 = scmp.ne.s32.totalorder %s45, %s46
      %p57 = scmp.eq.s32.totalorder %s16, 0
      %p58 = por %p56, %p57
      %p59 = scmp.ne.s32.totalorder %s45, %s46
      %p60 = scmp.eq.s32.totalorder %s17, 25
      %p61 = por %p59, %p60
      %p63 = scmp.ne.s32.totalorder %s46, %s62
      %p64 = scmp.eq.s32.totalorder %s17, 0
      %p65 = por %p63, %p64
      %s66 = ssub.s32 %s20, %s29
      %s67 = ssub.s32 %s19, %s33
      %s68 = sor.u32 %s66, %s67
      %p69 = scmp.eq.s32.totalorder %s68, 0
      %s71 = sadd.s32 %s70, 1
      %s72 = scalar_select %p69, %s70, %s71
      %p75 = pneg %p69
      %p76 = scmp.eq.s32.totalorder %s11, 25
      %p77 = por %p75, %p76
      %p78 = scmp.ne.s32.totalorder %s70, %s73
      %p79 = scmp.eq.s32.totalorder %s11, 0
      %p80 = por %p78, %p79
      %p81 = scmp.ne.s32.totalorder %s70, %s73
      %p82 = scmp.eq.s32.totalorder %s16, 25
      %p83 = por %p81, %p82
      %p84 = scmp.ne.s32.totalorder %s73, %s74
      %p85 = scmp.eq.s32.totalorder %s16, 0
      %p86 = por %p84, %p85
      %p87 = scmp.ne.s32.totalorder %s73, %s74
      %p88 = scmp.eq.s32.totalorder %s17, 25
      %p89 = por %p87, %p88
      %p91 = scmp.ne.s32.totalorder %s74, %s90
      %p92 = scmp.eq.s32.totalorder %s17, 0
      %p93 = por %p91, %p92
      %s94 = ssub.s32 %s19, %s33
      %p95 = scmp.eq.s32.totalorder %s94, 0
      %s97 = sadd.s32 %s96, 1
      %s98 = scalar_select %p95, %s96, %s97
      %p101 = pneg %p95
      %p102 = scmp.eq.s32.totalorder %s11, 25
      %p103 = por %p101, %p102
      %p104 = scmp.ne.s32.totalorder %s96, %s99
      %p105 = scmp.eq.s32.totalorder %s11, 0
      %p106 = por %p104, %p105
      %p107 = scmp.ne.s32.totalorder %s96, %s99
      %p108 = scmp.eq.s32.totalorder %s16, 25
      %p109 = por %p107, %p108
      %p110 = scmp.ne.s32.totalorder %s99, %s100
      %p111 = scmp.eq.s32.totalorder %s16, 0
      %p112 = por %p110, %p111
      %p113 = scmp.ne.s32.totalorder %s99, %s100
      %p114 = scmp.eq.s32.totalorder %s17, 25
      %p115 = por %p113, %p114
      %p117 = scmp.ne.s32.totalorder %s100, %s116
      %p118 = scmp.eq.s32.totalorder %s17, 0
      %p119 = por %p117, %p118
      %s120 = ssub.s32 %s19, %s33
      %p121 = scmp.eq.s32.totalorder %s120, 0
      %s123 = sadd.s32 %s122, 1
      %s124 = scalar_select %p121, %s122, %s123
      %p127 = pneg %p121
      %p128 = scmp.eq.s32.totalorder %s11, 25
      %p129 = por %p127, %p128
      %p130 = scmp.ne.s32.totalorder %s122, %s125
      %p131 = scmp.eq.s32.totalorder %s11, 0
      %p132 = por %p130, %p131
      %p133 = scmp.ne.s32.totalorder %s122, %s125
      %p134 = scmp.eq.s32.totalorder %s16, 25
      %p135 = por %p133, %p134
      %p136 = scmp.ne.s32.totalorder %s125, %s126
      %p137 = scmp.eq.s32.totalorder %s16, 0
      %p138 = por %p136, %p137
      %p139 = scmp.ne.s32.totalorder %s125, %s126
      %p140 = scmp.eq.s32.totalorder %s17, 25
      %p141 = por %p139, %p140
      %p143 = scmp.ne.s32.totalorder %s126, %s142
      %p144 = scmp.eq.s32.totalorder %s17, 0
      %p145 = por %p143, %p144
      %s146 = ssub.s32 %s19, %s33
      %p147 = scmp.eq.s32.totalorder %s146, 0
      %s149 = sadd.s32 %s148, 1
      %s150 = scalar_select %p147, %s148, %s149
      %p153 = pneg %p147
      %p154 = scmp.eq.s32.totalorder %s11, 25
      %p155 = por %p153, %p154
      %p156 = scmp.ne.s32.totalorder %s148, %s151
      %p157 = scmp.eq.s32.totalorder %s11, 0
      %p158 = por %p156, %p157
      %p159 = scmp.ne.s32.totalorder %s148, %s151
      %p160 = scmp.eq.s32.totalorder %s16, 25
      %p161 = por %p159, %p160
      %p162 = scmp.ne.s32.totalorder %s151, %s152
      %p163 = scmp.eq.s32.totalorder %s16, 0
      %p164 = por %p162, %p163
      %p165 = scmp.ne.s32.totalorder %s151, %s152
      %p166 = scmp.eq.s32.totalorder %s17, 25
      %p167 = por %p165, %p166
      %p169 = scmp.ne.s32.totalorder %s152, %s168
      %p170 = scmp.eq.s32.totalorder %s17, 0
      %p171 = por %p169, %p170
      %s172 = ssub.s32 %s18, %s37
      %s173 = ssub.s32 %s19, %s33
      %s174 = sor.u32 %s172, %s173
      %p175 = scmp.eq.s32.totalorder %s174, 0
      %s177 = sadd.s32 %s176, 1
      %s178 = scalar_select %p175, %s176, %s177
      %p181 = pneg %p175
      %p182 = scmp.eq.s32.totalorder %s11, 25
      %p183 = por %p181, %p182
      %p184 = scmp.ne.s32.totalorder %s176, %s179
      %p185 = scmp.eq.s32.totalorder %s11, 0
      %p186 = por %p184, %p185
      %p187 = scmp.ne.s32.totalorder %s176, %s179
      %p188 = scmp.eq.s32.totalorder %s16, 25
      %p189 = por %p187, %p188
      %p190 = scmp.ne.s32.totalorder %s179, %s180
      %p191 = scmp.eq.s32.totalorder %s16, 0
      %p192 = por %p190, %p191
      %p193 = scmp.ne.s32.totalorder %s179, %s180
      %p194 = scmp.eq.s32.totalorder %s17, 25
      %p195 = por %p193, %p194
      %p197 = scmp.ne.s32.totalorder %s180, %s196
      %p198 = scmp.eq.s32.totalorder %s17, 0
      %p199 = por %p197, %p198
      %p200 = scmp.le.s32.totalorder 1, %s11
      %p201 = scmp.lt.s32.totalorder %s11, 27
      %p202 = pnand %p200, %p201
      %p203 = pneg %p202
      // Predicated region
      $region9: #{encoder_forward.7} parent=5 // pred_check
        _
      $region10: #{encoder_forward.7} parent=5 // pred_check_branch
        %205 = sbr.rel (%p202) target = $region12
      $region11: #{encoder_forward.7} parent=5 // pred_region
        %s206 = ssub.s32 %s11, 1
        // Predicated region
        $region13: #{encoder_forward.7} parent=11 // pred_check
          %p207 = pneg %p112
        $region14: #{encoder_forward.7} parent=11 // pred_check_branch
          %209 = sbr.rel (%p207) target = $region16
        $region15: #{encoder_forward.7} parent=11 // pred_region
          %p210 = scmp.lt.s32.totalorder %s22, 0
          %s211 = scalar_select %p210, %s22, 0
          %s212 = scalar_lea.vmem %s2, %s211
        $region16: #{encoder_forward.7} parent=11 // pred_fallthru
          _
        // Predicated region
        $region17: #{encoder_forward.7} parent=11 // pred_check
          %p213 = pneg %p138
        $region18: #{encoder_forward.7} parent=11 // pred_check_branch
          %215 = sbr.rel (%p213) target = $region20
        $region19: #{encoder_forward.7} parent=11 // pred_region
          %p216 = scmp.lt.s32.totalorder %s22, 0
          %s217 = scalar_select %p216, %s22, 0
          %s218 = scalar_lea.vmem %s3, %s217
        $region20: #{encoder_forward.7} parent=11 // pred_fallthru
          _
        // Predicated region
        $region21: #{encoder_forward.7} parent=11 // pred_check
          %p219 = pneg %p164
        $region22: #{encoder_forward.7} parent=11 // pred_check_branch
          %221 = sbr.rel (%p219) target = $region24
        $region23: #{encoder_forward.7} parent=11 // pred_region
          %p222 = scmp.lt.s32.totalorder %s22, 0
          %s223 = scalar_select %p222, %s22, 0
          %s224 = scalar_lea.vmem %s4, %s223
        $region24: #{encoder_forward.7} parent=11 // pred_fallthru
          _
      $region12: #{encoder_forward.7} parent=5 // pred_fallthru
        _
      %p225 = scmp.lt.s32.totalorder %s11, 26
      // Predicated region
      $region25: #{encoder_forward.7} parent=5 // pred_check
        %p226 = pneg %p225
      $region26: #{encoder_forward.7} parent=5 // pred_check_branch
        %228 = sbr.rel (%p226) target = $region28
      $region27: #{encoder_forward.7} parent=5 // pred_region
        // Predicated region
        $region29: #{encoder_forward.7} parent=27 // pred_check
          %p229 = pneg %p52
        $region30: #{encoder_forward.7} parent=27 // pred_check_branch
          %231 = sbr.rel (%p229) target = $region32
        $region31: #{encoder_forward.7} parent=27 // pred_region
          %s232 = sand.u32 %s42, 1
          %s233 = sand.u32 %s42, 1
          %s234 = smul.addr %s233, 8
          %s235 = scalar_lea.vmem [#allocation3], %s234
          %s236 = smul.u32 2, %s18
          %s237 = smul.addr %s236, 26
          %s238 = sadd.s32 %s20, %s237
          %s239 = smul.addr %s238, 4
          %s240 = scalar_lea.vmem %s0, %s239
          // Predicated region
          $region33: #{encoder_forward.7} parent=31 // pred_check
            _
          $region34: #{encoder_forward.7} parent=31 // pred_check_branch
            %242 = sbr.rel (0) target = $region36
          $region35: #{encoder_forward.7} parent=31 // pred_region
            // Predicated region
            $region37: #{encoder_forward.7} parent=35 // pred_check
              _
            $region38: #{encoder_forward.7} parent=35 // pred_check_branch
              %244 = sbr.rel target = $region40
            $region39: #{encoder_forward.7} parent=35 // pred_region
              // Predicated region
              $region52: #{encoder_forward.7} parent=39 // pred_check
                _
              $region53: #{encoder_forward.7} parent=39 // pred_check_branch
                %261 = sbr.rel (0) target = $region55
              $region54: #{encoder_forward.7} parent=39 // pred_region
                loop: start=0, step=1, limit=1
                $region56: #{encoder_forward.7} parent=54 // loop_pre_header
                  _
                $region57: #{encoder_forward.7} parent=54 // loop_header
                  %s263 = sphi 0, %s267
                  %p264 = scmp.ge.s32.totalorder %s263, 1
                  %s268 = sphi %s240, %s240
                  %s269 = sphi %s235, %s235
                $region58: #{encoder_forward.7} parent=54 // loop_header_branch
                  %266 = sbr.rel (%p264) target = $region62
                $region59: #{encoder_forward.7} parent=54 // loop_body
                  _
                $region60: #{encoder_forward.7} parent=54 // loop_footer
                  %s267 = sadd.s32 1, %s263
                $region61: #{encoder_forward.7} parent=54 // loop_footer_branch
                  %262 = sbr.rel target = $region57
                $region62: #{encoder_forward.7} parent=54 // loop_exit
                  _
                loop: start=0, step=1, limit=1
                $region63: #{encoder_forward.7} parent=54 // loop_pre_header
                  _
                $region64: #{encoder_forward.7} parent=54 // loop_header
                  %s272 = sphi 0, %s276
                  %p273 = scmp.ge.s32.totalorder %s272, 1
                  %s277 = sphi %s240, %s240
                  %s278 = sphi %s235, %s235
                $region65: #{encoder_forward.7} parent=54 // loop_header_branch
                  %275 = sbr.rel (%p273) target = $region69
                $region66: #{encoder_forward.7} parent=54 // loop_body
                  %v279 = vld [vmem:[%s277] sm:$0xf]
                  %280 = vst [vmem:[%s278] sm:$0xf] %v279
                  %v281 = vld [vmem:[%s277 + $0x68] sm:$0xf]
                  %282 = vst [vmem:[%s278 + $0x4] sm:$0xf] %v281
                $region67: #{encoder_forward.7} parent=54 // loop_footer
                  %s276 = sadd.s32 1, %s272
                $region68: #{encoder_forward.7} parent=54 // loop_footer_branch
                  %271 = sbr.rel target = $region64
                $region69: #{encoder_forward.7} parent=54 // loop_exit
                  _
              $region55: #{encoder_forward.7} parent=39 // pred_fallthru
                _
            $region40: #{encoder_forward.7} parent=35 // pred_fallthru
              _
            // Predicated region
            $region41: #{encoder_forward.7} parent=35 // pred_check
              _
            $region42: #{encoder_forward.7} parent=35 // pred_check_branch
              %246 = sbr.rel (0) target = $region44
            $region43: #{encoder_forward.7} parent=35 // pred_region
              loop: start=0, step=1, limit=1
              $region45: #{encoder_forward.7} parent=43 // loop_pre_header
                _
              $region46: #{encoder_forward.7} parent=43 // loop_header
                %s249 = sphi 0, %s253
                %p250 = scmp.ge.s32.totalorder %s249, 1
                %s254 = sphi %s240, %s240
                %s255 = sphi %s235, %s235
              $region47: #{encoder_forward.7} parent=43 // loop_header_branch
                %252 = sbr.rel (%p250) target = $region51
              $region48: #{encoder_forward.7} parent=43 // loop_body
                %v256 = vld [vmem:[%s254] sm:$0xf]
                %257 = vst [vmem:[%s255] sm:$0xf] %v256
                %v258 = vld [vmem:[%s254 + $0x68] sm:$0xf]
                %259 = vst [vmem:[%s255 + $0x4] sm:$0xf] %v258
              $region49: #{encoder_forward.7} parent=43 // loop_footer
                %s253 = sadd.s32 1, %s249
              $region50: #{encoder_forward.7} parent=43 // loop_footer_branch
                %248 = sbr.rel target = $region46
              $region51: #{encoder_forward.7} parent=43 // loop_exit
                _
            $region44: #{encoder_forward.7} parent=35 // pred_fallthru
              _
          $region36: #{encoder_forward.7} parent=31 // pred_fallthru
            _
          %283 = vnop
        $region32: #{encoder_forward.7} parent=27 // pred_fallthru
          _
        // Predicated region
        $region70: #{encoder_forward.7} parent=27 // pred_check
          %p284 = pneg %p80
        $region71: #{encoder_forward.7} parent=27 // pred_check_branch
          %286 = sbr.rel (%p284) target = $region73
        $region72: #{encoder_forward.7} parent=27 // pred_region
          %s287 = smul.u32 16, %s20
          %p288 = scmp.lt.s32.totalorder %s287, 415
          %s289 = scalar_select %p288, %s287, 415
          %p290 = scmp.lt.s32.totalorder %s19, 0
          %s291 = scalar_select %p290, %s19, 0
          %s292 = sadd.s32 %s291, %s289
          %s293 = smul.addr %s292, 4
          %s294 = scalar_lea.vmem %s1, %s293
          %s295 = smul.u32 16, %s20
        $region73: #{encoder_forward.7} parent=27 // pred_fallthru
          _
      $region28: #{encoder_forward.7} parent=5 // pred_fallthru
        _
      %p296 = scmp.le.s32.totalorder 1, %s11
      %p297 = scmp.lt.s32.totalorder %s11, 27
      %p298 = pnand %p296, %p297
      %p299 = pneg %p298
      // Predicated region
      $region74: #{encoder_forward.7} parent=5 // pred_check
        _
      $region75: #{encoder_forward.7} parent=5 // pred_check_branch
        %301 = sbr.rel (%p298) target = $region77
      $region76: #{encoder_forward.7} parent=5 // pred_region
        %s302 = ssub.s32 %s11, 1
        %s303 = sand.u32 %s45, 1
        %s304 = sand.u32 %s45, 1
        %s305 = smul.addr %s304, 8
        %s306 = scalar_lea.vmem [#allocation3], %s305
        // Predicated region
        $region78: #{encoder_forward.7} parent=76 // pred_check
          %p307 = pneg %p58
        $region79: #{encoder_forward.7} parent=76 // pred_check_branch
          %309 = sbr.rel (%p307) target = $region81
        $region80: #{encoder_forward.7} parent=76 // pred_region
          _
        $region81: #{encoder_forward.7} parent=76 // pred_fallthru
          _
        %s310 = sand.u32 %s45, 1
        %s311 = sand.u32 %s45, 1
        %s312 = smul.addr %s311, 8
        %s313 = scalar_lea.vmem [#allocation3], %s312
        %p314 = pneg %p58
        %p315 = pneg %p55
        %s316 = smul.u32 16, %s23
        %p317 = scmp.lt.s32.totalorder %s316, 415
        %s318 = scalar_select %p317, %s316, 415
        %p319 = scmp.lt.s32.totalorder %s22, 0
        %s320 = scalar_select %p319, %s22, 0
        %s321 = sadd.s32 %s320, %s318
        %s322 = smul.addr %s321, 4
        %s323 = scalar_lea.vmem %s1, %s322
        %p324 = pneg %p86
        %p325 = pneg %p83
        %p326 = scmp.lt.s32.totalorder %s22, 0
        %s327 = scalar_select %p326, %s22, 0
        %s328 = scalar_lea.vmem %s2, %s327
        %p329 = pneg %p112
        %p330 = pneg %p109
        %p331 = scmp.lt.s32.totalorder %s22, 0
        %s332 = scalar_select %p331, %s22, 0
        %s333 = scalar_lea.vmem %s3, %s332
        %p334 = pneg %p138
        %p335 = pneg %p135
        %p336 = scmp.lt.s32.totalorder %s22, 0
        %s337 = scalar_select %p336, %s22, 0
        %s338 = scalar_lea.vmem %s4, %s337
        %p339 = pneg %p164
        %p340 = pneg %p161
        %p341 = pneg %p192
        %p342 = pneg %p189
        %s343 = smul.u32 2, %s21
        %p344 = scmp.lt.s32.totalorder %s343, 1
        %s345 = scalar_select %p344, %s343, 1
        %p346 = scmp.lt.s32.totalorder %s22, 0
        %s347 = scalar_select %p346, %s22, 0
        %s348 = sadd.s32 %s347, %s345
        %s349 = smul.addr %s348, 8
        %s350 = scalar_lea.vmem %s5, %s349
        %s351 = smul.u32 2, %s21
        %s352 = smul.u32 16, %s23
        %p353 = scmp.lt.s32.totalorder %s352, 415
        %s354 = scalar_select %p353, %s352, 415
        %p355 = scmp.lt.s32.totalorder %s22, 0
        %s356 = scalar_select %p355, %s22, 0
        %s357 = sadd.s32 %s356, %s354
        %s358 = smul.addr %s357, 4
        %s359 = scalar_lea.vmem %s1, %s358
        %s360 = smul.u32 16, %s23
        %p361 = scmp.lt.s32.totalorder %s22, 0
        %s362 = scalar_select %p361, %s22, 0
        %s363 = scalar_lea.vmem %s2, %s362
        %p364 = scmp.lt.s32.totalorder %s22, 0
        %s365 = scalar_select %p364, %s22, 0
        %s366 = scalar_lea.vmem %s3, %s365
        %p367 = scmp.lt.s32.totalorder %s22, 0
        %s368 = scalar_select %p367, %s22, 0
        %s369 = scalar_lea.vmem %s4, %s368
        %s370 = smul.u32 2, %s21
        %p371 = scmp.lt.s32.totalorder %s370, 1
        %s372 = scalar_select %p371, %s370, 1
        %p373 = scmp.lt.s32.totalorder %s22, 0
        %s374 = scalar_select %p373, %s22, 0
        %s375 = sadd.s32 %s374, %s372
        %s376 = smul.addr %s375, 8
        %s377 = scalar_lea.vmem %s5, %s376
        %s378 = smul.u32 2, %s21
        %p380 = scmp.eq.s32.totalorder %s23, 0
        // Predicated region
        $region82: #{encoder_forward.7} parent=76 // pred_check
          %p381 = pneg %p380
        $region83: #{encoder_forward.7} parent=76 // pred_check_branch
          %383 = sbr.rel (%p381) target = $region85
        $region84: #{encoder_forward.7} parent=76 // pred_region
          %384 = vst [vmem:[#allocation2] sm:$0xff] 0.0
          %385 = vst [vmem:[#allocation2 + $0x8] sm:$0xff] 0.0
        $region85: #{encoder_forward.7} parent=76 // pred_fallthru
          _
        %v386 = vld [vmem:[#allocation2] sm:$0xff]
        %v387 = vld [vmem:[#allocation2 + $0x8] sm:$0xff]
        %v388 = vld [vmem:[%s306] sm:$0xf]
        %v389 = vld [vmem:[%s306 + $0x4] sm:$0xf]
        %v390 = vld [vmem:[%s359] sm:$0xf]
        %v391 = vld [vmem:[%s359 + $0x4] sm:$0xf]
        %v392 = vld [vmem:[%s359 + $0x8] sm:$0xf]
        %v393 = vld [vmem:[%s359 + $0xc] sm:$0xf]
        %v394 = vld [vmem:[%s359 + $0x10] sm:$0xf]
        %v395 = vld [vmem:[%s359 + $0x14] sm:$0xf]
        %v396 = vld [vmem:[%s359 + $0x18] sm:$0xf]
        %v397 = vld [vmem:[%s359 + $0x1c] sm:$0xf]
        %v398 = vld [vmem:[%s359 + $0x20] sm:$0xf]
        %v399 = vld [vmem:[%s359 + $0x24] sm:$0xf]
        %v400 = vld [vmem:[%s359 + $0x28] sm:$0xf]
        %v401 = vld [vmem:[%s359 + $0x2c] sm:$0xf]
        %v402 = vld [vmem:[%s359 + $0x30] sm:$0xf]
        %v403 = vld [vmem:[%s359 + $0x34] sm:$0xf]
        %v404 = vld [vmem:[%s359 + $0x38] sm:$0xf]
        %v405 = vld [vmem:[%s359 + $0x3c] sm:$0xf]
        %v408 = vunpack.c.l.b16 %v388
        %v409 = vunpack.c.l.b16 %v389
        %v410 = vpack.c.b16 %v409, %v408
        %v428 = vunpack.c.l.b16 %v390
        %v429 = vunpack.c.l.b16 %v391
        %v430 = vunpack.c.l.b16 %v392
        %v431 = vunpack.c.l.b16 %v393
        %v432 = vunpack.c.l.b16 %v394
        %v433 = vunpack.c.l.b16 %v395
        %v434 = vunpack.c.l.b16 %v396
        %v435 = vunpack.c.l.b16 %v397
        %v436 = vunpack.c.l.b16 %v398
        %v437 = vunpack.c.l.b16 %v399
        %v438 = vunpack.c.l.b16 %v400
        %v439 = vunpack.c.l.b16 %v401
        %v440 = vunpack.c.l.b16 %v402
        %v441 = vunpack.c.l.b16 %v403
        %v442 = vunpack.c.l.b16 %v404
        %v443 = vunpack.c.l.b16 %v405
        %v444 = vpack.c.b16 %v429, %v428
        %v445 = vpack.c.b16 %v431, %v430
        %v446 = vpack.c.b16 %v433, %v432
        %v447 = vpack.c.b16 %v435, %v434
        %v448 = vpack.c.b16 %v437, %v436
        %v449 = vpack.c.b16 %v439, %v438
        %v450 = vpack.c.b16 %v441, %v440
        %v451 = vpack.c.b16 %v443, %v442
        %460 = vmatprep.subr.bf16.mxu0 0
        %461 = vmatpush1.bf16.msra.mxu0 %v444
        %462 = vmatprep.subr.bf16.mxu0 0
        %463 = vmatpush1.bf16.msra.mxu0 %v445
        %464 = vmatprep.subr.bf16.mxu0 0
        %465 = vmatpush1.bf16.msra.mxu0 %v446
        %466 = vmatprep.subr.bf16.mxu0 0
        %467 = vmatpush1.bf16.msra.mxu0 %v447
        %468 = vmatprep.subr.bf16.mxu0 0
        %469 = vmatpush1.bf16.msra.mxu0 %v448
        %470 = vmatprep.subr.bf16.mxu0 0
        %471 = vmatpush1.bf16.msra.mxu0 %v449
        %472 = vmatprep.subr.bf16.mxu0 0
        %473 = vmatpush1.bf16.msra.mxu0 %v450
        %474 = vmatprep.subr.bf16.mxu0 0
        %475 = vmatpush1.bf16.msra.mxu0 %v451
        %476 = vmatprep.subr.bf16.mxu0 0
        %477 = vmatpush1.bf16.msra.mxu0 0
        %478 = vmatprep.subr.bf16.mxu0 0
        %479 = vmatpush1.bf16.msra.mxu0 0
        %480 = vmatprep.subr.bf16.mxu0 0
        %481 = vmatpush1.bf16.msra.mxu0 0
        %482 = vmatprep.subr.bf16.mxu0 0
        %483 = vmatpush1.bf16.msra.mxu0 0
        %484 = vmatprep.subr.bf16.mxu0 0
        %485 = vmatpush1.bf16.msra.mxu0 0
        %486 = vmatprep.subr.bf16.mxu0 0
        %487 = vmatpush1.bf16.msra.mxu0 0
        %488 = vmatprep.subr.bf16.mxu0 0
        %489 = vmatpush1.bf16.msra.mxu0 0
        %490 = vmatprep.subr.bf16.mxu0 0
        %491 = vmatpush1.bf16.msra.mxu0 0
        %492 = vmatprep.mubr.bf16.mxu0 0
        %493 = vmatmul.mubr.bf16.gmra.mrb[0].mxu0 %v410
        %v494 = vpop.f32.mrb[0].mxu0
        %v495 = vadd.f32 0.0, %v494
        %v496 = vpop.f32.mrb[0].mxu0
        %v497 = vpop.f32.mrb[0].mxu0
        %v498 = vadd.f32 0.0, %v497
        %v499 = vpop.f32.mrb[0].mxu0
        %500 = vdwg.mxu0
        %v501 = vadd.f32 %v386, %v495
        %v502 = vadd.f32 %v387, %v498
        %503 = vst [vmem:[#allocation2] sm:$0xff] %v501
        %504 = vst [vmem:[#allocation2 + $0x8] sm:$0xff] %v502
        %p505 = scmp.eq.s32.totalorder %s23, 25
        // Predicated region
        $region86: #{encoder_forward.7} parent=76 // pred_check
          %p506 = pneg %p505
        $region87: #{encoder_forward.7} parent=76 // pred_check_branch
          %508 = sbr.rel (%p506) target = $region89
        $region88: #{encoder_forward.7} parent=76 // pred_region
          %v509 = vld [vmem:[#allocation2] sm:$0xff]
          %v510 = vld [vmem:[#allocation2 + $0x8] sm:$0xff]
          %v511 = vld [vmem:[%s363] sm:$0x1]
          %v513 = vlaneseq
          %v514 = vshrl.u32 %v513, 7
          %v515 = vsub.s32 0, %v514
          %v516 = vrot.slane %v511, %v515
          %v518 = vmul.f32 %v509, %v516
          %v519 = vmul.f32 %v510, %v516
          %v520 = vld [vmem:[%s366] sm:$0x1]
          %v522 = vlaneseq
          %v523 = vshrl.u32 %v522, 7
          %v524 = vsub.s32 0, %v523
          %v525 = vrot.slane %v520, %v524
          %v527 = vadd.f32 %v518, %v525
          %v528 = vadd.f32 %v519, %v525
          %vm529 = vcmp.ge.f32.partialorder %v527, 0.0
          %vm530 = vcmp.ge.f32.partialorder %v528, 0.0
          %v531 = vld [vmem:[%s369] sm:$0x1]
          %v533 = vlaneseq
          %v534 = vshrl.u32 %v533, 7
          %v535 = vsub.s32 0, %v534
          %v536 = vrot.slane %v531, %v535
          %v538 = vmul.f32 %v527, %v536
          %v539 = vmul.f32 %v528, %v536
          %v540 = vsel %vm529, %v527, %v538
          %v541 = vsel %vm530, %v528, %v539
          %542 = vst [vmem:[%s377] sm:$0xff] %v540
          %543 = vst [vmem:[%s377 + $0x8] sm:$0xff] %v541
        $region89: #{encoder_forward.7} parent=76 // pred_fallthru
          _
        %s544 = smul.u32 2, %s21
        %p545 = scmp.lt.s32.totalorder %s544, 1
        %s546 = scalar_select %p545, %s544, 1
        %p547 = scmp.lt.s32.totalorder %s22, 0
        %s548 = scalar_select %p547, %s22, 0
        %s549 = sadd.s32 %s548, %s546
        %s550 = smul.addr %s549, 8
        %s551 = scalar_lea.vmem %s5, %s550
        // Predicated region
        $region90: #{encoder_forward.7} parent=76 // pred_check
          %p552 = pneg %p189
        $region91: #{encoder_forward.7} parent=76 // pred_check_branch
          %554 = sbr.rel (%p552) target = $region93
        $region92: #{encoder_forward.7} parent=76 // pred_region
          %s555 = smul.u32 2, %s21
        $region93: #{encoder_forward.7} parent=76 // pred_fallthru
          _
        // Predicated region
        $region94: #{encoder_forward.7} parent=76 // pred_check
          %p556 = pneg %p189
        $region95: #{encoder_forward.7} parent=76 // pred_check_branch
          %558 = sbr.rel (%p556) target = $region97
        $region96: #{encoder_forward.7} parent=76 // pred_region
          %s559 = smul.u32 2, %s21
          %p560 = scmp.lt.s32.totalorder %s559, 1
          %s561 = scalar_select %p560, %s559, 1
          %p562 = scmp.lt.s32.totalorder %s22, 0
          %s563 = scalar_select %p562, %s22, 0
          %s564 = sadd.s32 %s563, %s561
          %s565 = smul.addr %s564, 8
          %s566 = scalar_lea.vmem %s5, %s565
        $region97: #{encoder_forward.7} parent=76 // pred_fallthru
          _
      $region77: #{encoder_forward.7} parent=5 // pred_fallthru
        _
      %p567 = scmp.le.s32.totalorder 2, %s11
      // Predicated region
      $region98: #{encoder_forward.7} parent=5 // pred_check
        %p568 = pneg %p567
      $region99: #{encoder_forward.7} parent=5 // pred_check_branch
        %570 = sbr.rel (%p568) target = $region101
      $region100: #{encoder_forward.7} parent=5 // pred_region
        %s571 = ssub.s32 %s11, 2
      $region101: #{encoder_forward.7} parent=5 // pred_fallthru
        _
    $region6: #{encoder_forward.7} parent=1 // loop_footer
      %s15 = sadd.s32 1, %s11
    $region7: #{encoder_forward.7} parent=1 // loop_footer_branch
      %10 = sbr.rel target = $region3
    $region8: #{encoder_forward.7} parent=1 // loop_exit
      _

</llo_original>
